<compile_context>
chip_gen: v5e
topology: v5e:2x2
jax: 0.10.0
libtpu: 0.0.40
codegen_flags: <defaults>
</compile_context>

<pallas_src>
from functools import partial

import jax
import jax.numpy as jnp
import numpy as np
from jax.experimental import pallas as pl
from jax.experimental.pallas import tpu as pltpu


def energy_chain_kernel(feats_ref, w_ref, b_ref, a_ref, init_ref, final_ref,
                        out_ref, alpha_ref, logz_ref, em_ref):
    """One grid step == one chunk of TC time frames of the chain forward pass.

    feats_ref : (B, TC, D) bf16  features for this chunk (batch-major)
    w_ref     : (D, S)     bf16  model weight, pre-folded with emission selector
    b_ref     : (1, S)     f32   model bias,  pre-folded with emission selector
    a_ref     : (S, S)     f32   transition matrix with leaky-HMM term folded in
    init_ref  : (1, S)     f32   initial state probabilities
    final_ref : (1, S)     f32   final state probabilities
    out_ref   : (1, 1)     f32   scalar energy (written on the last chunk)
    alpha_ref : (B, S)     f32   scratch: normalised forward probabilities
    logz_ref  : (B, 1)     f32   scratch: accumulated log partition function
    em_ref    : (B, TC, S) f32   scratch: per-frame emission probabilities
    """
    c = pl.program_id(0)
    nc = pl.num_programs(0)
    B, TC, D = feats_ref.shape
    S = a_ref.shape[0]

    @pl.when(c == 0)
    def _init():
        alpha_ref[...] = jnp.broadcast_to(init_ref[...], alpha_ref.shape)
        logz_ref[...] = jnp.zeros_like(logz_ref)

    # ---- frame-parallel work, hoisted out of the serial recursion ----------
    # Model matmul for the whole chunk: (B*TC, D) @ (D, S), bf16 in / f32 acc.
    feats_2d = feats_ref[...].reshape(B * TC, D)
    logits = jnp.dot(feats_2d, w_ref[...],
                     preferred_element_type=jnp.float32) + b_ref[...]   # (B*TC, S)
    m = jnp.max(logits, axis=-1, keepdims=True)                          # (B*TC, 1)
    em_ref[...] = jnp.exp(logits - m).reshape(B, TC, S)                  # emissions
    m_sum = jnp.sum(m.reshape(B, TC, 1), axis=1)                         # (B, 1)

    # ---- strictly serial per-frame alpha recursion --------------------------
    a_mat = a_ref[...]
    alpha = alpha_ref[...]                                               # (B, S)
    log_acc = jnp.zeros((B, 1), jnp.float32)
    for t in range(TC):  # static trip count -> fully unrolled for the scheduler
        em_t = em_ref[:, t, :]                                           # (B, S)
        alpha_new = jnp.dot(alpha, a_mat,
                            preferred_element_type=jnp.float32) * em_t   # (B, S)
        tot = jnp.maximum(jnp.sum(alpha_new, axis=-1, keepdims=True),
                          jnp.float32(1e-30))                            # (B, 1)
        inv = pl.reciprocal(tot, approx=True)                            # EUP slot
        alpha = alpha_new * inv
        # Accumulate exactly the (negative log of the) scale that was applied,
        # so the approximate reciprocal introduces no bias in the final logZ.
        log_acc = log_acc - jnp.log(inv)
    alpha_ref[...] = alpha
    logz_ref[...] = logz_ref[...] + log_acc + m_sum

    @pl.when(c == nc - 1)
    def _finalize():
        final_term = jnp.sum(alpha_ref[...] * final_ref[...],
                             axis=-1, keepdims=True)                     # (B, 1)
        objf_per_seq = logz_ref[...] + jnp.log(final_term)               # (B, 1)
        out_ref[...] = jnp.reshape(-jnp.sum(objf_per_seq), (1, 1))       # energy


def energy_forward(feats, w, b, emit_sel, trans, init_p, final_p,
                   leaky_hmm=0.1, time_chunk=64, model_dtype=jnp.bfloat16):
    """feats: (B, T, D) batch-major.  Returns scalar energy (f32).

    time_chunk: frames per grid step.  Choose so B*time_chunk is a multiple of
    128 (v5e MXU) or 256 (v6e/v7x MXU); T must be divisible by time_chunk.
    """
    B, T, D = feats.shape
    S = trans.shape[0]
    assert T % time_chunk == 0, "T must be divisible by time_chunk"
    num_chunks = T // time_chunk

    # Fold the one-hot pdf->state emission selector into the linear model
    # (exact: the selector commutes with the projection -- pure column gather).
    w_s = (w @ emit_sel).astype(model_dtype)                 # (D, S)
    b_s = (b @ emit_sel).astype(jnp.float32)                 # (1, S)
    # Fold the leaky-HMM term into the transition matrix (exact):
    #   (alpha + leaky * sum(alpha) * init) @ A == alpha @ (A + leaky*1_S (init@A))
    a_leaky = (trans + leaky_hmm * jnp.ones((S, 1), jnp.float32)
               * (init_p @ trans)).astype(jnp.float32)       # (S, S)
    feats_c = feats.astype(model_dtype)                      # halve feats HBM traffic

    out = pl.pallas_call(
        energy_chain_kernel,
        out_shape=jax.ShapeDtypeStruct((1, 1), jnp.float32),
        grid_spec=pltpu.PrefetchScalarGridSpec(
            num_scalar_prefetch=0,
            grid=(num_chunks,),
            in_specs=[
                pl.BlockSpec((B, time_chunk, D), lambda c: (0, c, 0)),  # feats chunk
                pl.BlockSpec((D, S), lambda c: (0, 0)),                 # W_s
                pl.BlockSpec((1, S), lambda c: (0, 0)),                 # b_s
                pl.BlockSpec((S, S), lambda c: (0, 0)),                 # A'
                pl.BlockSpec((1, S), lambda c: (0, 0)),                 # init
                pl.BlockSpec((1, S), lambda c: (0, 0)),                 # final
            ],
            out_specs=pl.BlockSpec((1, 1), lambda c: (0, 0)),
            scratch_shapes=[
                pltpu.VMEM((B, S), jnp.float32),              # alpha
                pltpu.VMEM((B, 1), jnp.float32),              # log-Z accumulator
                pltpu.VMEM((B, time_chunk, S), jnp.float32),  # per-chunk emissions
            ],
        ),
        compiler_params=pltpu.CompilerParams(
            dimension_semantics=("arbitrary",)),  # sequential recurrence over chunks
    )(feats_c, w_s, b_s, a_leaky, init_p, final_p)
    return out[0, 0]


def energy_reference(feats, w, b, emit_sel, trans, init_p, final_p,
                     leaky_hmm=0.1, model_dtype=jnp.bfloat16):
    """Pure-JAX reference: original unfolded chain recursion (per-frame max over
    the full pdf axis, explicit leaky term, exact division).  The synthetic
    model matmul uses the same model_dtype as the kernel so the comparison
    isolates the chain-energy math."""
    x = jnp.dot(feats.astype(model_dtype), w.astype(model_dtype),
                preferred_element_type=jnp.float32) + b       # (B, T, P)
    B, T, _ = x.shape
    S = trans.shape[0]
    alpha = jnp.broadcast_to(init_p, (B, S))
    logz = jnp.zeros((B, 1), jnp.float32)
    for t in range(T):
        logits = x[:, t, :]
        m = jnp.max(logits, axis=-1, keepdims=True)
        em = jnp.exp(logits - m) @ emit_sel
        tot_prev = jnp.sum(alpha, axis=-1, keepdims=True)
        alpha_leaky = alpha + leaky_hmm * tot_prev * init_p
        alpha_new = (alpha_leaky @ trans) * em
        tot = jnp.sum(alpha_new, axis=-1, keepdims=True)
        alpha = alpha_new / tot
        logz = logz + jnp.log(tot) + m
    objf = jnp.sum(logz + jnp.log(jnp.sum(alpha * final_p, -1, keepdims=True)))
    return -objf


if __name__ == "__main__":
    B, T, D = 2, 128, 32    # batch, frames, input feature dim
    P, S = 128, 64          # num pdfs (model outputs), num HMM states
    TC = 64                 # frames per chunk -> M = B*TC = 128 rows per matmul
    LEAKY = 0.1

    key = jax.random.PRNGKey(0)
    k1, k2, k3, k4, k5, k6 = jax.random.split(key, 6)

    feats = jax.random.normal(k1, (B, T, D), jnp.float32)
    W = 0.1 * jax.random.normal(k2, (D, P), jnp.float32)
    bias = 0.1 * jax.random.normal(k3, (1, P), jnp.float32)

    # Dense synthetic denominator graph.
    trans = jax.nn.softmax(jax.random.normal(k4, (S, S), jnp.float32), axis=-1)
    init_p = jax.nn.softmax(jax.random.normal(k5, (S,), jnp.float32)).reshape(1, S)
    final_p = jax.nn.sigmoid(jax.random.normal(k6, (S,), jnp.float32)).reshape(1, S)
    pdf_ids = jnp.arange(S) % P
    emit_sel = jax.nn.one_hot(pdf_ids, P, dtype=jnp.float32).T   # (P, S)

    energy = energy_forward(feats, W, bias, emit_sel, trans, init_p, final_p,
                            leaky_hmm=LEAKY, time_chunk=TC)
    energy = jax.block_until_ready(energy)

    ref_fn = jax.jit(partial(energy_reference, leaky_hmm=LEAKY,
                             model_dtype=jnp.bfloat16))
    ref = jax.block_until_ready(
        ref_fn(feats, W, bias, emit_sel, trans, init_p, final_p))

    np.testing.assert_allclose(np.asarray(energy), np.asarray(ref),
                               rtol=1e-3, atol=1e-2)
    print("KERNEL_OK")
</pallas_src>

<mosaic_0001>
module attributes {stable_mosaic.version = 11 : i64} {
  func.func @energy_chain_kernel(%arg0: i32, %arg1: memref<2x64x32xbf16, #tpu.memory_space<vmem>>, %arg2: memref<32x64xbf16, #tpu.memory_space<vmem>>, %arg3: memref<1x64xf32, #tpu.memory_space<vmem>>, %arg4: memref<64x64xf32, #tpu.memory_space<vmem>>, %arg5: memref<1x64xf32, #tpu.memory_space<vmem>>, %arg6: memref<1x64xf32, #tpu.memory_space<vmem>>, %arg7: memref<1x1xf32, #tpu.memory_space<vmem>>, %arg8: memref<2x64xf32, #tpu.memory_space<vmem>>, %arg9: memref<2x1xf32, #tpu.memory_space<vmem>>, %arg10: memref<2x64x64xf32, #tpu.memory_space<vmem>>) attributes {dimension_semantics = [#tpu.dimension_semantics<arbitrary>], iteration_bounds = array<i64: 2>, scalar_prefetch = 0 : i64, scratch_operands = 3 : i64, tpu.core_type = #tpu.core_type<tc>, window_params = [{transform_indices = @transform_0, window_bounds = array<i64: 2, 64, 32>}, {pipeline_mode = #tpu.pipeline_mode<synchronous>, transform_indices = @transform_1, window_bounds = array<i64: 32, 64>}, {pipeline_mode = #tpu.pipeline_mode<synchronous>, transform_indices = @transform_2, window_bounds = array<i64: 1, 64>}, {pipeline_mode = #tpu.pipeline_mode<synchronous>, transform_indices = @transform_3, window_bounds = array<i64: 64, 64>}, {pipeline_mode = #tpu.pipeline_mode<synchronous>, transform_indices = @transform_4, window_bounds = array<i64: 1, 64>}, {pipeline_mode = #tpu.pipeline_mode<synchronous>, transform_indices = @transform_5, window_bounds = array<i64: 1, 64>}, {pipeline_mode = #tpu.pipeline_mode<synchronous>, transform_indices = @transform_6, window_bounds = array<i64: 1, 1>}]} {
    %c0_i32 = arith.constant 0 : i32
    %0 = arith.cmpi eq, %arg0, %c0_i32 : i32
    %1 = arith.extui %0 : i1 to i32
    %c0_i32_0 = arith.constant 0 : i32
    %2 = arith.cmpi ne, %1, %c0_i32_0 : i32
    scf.if %2 {
      %c0_345 = arith.constant 0 : index
      %c0_346 = arith.constant 0 : index
      %862 = vector.load %arg5[%c0_345, %c0_346] : memref<1x64xf32, #tpu.memory_space<vmem>>, vector<1x64xf32>
      %863 = vector.shape_cast %862 : vector<1x64xf32> to vector<1x64xf32>
      %864 = vector.broadcast %863 : vector<1x64xf32> to vector<2x64xf32>
      %c0_347 = arith.constant 0 : index
      %c0_348 = arith.constant 0 : index
      %865 = vector.load %arg8[%c0_347, %c0_348] : memref<2x64xf32, #tpu.memory_space<vmem>>, vector<2x64xf32>
      tpu.vector_store %arg8[%c0_347, %c0_348], %864 {strides = array<i32>} : memref<2x64xf32, #tpu.memory_space<vmem>>, vector<2x64xf32>,
      %cst_349 = arith.constant 0.000000e+00 : f32
      %866 = vector.broadcast %cst_349 : f32 to vector<2x1xf32>
      %c0_350 = arith.constant 0 : index
      %c0_351 = arith.constant 0 : index
      %867 = vector.load %arg9[%c0_350, %c0_351] : memref<2x1xf32, #tpu.memory_space<vmem>>, vector<2x1xf32>
      tpu.vector_store %arg9[%c0_350, %c0_351], %866 {strides = array<i32>} : memref<2x1xf32, #tpu.memory_space<vmem>>, vector<2x1xf32>,
    } else {
    }
    %c0 = arith.constant 0 : index
    %c0_1 = arith.constant 0 : index
    %c0_2 = arith.constant 0 : index
    %3 = vector.load %arg1[%c0, %c0_1, %c0_2] : memref<2x64x32xbf16, #tpu.memory_space<vmem>>, vector<2x64x32xbf16>
    %4 = vector.shape_cast %3 : vector<2x64x32xbf16> to vector<128x32xbf16>
    %c0_3 = arith.constant 0 : index
    %c0_4 = arith.constant 0 : index
    %5 = vector.load %arg2[%c0_3, %c0_4] : memref<32x64xbf16, #tpu.memory_space<vmem>>, vector<32x64xbf16>
    %cst = arith.constant dense<0.000000e+00> : vector<128x64xf32>
    %6 = tpu.matmul %4, %5, %cst {dimension_numbers = #tpu.dot_dimension_numbers<[1], [0], [0], [1], [0, 0, 1, 1], [], []>} : vector<128x32xbf16>, vector<32x64xbf16>, vector<128x64xf32> -> vector<128x64xf32>
    %c0_5 = arith.constant 0 : index
    %c0_6 = arith.constant 0 : index
    %7 = vector.load %arg3[%c0_5, %c0_6] : memref<1x64xf32, #tpu.memory_space<vmem>>, vector<1x64xf32>
    %8 = vector.broadcast %7 : vector<1x64xf32> to vector<128x64xf32>
    %9 = arith.addf %6, %8 : vector<128x64xf32>
    %cst_7 = arith.constant dense<0xFF800000> : vector<128xf32>
    %10 = vector.multi_reduction <maximumf>, %9, %cst_7 [1] : vector<128x64xf32> to vector<128xf32>
    %11 = vector.shape_cast %10 : vector<128xf32> to vector<128x1xf32>
    %12 = vector.broadcast %11 : vector<128x1xf32> to vector<128x64xf32>
    %13 = arith.subf %9, %12 : vector<128x64xf32>
    %14 = math.exp %13 : vector<128x64xf32>
    %15 = vector.shape_cast %14 : vector<128x64xf32> to vector<2x64x64xf32>
    %c0_8 = arith.constant 0 : index
    %c0_9 = arith.constant 0 : index
    %c0_10 = arith.constant 0 : index
    %16 = vector.load %arg10[%c0_8, %c0_9, %c0_10] : memref<2x64x64xf32, #tpu.memory_space<vmem>>, vector<2x64x64xf32>
    tpu.vector_store %arg10[%c0_8, %c0_9, %c0_10], %15 {strides = array<i32>} : memref<2x64x64xf32, #tpu.memory_space<vmem>>, vector<2x64x64xf32>,
    %17 = vector.shape_cast %11 : vector<128x1xf32> to vector<2x64x1xf32>
    %cst_11 = arith.constant dense<0.000000e+00> : vector<2x1xf32>
    %18 = vector.multi_reduction <add>, %17, %cst_11 [1] : vector<2x64x1xf32> to vector<2x1xf32>
    %c0_12 = arith.constant 0 : index
    %c0_13 = arith.constant 0 : index
    %19 = vector.load %arg4[%c0_12, %c0_13] : memref<64x64xf32, #tpu.memory_space<vmem>>, vector<64x64xf32>
    %c0_14 = arith.constant 0 : index
    %c0_15 = arith.constant 0 : index
    %20 = vector.load %arg8[%c0_14, %c0_15] : memref<2x64xf32, #tpu.memory_space<vmem>>, vector<2x64xf32>
    %cst_16 = arith.constant 0.000000e+00 : f32
    %21 = vector.broadcast %cst_16 : f32 to vector<2x1xf32>
    %c0_17 = arith.constant 0 : index
    %c0_18 = arith.constant 0 : index
    %c0_19 = arith.constant 0 : index
    %22 = vector.load %arg10[%c0_17, %c0_18, %c0_19] : memref<2x64x64xf32, #tpu.memory_space<vmem>>, vector<2x1x64xf32>
    %23 = vector.shape_cast %22 : vector<2x1x64xf32> to vector<2x64xf32>
    %cst_20 = arith.constant dense<0.000000e+00> : vector<2x64xf32>
    %24 = tpu.matmul %20, %19, %cst_20 {dimension_numbers = #tpu.dot_dimension_numbers<[1], [0], [0], [1], [0, 0, 1, 1], [], []>} : vector<2x64xf32>, vector<64x64xf32>, vector<2x64xf32> -> vector<2x64xf32>
    %25 = arith.mulf %24, %23 : vector<2x64xf32>
    %cst_21 = arith.constant dense<0.000000e+00> : vector<2xf32>
    %26 = vector.multi_reduction <add>, %25, %cst_21 [1] : vector<2x64xf32> to vector<2xf32>
    %27 = vector.shape_cast %26 : vector<2xf32> to vector<2x1xf32>
    %cst_22 = arith.constant 1.000000e-30 : f32
    %28 = vector.broadcast %cst_22 : f32 to vector<2x1xf32>
    %29 = arith.maximumf %27, %28 : vector<2x1xf32>
    %30 = tpu.reciprocal %29 {approx = true} : vector<2x1xf32> -> vector<2x1xf32>
    %31 = vector.broadcast %30 : vector<2x1xf32> to vector<2x64xf32>
    %32 = arith.mulf %25, %31 : vector<2x64xf32>
    %33 = math.log %30 : vector<2x1xf32>
    %34 = arith.subf %21, %33 : vector<2x1xf32>
    %c0_23 = arith.constant 0 : index
    %c1 = arith.constant 1 : index
    %c0_24 = arith.constant 0 : index
    %35 = vector.load %arg10[%c0_23, %c1, %c0_24] : memref<2x64x64xf32, #tpu.memory_space<vmem>>, vector<2x1x64xf32>
    %36 = vector.shape_cast %35 : vector<2x1x64xf32> to vector<2x64xf32>
    %cst_25 = arith.constant dense<0.000000e+00> : vector<2x64xf32>
    %37 = tpu.matmul %32, %19, %cst_25 {dimension_numbers = #tpu.dot_dimension_numbers<[1], [0], [0], [1], [0, 0, 1, 1], [], []>} : vector<2x64xf32>, vector<64x64xf32>, vector<2x64xf32> -> vector<2x64xf32>
    %38 = arith.mulf %37, %36 : vector<2x64xf32>
    %cst_26 = arith.constant dense<0.000000e+00> : vector<2xf32>
    %39 = vector.multi_reduction <add>, %38, %cst_26 [1] : vector<2x64xf32> to vector<2xf32>
    %40 = vector.shape_cast %39 : vector<2xf32> to vector<2x1xf32>
    %cst_27 = arith.constant 1.000000e-30 : f32
    %41 = vector.broadcast %cst_27 : f32 to vector<2x1xf32>
    %42 = arith.maximumf %40, %41 : vector<2x1xf32>
    %43 = tpu.reciprocal %42 {approx = true} : vector<2x1xf32> -> vector<2x1xf32>
    %44 = vector.broadcast %43 : vector<2x1xf32> to vector<2x64xf32>
    %45 = arith.mulf %38, %44 : vector<2x64xf32>
    %46 = math.log %43 : vector<2x1xf32>
    %47 = arith.subf %34, %46 : vector<2x1xf32>
    %c0_28 = arith.constant 0 : index
    %c2 = arith.constant 2 : index
    %c0_29 = arith.constant 0 : index
    %48 = vector.load %arg10[%c0_28, %c2, %c0_29] : memref<2x64x64xf32, #tpu.memory_space<vmem>>, vector<2x1x64xf32>
    %49 = vector.shape_cast %48 : vector<2x1x64xf32> to vector<2x64xf32>
    %cst_30 = arith.constant dense<0.000000e+00> : vector<2x64xf32>
    %50 = tpu.matmul %45, %19, %cst_30 {dimension_numbers = #tpu.dot_dimension_numbers<[1], [0], [0], [1], [0, 0, 1, 1], [], []>} : vector<2x64xf32>, vector<64x64xf32>, vector<2x64xf32> -> vector<2x64xf32>
    %51 = arith.mulf %50, %49 : vector<2x64xf32>
    %cst_31 = arith.constant dense<0.000000e+00> : vector<2xf32>
    %52 = vector.multi_reduction <add>, %51, %cst_31 [1] : vector<2x64xf32> to vector<2xf32>
    %53 = vector.shape_cast %52 : vector<2xf32> to vector<2x1xf32>
    %cst_32 = arith.constant 1.000000e-30 : f32
    %54 = vector.broadcast %cst_32 : f32 to vector<2x1xf32>
    %55 = arith.maximumf %53, %54 : vector<2x1xf32>
    %56 = tpu.reciprocal %55 {approx = true} : vector<2x1xf32> -> vector<2x1xf32>
    %57 = vector.broadcast %56 : vector<2x1xf32> to vector<2x64xf32>
    %58 = arith.mulf %51, %57 : vector<2x64xf32>
    %59 = math.log %56 : vector<2x1xf32>
    %60 = arith.subf %47, %59 : vector<2x1xf32>
    %c0_33 = arith.constant 0 : index
    %c3 = arith.constant 3 : index
    %c0_34 = arith.constant 0 : index
    %61 = vector.load %arg10[%c0_33, %c3, %c0_34] : memref<2x64x64xf32, #tpu.memory_space<vmem>>, vector<2x1x64xf32>
    %62 = vector.shape_cast %61 : vector<2x1x64xf32> to vector<2x64xf32>
    %cst_35 = arith.constant dense<0.000000e+00> : vector<2x64xf32>
    %63 = tpu.matmul %58, %19, %cst_35 {dimension_numbers = #tpu.dot_dimension_numbers<[1], [0], [0], [1], [0, 0, 1, 1], [], []>} : vector<2x64xf32>, vector<64x64xf32>, vector<2x64xf32> -> vector<2x64xf32>
    %64 = arith.mulf %63, %62 : vector<2x64xf32>
    %cst_36 = arith.constant dense<0.000000e+00> : vector<2xf32>
    %65 = vector.multi_reduction <add>, %64, %cst_36 [1] : vector<2x64xf32> to vector<2xf32>
    %66 = vector.shape_cast %65 : vector<2xf32> to vector<2x1xf32>
    %cst_37 = arith.constant 1.000000e-30 : f32
    %67 = vector.broadcast %cst_37 : f32 to vector<2x1xf32>
    %68 = arith.maximumf %66, %67 : vector<2x1xf32>
    %69 = tpu.reciprocal %68 {approx = true} : vector<2x1xf32> -> vector<2x1xf32>
    %70 = vector.broadcast %69 : vector<2x1xf32> to vector<2x64xf32>
    %71 = arith.mulf %64, %70 : vector<2x64xf32>
    %72 = math.log %69 : vector<2x1xf32>
    %73 = arith.subf %60, %72 : vector<2x1xf32>
    %c0_38 = arith.constant 0 : index
    %c4 = arith.constant 4 : index
    %c0_39 = arith.constant 0 : index
    %74 = vector.load %arg10[%c0_38, %c4, %c0_39] : memref<2x64x64xf32, #tpu.memory_space<vmem>>, vector<2x1x64xf32>
    %75 = vector.shape_cast %74 : vector<2x1x64xf32> to vector<2x64xf32>
    %cst_40 = arith.constant dense<0.000000e+00> : vector<2x64xf32>
    %76 = tpu.matmul %71, %19, %cst_40 {dimension_numbers = #tpu.dot_dimension_numbers<[1], [0], [0], [1], [0, 0, 1, 1], [], []>} : vector<2x64xf32>, vector<64x64xf32>, vector<2x64xf32> -> vector<2x64xf32>
    %77 = arith.mulf %76, %75 : vector<2x64xf32>
    %cst_41 = arith.constant dense<0.000000e+00> : vector<2xf32>
    %78 = vector.multi_reduction <add>, %77, %cst_41 [1] : vector<2x64xf32> to vector<2xf32>
    %79 = vector.shape_cast %78 : vector<2xf32> to vector<2x1xf32>
    %cst_42 = arith.constant 1.000000e-30 : f32
    %80 = vector.broadcast %cst_42 : f32 to vector<2x1xf32>
    %81 = arith.maximumf %79, %80 : vector<2x1xf32>
    %82 = tpu.reciprocal %81 {approx = true} : vector<2x1xf32> -> vector<2x1xf32>
    %83 = vector.broadcast %82 : vector<2x1xf32> to vector<2x64xf32>
    %84 = arith.mulf %77, %83 : vector<2x64xf32>
    %85 = math.log %82 : vector<2x1xf32>
    %86 = arith.subf %73, %85 : vector<2x1xf32>
    %c0_43 = arith.constant 0 : index
    %c5 = arith.constant 5 : index
    %c0_44 = arith.constant 0 : index
    %87 = vector.load %arg10[%c0_43, %c5, %c0_44] : memref<2x64x64xf32, #tpu.memory_space<vmem>>, vector<2x1x64xf32>
    %88 = vector.shape_cast %87 : vector<2x1x64xf32> to vector<2x64xf32>
    %cst_45 = arith.constant dense<0.000000e+00> : vector<2x64xf32>
    %89 = tpu.matmul %84, %19, %cst_45 {dimension_numbers = #tpu.dot_dimension_numbers<[1], [0], [0], [1], [0, 0, 1, 1], [], []>} : vector<2x64xf32>, vector<64x64xf32>, vector<2x64xf32> -> vector<2x64xf32>
    %90 = arith.mulf %89, %88 : vector<2x64xf32>
    %cst_46 = arith.constant dense<0.000000e+00> : vector<2xf32>
    %91 = vector.multi_reduction <add>, %90, %cst_46 [1] : vector<2x64xf32> to vector<2xf32>
    %92 = vector.shape_cast %91 : vector<2xf32> to vector<2x1xf32>
    %cst_47 = arith.constant 1.000000e-30 : f32
    %93 = vector.broadcast %cst_47 : f32 to vector<2x1xf32>
    %94 = arith.maximumf %92, %93 : vector<2x1xf32>
    %95 = tpu.reciprocal %94 {approx = true} : vector<2x1xf32> -> vector<2x1xf32>
    %96 = vector.broadcast %95 : vector<2x1xf32> to vector<2x64xf32>
    %97 = arith.mulf %90, %96 : vector<2x64xf32>
    %98 = math.log %95 : vector<2x1xf32>
    %99 = arith.subf %86, %98 : vector<2x1xf32>
    %c0_48 = arith.constant 0 : index
    %c6 = arith.constant 6 : index
    %c0_49 = arith.constant 0 : index
    %100 = vector.load %arg10[%c0_48, %c6, %c0_49] : memref<2x64x64xf32, #tpu.memory_space<vmem>>, vector<2x1x64xf32>
    %101 = vector.shape_cast %100 : vector<2x1x64xf32> to vector<2x64xf32>
    %cst_50 = arith.constant dense<0.000000e+00> : vector<2x64xf32>
    %102 = tpu.matmul %97, %19, %cst_50 {dimension_numbers = #tpu.dot_dimension_numbers<[1], [0], [0], [1], [0, 0, 1, 1], [], []>} : vector<2x64xf32>, vector<64x64xf32>, vector<2x64xf32> -> vector<2x64xf32>
    %103 = arith.mulf %102, %101 : vector<2x64xf32>
    %cst_51 = arith.constant dense<0.000000e+00> : vector<2xf32>
    %104 = vector.multi_reduction <add>, %103, %cst_51 [1] : vector<2x64xf32> to vector<2xf32>
    %105 = vector.shape_cast %104 : vector<2xf32> to vector<2x1xf32>
    %cst_52 = arith.constant 1.000000e-30 : f32
    %106 = vector.broadcast %cst_52 : f32 to vector<2x1xf32>
    %107 = arith.maximumf %105, %106 : vector<2x1xf32>
    %108 = tpu.reciprocal %107 {approx = true} : vector<2x1xf32> -> vector<2x1xf32>
    %109 = vector.broadcast %108 : vector<2x1xf32> to vector<2x64xf32>
    %110 = arith.mulf %103, %109 : vector<2x64xf32>
    %111 = math.log %108 : vector<2x1xf32>
    %112 = arith.subf %99, %111 : vector<2x1xf32>
    %c0_53 = arith.constant 0 : index
    %c7 = arith.constant 7 : index
    %c0_54 = arith.constant 0 : index
    %113 = vector.load %arg10[%c0_53, %c7, %c0_54] : memref<2x64x64xf32, #tpu.memory_space<vmem>>, vector<2x1x64xf32>
    %114 = vector.shape_cast %113 : vector<2x1x64xf32> to vector<2x64xf32>
    %cst_55 = arith.constant dense<0.000000e+00> : vector<2x64xf32>
    %115 = tpu.matmul %110, %19, %cst_55 {dimension_numbers = #tpu.dot_dimension_numbers<[1], [0], [0], [1], [0, 0, 1, 1], [], []>} : vector<2x64xf32>, vector<64x64xf32>, vector<2x64xf32> -> vector<2x64xf32>
    %116 = arith.mulf %115, %114 : vector<2x64xf32>
    %cst_56 = arith.constant dense<0.000000e+00> : vector<2xf32>
    %117 = vector.multi_reduction <add>, %116, %cst_56 [1] : vector<2x64xf32> to vector<2xf32>
    %118 = vector.shape_cast %117 : vector<2xf32> to vector<2x1xf32>
    %cst_57 = arith.constant 1.000000e-30 : f32
    %119 = vector.broadcast %cst_57 : f32 to vector<2x1xf32>
    %120 = arith.maximumf %118, %119 : vector<2x1xf32>
    %121 = tpu.reciprocal %120 {approx = true} : vector<2x1xf32> -> vector<2x1xf32>
    %122 = vector.broadcast %121 : vector<2x1xf32> to vector<2x64xf32>
    %123 = arith.mulf %116, %122 : vector<2x64xf32>
    %124 = math.log %121 : vector<2x1xf32>
    %125 = arith.subf %112, %124 : vector<2x1xf32>
    %c0_58 = arith.constant 0 : index
    %c8 = arith.constant 8 : index
    %c0_59 = arith.constant 0 : index
    %126 = vector.load %arg10[%c0_58, %c8, %c0_59] : memref<2x64x64xf32, #tpu.memory_space<vmem>>, vector<2x1x64xf32>
    %127 = vector.shape_cast %126 : vector<2x1x64xf32> to vector<2x64xf32>
    %cst_60 = arith.constant dense<0.000000e+00> : vector<2x64xf32>
    %128 = tpu.matmul %123, %19, %cst_60 {dimension_numbers = #tpu.dot_dimension_numbers<[1], [0], [0], [1], [0, 0, 1, 1], [], []>} : vector<2x64xf32>, vector<64x64xf32>, vector<2x64xf32> -> vector<2x64xf32>
    %129 = arith.mulf %128, %127 : vector<2x64xf32>
    %cst_61 = arith.constant dense<0.000000e+00> : vector<2xf32>
    %130 = vector.multi_reduction <add>, %129, %cst_61 [1] : vector<2x64xf32> to vector<2xf32>
    %131 = vector.shape_cast %130 : vector<2xf32> to vector<2x1xf32>
    %cst_62 = arith.constant 1.000000e-30 : f32
    %132 = vector.broadcast %cst_62 : f32 to vector<2x1xf32>
    %133 = arith.maximumf %131, %132 : vector<2x1xf32>
    %134 = tpu.reciprocal %133 {approx = true} : vector<2x1xf32> -> vector<2x1xf32>
    %135 = vector.broadcast %134 : vector<2x1xf32> to vector<2x64xf32>
    %136 = arith.mulf %129, %135 : vector<2x64xf32>
    %137 = math.log %134 : vector<2x1xf32>
    %138 = arith.subf %125, %137 : vector<2x1xf32>
    %c0_63 = arith.constant 0 : index
    %c9 = arith.constant 9 : index
    %c0_64 = arith.constant 0 : index
    %139 = vector.load %arg10[%c0_63, %c9, %c0_64] : memref<2x64x64xf32, #tpu.memory_space<vmem>>, vector<2x1x64xf32>
    %140 = vector.shape_cast %139 : vector<2x1x64xf32> to vector<2x64xf32>
    %cst_65 = arith.constant dense<0.000000e+00> : vector<2x64xf32>
    %141 = tpu.matmul %136, %19, %cst_65 {dimension_numbers = #tpu.dot_dimension_numbers<[1], [0], [0], [1], [0, 0, 1, 1], [], []>} : vector<2x64xf32>, vector<64x64xf32>, vector<2x64xf32> -> vector<2x64xf32>
    %142 = arith.mulf %141, %140 : vector<2x64xf32>
    %cst_66 = arith.constant dense<0.000000e+00> : vector<2xf32>
    %143 = vector.multi_reduction <add>, %142, %cst_66 [1] : vector<2x64xf32> to vector<2xf32>
    %144 = vector.shape_cast %143 : vector<2xf32> to vector<2x1xf32>
    %cst_67 = arith.constant 1.000000e-30 : f32
    %145 = vector.broadcast %cst_67 : f32 to vector<2x1xf32>
    %146 = arith.maximumf %144, %145 : vector<2x1xf32>
    %147 = tpu.reciprocal %146 {approx = true} : vector<2x1xf32> -> vector<2x1xf32>
    %148 = vector.broadcast %147 : vector<2x1xf32> to vector<2x64xf32>
    %149 = arith.mulf %142, %148 : vector<2x64xf32>
    %150 = math.log %147 : vector<2x1xf32>
    %151 = arith.subf %138, %150 : vector<2x1xf32>
    %c0_68 = arith.constant 0 : index
    %c10 = arith.constant 10 : index
    %c0_69 = arith.constant 0 : index
    %152 = vector.load %arg10[%c0_68, %c10, %c0_69] : memref<2x64x64xf32, #tpu.memory_space<vmem>>, vector<2x1x64xf32>
    %153 = vector.shape_cast %152 : vector<2x1x64xf32> to vector<2x64xf32>
    %cst_70 = arith.constant dense<0.000000e+00> : vector<2x64xf32>
    %154 = tpu.matmul %149, %19, %cst_70 {dimension_numbers = #tpu.dot_dimension_numbers<[1], [0], [0], [1], [0, 0, 1, 1], [], []>} : vector<2x64xf32>, vector<64x64xf32>, vector<2x64xf32> -> vector<2x64xf32>
    %155 = arith.mulf %154, %153 : vector<2x64xf32>
    %cst_71 = arith.constant dense<0.000000e+00> : vector<2xf32>
    %156 = vector.multi_reduction <add>, %155, %cst_71 [1] : vector<2x64xf32> to vector<2xf32>
    %157 = vector.shape_cast %156 : vector<2xf32> to vector<2x1xf32>
    %cst_72 = arith.constant 1.000000e-30 : f32
    %158 = vector.broadcast %cst_72 : f32 to vector<2x1xf32>
    %159 = arith.maximumf %157, %158 : vector<2x1xf32>
    %160 = tpu.reciprocal %159 {approx = true} : vector<2x1xf32> -> vector<2x1xf32>
    %161 = vector.broadcast %160 : vector<2x1xf32> to vector<2x64xf32>
    %162 = arith.mulf %155, %161 : vector<2x64xf32>
    %163 = math.log %160 : vector<2x1xf32>
    %164 = arith.subf %151, %163 : vector<2x1xf32>
    %c0_73 = arith.constant 0 : index
    %c11 = arith.constant 11 : index
    %c0_74 = arith.constant 0 : index
    %165 = vector.load %arg10[%c0_73, %c11, %c0_74] : memref<2x64x64xf32, #tpu.memory_space<vmem>>, vector<2x1x64xf32>
    %166 = vector.shape_cast %165 : vector<2x1x64xf32> to vector<2x64xf32>
    %cst_75 = arith.constant dense<0.000000e+00> : vector<2x64xf32>
    %167 = tpu.matmul %162, %19, %cst_75 {dimension_numbers = #tpu.dot_dimension_numbers<[1], [0], [0], [1], [0, 0, 1, 1], [], []>} : vector<2x64xf32>, vector<64x64xf32>, vector<2x64xf32> -> vector<2x64xf32>
    %168 = arith.mulf %167, %166 : vector<2x64xf32>
    %cst_76 = arith.constant dense<0.000000e+00> : vector<2xf32>
    %169 = vector.multi_reduction <add>, %168, %cst_76 [1] : vector<2x64xf32> to vector<2xf32>
    %170 = vector.shape_cast %169 : vector<2xf32> to vector<2x1xf32>
    %cst_77 = arith.constant 1.000000e-30 : f32
    %171 = vector.broadcast %cst_77 : f32 to vector<2x1xf32>
    %172 = arith.maximumf %170, %171 : vector<2x1xf32>
    %173 = tpu.reciprocal %172 {approx = true} : vector<2x1xf32> -> vector<2x1xf32>
    %174 = vector.broadcast %173 : vector<2x1xf32> to vector<2x64xf32>
    %175 = arith.mulf %168, %174 : vector<2x64xf32>
    %176 = math.log %173 : vector<2x1xf32>
    %177 = arith.subf %164, %176 : vector<2x1xf32>
    %c0_78 = arith.constant 0 : index
    %c12 = arith.constant 12 : index
    %c0_79 = arith.constant 0 : index
    %178 = vector.load %arg10[%c0_78, %c12, %c0_79] : memref<2x64x64xf32, #tpu.memory_space<vmem>>, vector<2x1x64xf32>
    %179 = vector.shape_cast %178 : vector<2x1x64xf32> to vector<2x64xf32>
    %cst_80 = arith.constant dense<0.000000e+00> : vector<2x64xf32>
    %180 = tpu.matmul %175, %19, %cst_80 {dimension_numbers = #tpu.dot_dimension_numbers<[1], [0], [0], [1], [0, 0, 1, 1], [], []>} : vector<2x64xf32>, vector<64x64xf32>, vector<2x64xf32> -> vector<2x64xf32>
    %181 = arith.mulf %180, %179 : vector<2x64xf32>
    %cst_81 = arith.constant dense<0.000000e+00> : vector<2xf32>
    %182 = vector.multi_reduction <add>, %181, %cst_81 [1] : vector<2x64xf32> to vector<2xf32>
    %183 = vector.shape_cast %182 : vector<2xf32> to vector<2x1xf32>
    %cst_82 = arith.constant 1.000000e-30 : f32
    %184 = vector.broadcast %cst_82 : f32 to vector<2x1xf32>
    %185 = arith.maximumf %183, %184 : vector<2x1xf32>
    %186 = tpu.reciprocal %185 {approx = true} : vector<2x1xf32> -> vector<2x1xf32>
    %187 = vector.broadcast %186 : vector<2x1xf32> to vector<2x64xf32>
    %188 = arith.mulf %181, %187 : vector<2x64xf32>
    %189 = math.log %186 : vector<2x1xf32>
    %190 = arith.subf %177, %189 : vector<2x1xf32>
    %c0_83 = arith.constant 0 : index
    %c13 = arith.constant 13 : index
    %c0_84 = arith.constant 0 : index
    %191 = vector.load %arg10[%c0_83, %c13, %c0_84] : memref<2x64x64xf32, #tpu.memory_space<vmem>>, vector<2x1x64xf32>
    %192 = vector.shape_cast %191 : vector<2x1x64xf32> to vector<2x64xf32>
    %cst_85 = arith.constant dense<0.000000e+00> : vector<2x64xf32>
    %193 = tpu.matmul %188, %19, %cst_85 {dimension_numbers = #tpu.dot_dimension_numbers<[1], [0], [0], [1], [0, 0, 1, 1], [], []>} : vector<2x64xf32>, vector<64x64xf32>, vector<2x64xf32> -> vector<2x64xf32>
    %194 = arith.mulf %193, %192 : vector<2x64xf32>
    %cst_86 = arith.constant dense<0.000000e+00> : vector<2xf32>
    %195 = vector.multi_reduction <add>, %194, %cst_86 [1] : vector<2x64xf32> to vector<2xf32>
    %196 = vector.shape_cast %195 : vector<2xf32> to vector<2x1xf32>
    %cst_87 = arith.constant 1.000000e-30 : f32
    %197 = vector.broadcast %cst_87 : f32 to vector<2x1xf32>
    %198 = arith.maximumf %196, %197 : vector<2x1xf32>
    %199 = tpu.reciprocal %198 {approx = true} : vector<2x1xf32> -> vector<2x1xf32>
    %200 = vector.broadcast %199 : vector<2x1xf32> to vector<2x64xf32>
    %201 = arith.mulf %194, %200 : vector<2x64xf32>
    %202 = math.log %199 : vector<2x1xf32>
    %203 = arith.subf %190, %202 : vector<2x1xf32>
    %c0_88 = arith.constant 0 : index
    %c14 = arith.constant 14 : index
    %c0_89 = arith.constant 0 : index
    %204 = vector.load %arg10[%c0_88, %c14, %c0_89] : memref<2x64x64xf32, #tpu.memory_space<vmem>>, vector<2x1x64xf32>
    %205 = vector.shape_cast %204 : vector<2x1x64xf32> to vector<2x64xf32>
    %cst_90 = arith.constant dense<0.000000e+00> : vector<2x64xf32>
    %206 = tpu.matmul %201, %19, %cst_90 {dimension_numbers = #tpu.dot_dimension_numbers<[1], [0], [0], [1], [0, 0, 1, 1], [], []>} : vector<2x64xf32>, vector<64x64xf32>, vector<2x64xf32> -> vector<2x64xf32>
    %207 = arith.mulf %206, %205 : vector<2x64xf32>
    %cst_91 = arith.constant dense<0.000000e+00> : vector<2xf32>
    %208 = vector.multi_reduction <add>, %207, %cst_91 [1] : vector<2x64xf32> to vector<2xf32>
    %209 = vector.shape_cast %208 : vector<2xf32> to vector<2x1xf32>
    %cst_92 = arith.constant 1.000000e-30 : f32
    %210 = vector.broadcast %cst_92 : f32 to vector<2x1xf32>
    %211 = arith.maximumf %209, %210 : vector<2x1xf32>
    %212 = tpu.reciprocal %211 {approx = true} : vector<2x1xf32> -> vector<2x1xf32>
    %213 = vector.broadcast %212 : vector<2x1xf32> to vector<2x64xf32>
    %214 = arith.mulf %207, %213 : vector<2x64xf32>
    %215 = math.log %212 : vector<2x1xf32>
    %216 = arith.subf %203, %215 : vector<2x1xf32>
    %c0_93 = arith.constant 0 : index
    %c15 = arith.constant 15 : index
    %c0_94 = arith.constant 0 : index
    %217 = vector.load %arg10[%c0_93, %c15, %c0_94] : memref<2x64x64xf32, #tpu.memory_space<vmem>>, vector<2x1x64xf32>
    %218 = vector.shape_cast %217 : vector<2x1x64xf32> to vector<2x64xf32>
    %cst_95 = arith.constant dense<0.000000e+00> : vector<2x64xf32>
    %219 = tpu.matmul %214, %19, %cst_95 {dimension_numbers = #tpu.dot_dimension_numbers<[1], [0], [0], [1], [0, 0, 1, 1], [], []>} : vector<2x64xf32>, vector<64x64xf32>, vector<2x64xf32> -> vector<2x64xf32>
    %220 = arith.mulf %219, %218 : vector<2x64xf32>
    %cst_96 = arith.constant dense<0.000000e+00> : vector<2xf32>
    %221 = vector.multi_reduction <add>, %220, %cst_96 [1] : vector<2x64xf32> to vector<2xf32>
    %222 = vector.shape_cast %221 : vector<2xf32> to vector<2x1xf32>
    %cst_97 = arith.constant 1.000000e-30 : f32
    %223 = vector.broadcast %cst_97 : f32 to vector<2x1xf32>
    %224 = arith.maximumf %222, %223 : vector<2x1xf32>
    %225 = tpu.reciprocal %224 {approx = true} : vector<2x1xf32> -> vector<2x1xf32>
    %226 = vector.broadcast %225 : vector<2x1xf32> to vector<2x64xf32>
    %227 = arith.mulf %220, %226 : vector<2x64xf32>
    %228 = math.log %225 : vector<2x1xf32>
    %229 = arith.subf %216, %228 : vector<2x1xf32>
    %c0_98 = arith.constant 0 : index
    %c16 = arith.constant 16 : index
    %c0_99 = arith.constant 0 : index
    %230 = vector.load %arg10[%c0_98, %c16, %c0_99] : memref<2x64x64xf32, #tpu.memory_space<vmem>>, vector<2x1x64xf32>
    %231 = vector.shape_cast %230 : vector<2x1x64xf32> to vector<2x64xf32>
    %cst_100 = arith.constant dense<0.000000e+00> : vector<2x64xf32>
    %232 = tpu.matmul %227, %19, %cst_100 {dimension_numbers = #tpu.dot_dimension_numbers<[1], [0], [0], [1], [0, 0, 1, 1], [], []>} : vector<2x64xf32>, vector<64x64xf32>, vector<2x64xf32> -> vector<2x64xf32>
    %233 = arith.mulf %232, %231 : vector<2x64xf32>
    %cst_101 = arith.constant dense<0.000000e+00> : vector<2xf32>
    %234 = vector.multi_reduction <add>, %233, %cst_101 [1] : vector<2x64xf32> to vector<2xf32>
    %235 = vector.shape_cast %234 : vector<2xf32> to vector<2x1xf32>
    %cst_102 = arith.constant 1.000000e-30 : f32
    %236 = vector.broadcast %cst_102 : f32 to vector<2x1xf32>
    %237 = arith.maximumf %235, %236 : vector<2x1xf32>
    %238 = tpu.reciprocal %237 {approx = true} : vector<2x1xf32> -> vector<2x1xf32>
    %239 = vector.broadcast %238 : vector<2x1xf32> to vector<2x64xf32>
    %240 = arith.mulf %233, %239 : vector<2x64xf32>
    %241 = math.log %238 : vector<2x1xf32>
    %242 = arith.subf %229, %241 : vector<2x1xf32>
    %c0_103 = arith.constant 0 : index
    %c17 = arith.constant 17 : index
    %c0_104 = arith.constant 0 : index
    %243 = vector.load %arg10[%c0_103, %c17, %c0_104] : memref<2x64x64xf32, #tpu.memory_space<vmem>>, vector<2x1x64xf32>
    %244 = vector.shape_cast %243 : vector<2x1x64xf32> to vector<2x64xf32>
    %cst_105 = arith.constant dense<0.000000e+00> : vector<2x64xf32>
    %245 = tpu.matmul %240, %19, %cst_105 {dimension_numbers = #tpu.dot_dimension_numbers<[1], [0], [0], [1], [0, 0, 1, 1], [], []>} : vector<2x64xf32>, vector<64x64xf32>, vector<2x64xf32> -> vector<2x64xf32>
    %246 = arith.mulf %245, %244 : vector<2x64xf32>
    %cst_106 = arith.constant dense<0.000000e+00> : vector<2xf32>
    %247 = vector.multi_reduction <add>, %246, %cst_106 [1] : vector<2x64xf32> to vector<2xf32>
    %248 = vector.shape_cast %247 : vector<2xf32> to vector<2x1xf32>
    %cst_107 = arith.constant 1.000000e-30 : f32
    %249 = vector.broadcast %cst_107 : f32 to vector<2x1xf32>
    %250 = arith.maximumf %248, %249 : vector<2x1xf32>
    %251 = tpu.reciprocal %250 {approx = true} : vector<2x1xf32> -> vector<2x1xf32>
    %252 = vector.broadcast %251 : vector<2x1xf32> to vector<2x64xf32>
    %253 = arith.mulf %246, %252 : vector<2x64xf32>
    %254 = math.log %251 : vector<2x1xf32>
    %255 = arith.subf %242, %254 : vector<2x1xf32>
    %c0_108 = arith.constant 0 : index
    %c18 = arith.constant 18 : index
    %c0_109 = arith.constant 0 : index
    %256 = vector.load %arg10[%c0_108, %c18, %c0_109] : memref<2x64x64xf32, #tpu.memory_space<vmem>>, vector<2x1x64xf32>
    %257 = vector.shape_cast %256 : vector<2x1x64xf32> to vector<2x64xf32>
    %cst_110 = arith.constant dense<0.000000e+00> : vector<2x64xf32>
    %258 = tpu.matmul %253, %19, %cst_110 {dimension_numbers = #tpu.dot_dimension_numbers<[1], [0], [0], [1], [0, 0, 1, 1], [], []>} : vector<2x64xf32>, vector<64x64xf32>, vector<2x64xf32> -> vector<2x64xf32>
    %259 = arith.mulf %258, %257 : vector<2x64xf32>
    %cst_111 = arith.constant dense<0.000000e+00> : vector<2xf32>
    %260 = vector.multi_reduction <add>, %259, %cst_111 [1] : vector<2x64xf32> to vector<2xf32>
    %261 = vector.shape_cast %260 : vector<2xf32> to vector<2x1xf32>
    %cst_112 = arith.constant 1.000000e-30 : f32
    %262 = vector.broadcast %cst_112 : f32 to vector<2x1xf32>
    %263 = arith.maximumf %261, %262 : vector<2x1xf32>
    %264 = tpu.reciprocal %263 {approx = true} : vector<2x1xf32> -> vector<2x1xf32>
    %265 = vector.broadcast %264 : vector<2x1xf32> to vector<2x64xf32>
    %266 = arith.mulf %259, %265 : vector<2x64xf32>
    %267 = math.log %264 : vector<2x1xf32>
    %268 = arith.subf %255, %267 : vector<2x1xf32>
    %c0_113 = arith.constant 0 : index
    %c19 = arith.constant 19 : index
    %c0_114 = arith.constant 0 : index
    %269 = vector.load %arg10[%c0_113, %c19, %c0_114] : memref<2x64x64xf32, #tpu.memory_space<vmem>>, vector<2x1x64xf32>
    %270 = vector.shape_cast %269 : vector<2x1x64xf32> to vector<2x64xf32>
    %cst_115 = arith.constant dense<0.000000e+00> : vector<2x64xf32>
    %271 = tpu.matmul %266, %19, %cst_115 {dimension_numbers = #tpu.dot_dimension_numbers<[1], [0], [0], [1], [0, 0, 1, 1], [], []>} : vector<2x64xf32>, vector<64x64xf32>, vector<2x64xf32> -> vector<2x64xf32>
    %272 = arith.mulf %271, %270 : vector<2x64xf32>
    %cst_116 = arith.constant dense<0.000000e+00> : vector<2xf32>
    %273 = vector.multi_reduction <add>, %272, %cst_116 [1] : vector<2x64xf32> to vector<2xf32>
    %274 = vector.shape_cast %273 : vector<2xf32> to vector<2x1xf32>
    %cst_117 = arith.constant 1.000000e-30 : f32
    %275 = vector.broadcast %cst_117 : f32 to vector<2x1xf32>
    %276 = arith.maximumf %274, %275 : vector<2x1xf32>
    %277 = tpu.reciprocal %276 {approx = true} : vector<2x1xf32> -> vector<2x1xf32>
    %278 = vector.broadcast %277 : vector<2x1xf32> to vector<2x64xf32>
    %279 = arith.mulf %272, %278 : vector<2x64xf32>
    %280 = math.log %277 : vector<2x1xf32>
    %281 = arith.subf %268, %280 : vector<2x1xf32>
    %c0_118 = arith.constant 0 : index
    %c20 = arith.constant 20 : index
    %c0_119 = arith.constant 0 : index
    %282 = vector.load %arg10[%c0_118, %c20, %c0_119] : memref<2x64x64xf32, #tpu.memory_space<vmem>>, vector<2x1x64xf32>
    %283 = vector.shape_cast %282 : vector<2x1x64xf32> to vector<2x64xf32>
    %cst_120 = arith.constant dense<0.000000e+00> : vector<2x64xf32>
    %284 = tpu.matmul %279, %19, %cst_120 {dimension_numbers = #tpu.dot_dimension_numbers<[1], [0], [0], [1], [0, 0, 1, 1], [], []>} : vector<2x64xf32>, vector<64x64xf32>, vector<2x64xf32> -> vector<2x64xf32>
    %285 = arith.mulf %284, %283 : vector<2x64xf32>
    %cst_121 = arith.constant dense<0.000000e+00> : vector<2xf32>
    %286 = vector.multi_reduction <add>, %285, %cst_121 [1] : vector<2x64xf32> to vector<2xf32>
    %287 = vector.shape_cast %286 : vector<2xf32> to vector<2x1xf32>
    %cst_122 = arith.constant 1.000000e-30 : f32
    %288 = vector.broadcast %cst_122 : f32 to vector<2x1xf32>
    %289 = arith.maximumf %287, %288 : vector<2x1xf32>
    %290 = tpu.reciprocal %289 {approx = true} : vector<2x1xf32> -> vector<2x1xf32>
    %291 = vector.broadcast %290 : vector<2x1xf32> to vector<2x64xf32>
    %292 = arith.mulf %285, %291 : vector<2x64xf32>
    %293 = math.log %290 : vector<2x1xf32>
    %294 = arith.subf %281, %293 : vector<2x1xf32>
    %c0_123 = arith.constant 0 : index
    %c21 = arith.constant 21 : index
    %c0_124 = arith.constant 0 : index
    %295 = vector.load %arg10[%c0_123, %c21, %c0_124] : memref<2x64x64xf32, #tpu.memory_space<vmem>>, vector<2x1x64xf32>
    %296 = vector.shape_cast %295 : vector<2x1x64xf32> to vector<2x64xf32>
    %cst_125 = arith.constant dense<0.000000e+00> : vector<2x64xf32>
    %297 = tpu.matmul %292, %19, %cst_125 {dimension_numbers = #tpu.dot_dimension_numbers<[1], [0], [0], [1], [0, 0, 1, 1], [], []>} : vector<2x64xf32>, vector<64x64xf32>, vector<2x64xf32> -> vector<2x64xf32>
    %298 = arith.mulf %297, %296 : vector<2x64xf32>
    %cst_126 = arith.constant dense<0.000000e+00> : vector<2xf32>
    %299 = vector.multi_reduction <add>, %298, %cst_126 [1] : vector<2x64xf32> to vector<2xf32>
    %300 = vector.shape_cast %299 : vector<2xf32> to vector<2x1xf32>
    %cst_127 = arith.constant 1.000000e-30 : f32
    %301 = vector.broadcast %cst_127 : f32 to vector<2x1xf32>
    %302 = arith.maximumf %300, %301 : vector<2x1xf32>
    %303 = tpu.reciprocal %302 {approx = true} : vector<2x1xf32> -> vector<2x1xf32>
    %304 = vector.broadcast %303 : vector<2x1xf32> to vector<2x64xf32>
    %305 = arith.mulf %298, %304 : vector<2x64xf32>
    %306 = math.log %303 : vector<2x1xf32>
    %307 = arith.subf %294, %306 : vector<2x1xf32>
    %c0_128 = arith.constant 0 : index
    %c22 = arith.constant 22 : index
    %c0_129 = arith.constant 0 : index
    %308 = vector.load %arg10[%c0_128, %c22, %c0_129] : memref<2x64x64xf32, #tpu.memory_space<vmem>>, vector<2x1x64xf32>
    %309 = vector.shape_cast %308 : vector<2x1x64xf32> to vector<2x64xf32>
    %cst_130 = arith.constant dense<0.000000e+00> : vector<2x64xf32>
    %310 = tpu.matmul %305, %19, %cst_130 {dimension_numbers = #tpu.dot_dimension_numbers<[1], [0], [0], [1], [0, 0, 1, 1], [], []>} : vector<2x64xf32>, vector<64x64xf32>, vector<2x64xf32> -> vector<2x64xf32>
    %311 = arith.mulf %310, %309 : vector<2x64xf32>
    %cst_131 = arith.constant dense<0.000000e+00> : vector<2xf32>
    %312 = vector.multi_reduction <add>, %311, %cst_131 [1] : vector<2x64xf32> to vector<2xf32>
    %313 = vector.shape_cast %312 : vector<2xf32> to vector<2x1xf32>
    %cst_132 = arith.constant 1.000000e-30 : f32
    %314 = vector.broadcast %cst_132 : f32 to vector<2x1xf32>
    %315 = arith.maximumf %313, %314 : vector<2x1xf32>
    %316 = tpu.reciprocal %315 {approx = true} : vector<2x1xf32> -> vector<2x1xf32>
    %317 = vector.broadcast %316 : vector<2x1xf32> to vector<2x64xf32>
    %318 = arith.mulf %311, %317 : vector<2x64xf32>
    %319 = math.log %316 : vector<2x1xf32>
    %320 = arith.subf %307, %319 : vector<2x1xf32>
    %c0_133 = arith.constant 0 : index
    %c23 = arith.constant 23 : index
    %c0_134 = arith.constant 0 : index
    %321 = vector.load %arg10[%c0_133, %c23, %c0_134] : memref<2x64x64xf32, #tpu.memory_space<vmem>>, vector<2x1x64xf32>
    %322 = vector.shape_cast %321 : vector<2x1x64xf32> to vector<2x64xf32>
    %cst_135 = arith.constant dense<0.000000e+00> : vector<2x64xf32>
    %323 = tpu.matmul %318, %19, %cst_135 {dimension_numbers = #tpu.dot_dimension_numbers<[1], [0], [0], [1], [0, 0, 1, 1], [], []>} : vector<2x64xf32>, vector<64x64xf32>, vector<2x64xf32> -> vector<2x64xf32>
    %324 = arith.mulf %323, %322 : vector<2x64xf32>
    %cst_136 = arith.constant dense<0.000000e+00> : vector<2xf32>
    %325 = vector.multi_reduction <add>, %324, %cst_136 [1] : vector<2x64xf32> to vector<2xf32>
    %326 = vector.shape_cast %325 : vector<2xf32> to vector<2x1xf32>
    %cst_137 = arith.constant 1.000000e-30 : f32
    %327 = vector.broadcast %cst_137 : f32 to vector<2x1xf32>
    %328 = arith.maximumf %326, %327 : vector<2x1xf32>
    %329 = tpu.reciprocal %328 {approx = true} : vector<2x1xf32> -> vector<2x1xf32>
    %330 = vector.broadcast %329 : vector<2x1xf32> to vector<2x64xf32>
    %331 = arith.mulf %324, %330 : vector<2x64xf32>
    %332 = math.log %329 : vector<2x1xf32>
    %333 = arith.subf %320, %332 : vector<2x1xf32>
    %c0_138 = arith.constant 0 : index
    %c24 = arith.constant 24 : index
    %c0_139 = arith.constant 0 : index
    %334 = vector.load %arg10[%c0_138, %c24, %c0_139] : memref<2x64x64xf32, #tpu.memory_space<vmem>>, vector<2x1x64xf32>
    %335 = vector.shape_cast %334 : vector<2x1x64xf32> to vector<2x64xf32>
    %cst_140 = arith.constant dense<0.000000e+00> : vector<2x64xf32>
    %336 = tpu.matmul %331, %19, %cst_140 {dimension_numbers = #tpu.dot_dimension_numbers<[1], [0], [0], [1], [0, 0, 1, 1], [], []>} : vector<2x64xf32>, vector<64x64xf32>, vector<2x64xf32> -> vector<2x64xf32>
    %337 = arith.mulf %336, %335 : vector<2x64xf32>
    %cst_141 = arith.constant dense<0.000000e+00> : vector<2xf32>
    %338 = vector.multi_reduction <add>, %337, %cst_141 [1] : vector<2x64xf32> to vector<2xf32>
    %339 = vector.shape_cast %338 : vector<2xf32> to vector<2x1xf32>
    %cst_142 = arith.constant 1.000000e-30 : f32
    %340 = vector.broadcast %cst_142 : f32 to vector<2x1xf32>
    %341 = arith.maximumf %339, %340 : vector<2x1xf32>
    %342 = tpu.reciprocal %341 {approx = true} : vector<2x1xf32> -> vector<2x1xf32>
    %343 = vector.broadcast %342 : vector<2x1xf32> to vector<2x64xf32>
    %344 = arith.mulf %337, %343 : vector<2x64xf32>
    %345 = math.log %342 : vector<2x1xf32>
    %346 = arith.subf %333, %345 : vector<2x1xf32>
    %c0_143 = arith.constant 0 : index
    %c25 = arith.constant 25 : index
    %c0_144 = arith.constant 0 : index
    %347 = vector.load %arg10[%c0_143, %c25, %c0_144] : memref<2x64x64xf32, #tpu.memory_space<vmem>>, vector<2x1x64xf32>
    %348 = vector.shape_cast %347 : vector<2x1x64xf32> to vector<2x64xf32>
    %cst_145 = arith.constant dense<0.000000e+00> : vector<2x64xf32>
    %349 = tpu.matmul %344, %19, %cst_145 {dimension_numbers = #tpu.dot_dimension_numbers<[1], [0], [0], [1], [0, 0, 1, 1], [], []>} : vector<2x64xf32>, vector<64x64xf32>, vector<2x64xf32> -> vector<2x64xf32>
    %350 = arith.mulf %349, %348 : vector<2x64xf32>
    %cst_146 = arith.constant dense<0.000000e+00> : vector<2xf32>
    %351 = vector.multi_reduction <add>, %350, %cst_146 [1] : vector<2x64xf32> to vector<2xf32>
    %352 = vector.shape_cast %351 : vector<2xf32> to vector<2x1xf32>
    %cst_147 = arith.constant 1.000000e-30 : f32
    %353 = vector.broadcast %cst_147 : f32 to vector<2x1xf32>
    %354 = arith.maximumf %352, %353 : vector<2x1xf32>
    %355 = tpu.reciprocal %354 {approx = true} : vector<2x1xf32> -> vector<2x1xf32>
    %356 = vector.broadcast %355 : vector<2x1xf32> to vector<2x64xf32>
    %357 = arith.mulf %350, %356 : vector<2x64xf32>
    %358 = math.log %355 : vector<2x1xf32>
    %359 = arith.subf %346, %358 : vector<2x1xf32>
    %c0_148 = arith.constant 0 : index
    %c26 = arith.constant 26 : index
    %c0_149 = arith.constant 0 : index
    %360 = vector.load %arg10[%c0_148, %c26, %c0_149] : memref<2x64x64xf32, #tpu.memory_space<vmem>>, vector<2x1x64xf32>
    %361 = vector.shape_cast %360 : vector<2x1x64xf32> to vector<2x64xf32>
    %cst_150 = arith.constant dense<0.000000e+00> : vector<2x64xf32>
    %362 = tpu.matmul %357, %19, %cst_150 {dimension_numbers = #tpu.dot_dimension_numbers<[1], [0], [0], [1], [0, 0, 1, 1], [], []>} : vector<2x64xf32>, vector<64x64xf32>, vector<2x64xf32> -> vector<2x64xf32>
    %363 = arith.mulf %362, %361 : vector<2x64xf32>
    %cst_151 = arith.constant dense<0.000000e+00> : vector<2xf32>
    %364 = vector.multi_reduction <add>, %363, %cst_151 [1] : vector<2x64xf32> to vector<2xf32>
    %365 = vector.shape_cast %364 : vector<2xf32> to vector<2x1xf32>
    %cst_152 = arith.constant 1.000000e-30 : f32
    %366 = vector.broadcast %cst_152 : f32 to vector<2x1xf32>
    %367 = arith.maximumf %365, %366 : vector<2x1xf32>
    %368 = tpu.reciprocal %367 {approx = true} : vector<2x1xf32> -> vector<2x1xf32>
    %369 = vector.broadcast %368 : vector<2x1xf32> to vector<2x64xf32>
    %370 = arith.mulf %363, %369 : vector<2x64xf32>
    %371 = math.log %368 : vector<2x1xf32>
    %372 = arith.subf %359, %371 : vector<2x1xf32>
    %c0_153 = arith.constant 0 : index
    %c27 = arith.constant 27 : index
    %c0_154 = arith.constant 0 : index
    %373 = vector.load %arg10[%c0_153, %c27, %c0_154] : memref<2x64x64xf32, #tpu.memory_space<vmem>>, vector<2x1x64xf32>
    %374 = vector.shape_cast %373 : vector<2x1x64xf32> to vector<2x64xf32>
    %cst_155 = arith.constant dense<0.000000e+00> : vector<2x64xf32>
    %375 = tpu.matmul %370, %19, %cst_155 {dimension_numbers = #tpu.dot_dimension_numbers<[1], [0], [0], [1], [0, 0, 1, 1], [], []>} : vector<2x64xf32>, vector<64x64xf32>, vector<2x64xf32> -> vector<2x64xf32>
    %376 = arith.mulf %375, %374 : vector<2x64xf32>
    %cst_156 = arith.constant dense<0.000000e+00> : vector<2xf32>
    %377 = vector.multi_reduction <add>, %376, %cst_156 [1] : vector<2x64xf32> to vector<2xf32>
    %378 = vector.shape_cast %377 : vector<2xf32> to vector<2x1xf32>
    %cst_157 = arith.constant 1.000000e-30 : f32
    %379 = vector.broadcast %cst_157 : f32 to vector<2x1xf32>
    %380 = arith.maximumf %378, %379 : vector<2x1xf32>
    %381 = tpu.reciprocal %380 {approx = true} : vector<2x1xf32> -> vector<2x1xf32>
    %382 = vector.broadcast %381 : vector<2x1xf32> to vector<2x64xf32>
    %383 = arith.mulf %376, %382 : vector<2x64xf32>
    %384 = math.log %381 : vector<2x1xf32>
    %385 = arith.subf %372, %384 : vector<2x1xf32>
    %c0_158 = arith.constant 0 : index
    %c28 = arith.constant 28 : index
    %c0_159 = arith.constant 0 : index
    %386 = vector.load %arg10[%c0_158, %c28, %c0_159] : memref<2x64x64xf32, #tpu.memory_space<vmem>>, vector<2x1x64xf32>
    %387 = vector.shape_cast %386 : vector<2x1x64xf32> to vector<2x64xf32>
    %cst_160 = arith.constant dense<0.000000e+00> : vector<2x64xf32>
    %388 = tpu.matmul %383, %19, %cst_160 {dimension_numbers = #tpu.dot_dimension_numbers<[1], [0], [0], [1], [0, 0, 1, 1], [], []>} : vector<2x64xf32>, vector<64x64xf32>, vector<2x64xf32> -> vector<2x64xf32>
    %389 = arith.mulf %388, %387 : vector<2x64xf32>
    %cst_161 = arith.constant dense<0.000000e+00> : vector<2xf32>
    %390 = vector.multi_reduction <add>, %389, %cst_161 [1] : vector<2x64xf32> to vector<2xf32>
    %391 = vector.shape_cast %390 : vector<2xf32> to vector<2x1xf32>
    %cst_162 = arith.constant 1.000000e-30 : f32
    %392 = vector.broadcast %cst_162 : f32 to vector<2x1xf32>
    %393 = arith.maximumf %391, %392 : vector<2x1xf32>
    %394 = tpu.reciprocal %393 {approx = true} : vector<2x1xf32> -> vector<2x1xf32>
    %395 = vector.broadcast %394 : vector<2x1xf32> to vector<2x64xf32>
    %396 = arith.mulf %389, %395 : vector<2x64xf32>
    %397 = math.log %394 : vector<2x1xf32>
    %398 = arith.subf %385, %397 : vector<2x1xf32>
    %c0_163 = arith.constant 0 : index
    %c29 = arith.constant 29 : index
    %c0_164 = arith.constant 0 : index
    %399 = vector.load %arg10[%c0_163, %c29, %c0_164] : memref<2x64x64xf32, #tpu.memory_space<vmem>>, vector<2x1x64xf32>
    %400 = vector.shape_cast %399 : vector<2x1x64xf32> to vector<2x64xf32>
    %cst_165 = arith.constant dense<0.000000e+00> : vector<2x64xf32>
    %401 = tpu.matmul %396, %19, %cst_165 {dimension_numbers = #tpu.dot_dimension_numbers<[1], [0], [0], [1], [0, 0, 1, 1], [], []>} : vector<2x64xf32>, vector<64x64xf32>, vector<2x64xf32> -> vector<2x64xf32>
    %402 = arith.mulf %401, %400 : vector<2x64xf32>
    %cst_166 = arith.constant dense<0.000000e+00> : vector<2xf32>
    %403 = vector.multi_reduction <add>, %402, %cst_166 [1] : vector<2x64xf32> to vector<2xf32>
    %404 = vector.shape_cast %403 : vector<2xf32> to vector<2x1xf32>
    %cst_167 = arith.constant 1.000000e-30 : f32
    %405 = vector.broadcast %cst_167 : f32 to vector<2x1xf32>
    %406 = arith.maximumf %404, %405 : vector<2x1xf32>
    %407 = tpu.reciprocal %406 {approx = true} : vector<2x1xf32> -> vector<2x1xf32>
    %408 = vector.broadcast %407 : vector<2x1xf32> to vector<2x64xf32>
    %409 = arith.mulf %402, %408 : vector<2x64xf32>
    %410 = math.log %407 : vector<2x1xf32>
    %411 = arith.subf %398, %410 : vector<2x1xf32>
    %c0_168 = arith.constant 0 : index
    %c30 = arith.constant 30 : index
    %c0_169 = arith.constant 0 : index
    %412 = vector.load %arg10[%c0_168, %c30, %c0_169] : memref<2x64x64xf32, #tpu.memory_space<vmem>>, vector<2x1x64xf32>
    %413 = vector.shape_cast %412 : vector<2x1x64xf32> to vector<2x64xf32>
    %cst_170 = arith.constant dense<0.000000e+00> : vector<2x64xf32>
    %414 = tpu.matmul %409, %19, %cst_170 {dimension_numbers = #tpu.dot_dimension_numbers<[1], [0], [0], [1], [0, 0, 1, 1], [], []>} : vector<2x64xf32>, vector<64x64xf32>, vector<2x64xf32> -> vector<2x64xf32>
    %415 = arith.mulf %414, %413 : vector<2x64xf32>
    %cst_171 = arith.constant dense<0.000000e+00> : vector<2xf32>
    %416 = vector.multi_reduction <add>, %415, %cst_171 [1] : vector<2x64xf32> to vector<2xf32>
    %417 = vector.shape_cast %416 : vector<2xf32> to vector<2x1xf32>
    %cst_172 = arith.constant 1.000000e-30 : f32
    %418 = vector.broadcast %cst_172 : f32 to vector<2x1xf32>
    %419 = arith.maximumf %417, %418 : vector<2x1xf32>
    %420 = tpu.reciprocal %419 {approx = true} : vector<2x1xf32> -> vector<2x1xf32>
    %421 = vector.broadcast %420 : vector<2x1xf32> to vector<2x64xf32>
    %422 = arith.mulf %415, %421 : vector<2x64xf32>
    %423 = math.log %420 : vector<2x1xf32>
    %424 = arith.subf %411, %423 : vector<2x1xf32>
    %c0_173 = arith.constant 0 : index
    %c31 = arith.constant 31 : index
    %c0_174 = arith.constant 0 : index
    %425 = vector.load %arg10[%c0_173, %c31, %c0_174] : memref<2x64x64xf32, #tpu.memory_space<vmem>>, vector<2x1x64xf32>
    %426 = vector.shape_cast %425 : vector<2x1x64xf32> to vector<2x64xf32>
    %cst_175 = arith.constant dense<0.000000e+00> : vector<2x64xf32>
    %427 = tpu.matmul %422, %19, %cst_175 {dimension_numbers = #tpu.dot_dimension_numbers<[1], [0], [0], [1], [0, 0, 1, 1], [], []>} : vector<2x64xf32>, vector<64x64xf32>, vector<2x64xf32> -> vector<2x64xf32>
    %428 = arith.mulf %427, %426 : vector<2x64xf32>
    %cst_176 = arith.constant dense<0.000000e+00> : vector<2xf32>
    %429 = vector.multi_reduction <add>, %428, %cst_176 [1] : vector<2x64xf32> to vector<2xf32>
    %430 = vector.shape_cast %429 : vector<2xf32> to vector<2x1xf32>
    %cst_177 = arith.constant 1.000000e-30 : f32
    %431 = vector.broadcast %cst_177 : f32 to vector<2x1xf32>
    %432 = arith.maximumf %430, %431 : vector<2x1xf32>
    %433 = tpu.reciprocal %432 {approx = true} : vector<2x1xf32> -> vector<2x1xf32>
    %434 = vector.broadcast %433 : vector<2x1xf32> to vector<2x64xf32>
    %435 = arith.mulf %428, %434 : vector<2x64xf32>
    %436 = math.log %433 : vector<2x1xf32>
    %437 = arith.subf %424, %436 : vector<2x1xf32>
    %c0_178 = arith.constant 0 : index
    %c32 = arith.constant 32 : index
    %c0_179 = arith.constant 0 : index
    %438 = vector.load %arg10[%c0_178, %c32, %c0_179] : memref<2x64x64xf32, #tpu.memory_space<vmem>>, vector<2x1x64xf32>
    %439 = vector.shape_cast %438 : vector<2x1x64xf32> to vector<2x64xf32>
    %cst_180 = arith.constant dense<0.000000e+00> : vector<2x64xf32>
    %440 = tpu.matmul %435, %19, %cst_180 {dimension_numbers = #tpu.dot_dimension_numbers<[1], [0], [0], [1], [0, 0, 1, 1], [], []>} : vector<2x64xf32>, vector<64x64xf32>, vector<2x64xf32> -> vector<2x64xf32>
    %441 = arith.mulf %440, %439 : vector<2x64xf32>
    %cst_181 = arith.constant dense<0.000000e+00> : vector<2xf32>
    %442 = vector.multi_reduction <add>, %441, %cst_181 [1] : vector<2x64xf32> to vector<2xf32>
    %443 = vector.shape_cast %442 : vector<2xf32> to vector<2x1xf32>
    %cst_182 = arith.constant 1.000000e-30 : f32
    %444 = vector.broadcast %cst_182 : f32 to vector<2x1xf32>
    %445 = arith.maximumf %443, %444 : vector<2x1xf32>
    %446 = tpu.reciprocal %445 {approx = true} : vector<2x1xf32> -> vector<2x1xf32>
    %447 = vector.broadcast %446 : vector<2x1xf32> to vector<2x64xf32>
    %448 = arith.mulf %441, %447 : vector<2x64xf32>
    %449 = math.log %446 : vector<2x1xf32>
    %450 = arith.subf %437, %449 : vector<2x1xf32>
    %c0_183 = arith.constant 0 : index
    %c33 = arith.constant 33 : index
    %c0_184 = arith.constant 0 : index
    %451 = vector.load %arg10[%c0_183, %c33, %c0_184] : memref<2x64x64xf32, #tpu.memory_space<vmem>>, vector<2x1x64xf32>
    %452 = vector.shape_cast %451 : vector<2x1x64xf32> to vector<2x64xf32>
    %cst_185 = arith.constant dense<0.000000e+00> : vector<2x64xf32>
    %453 = tpu.matmul %448, %19, %cst_185 {dimension_numbers = #tpu.dot_dimension_numbers<[1], [0], [0], [1], [0, 0, 1, 1], [], []>} : vector<2x64xf32>, vector<64x64xf32>, vector<2x64xf32> -> vector<2x64xf32>
    %454 = arith.mulf %453, %452 : vector<2x64xf32>
    %cst_186 = arith.constant dense<0.000000e+00> : vector<2xf32>
    %455 = vector.multi_reduction <add>, %454, %cst_186 [1] : vector<2x64xf32> to vector<2xf32>
    %456 = vector.shape_cast %455 : vector<2xf32> to vector<2x1xf32>
    %cst_187 = arith.constant 1.000000e-30 : f32
    %457 = vector.broadcast %cst_187 : f32 to vector<2x1xf32>
    %458 = arith.maximumf %456, %457 : vector<2x1xf32>
    %459 = tpu.reciprocal %458 {approx = true} : vector<2x1xf32> -> vector<2x1xf32>
    %460 = vector.broadcast %459 : vector<2x1xf32> to vector<2x64xf32>
    %461 = arith.mulf %454, %460 : vector<2x64xf32>
    %462 = math.log %459 : vector<2x1xf32>
    %463 = arith.subf %450, %462 : vector<2x1xf32>
    %c0_188 = arith.constant 0 : index
    %c34 = arith.constant 34 : index
    %c0_189 = arith.constant 0 : index
    %464 = vector.load %arg10[%c0_188, %c34, %c0_189] : memref<2x64x64xf32, #tpu.memory_space<vmem>>, vector<2x1x64xf32>
    %465 = vector.shape_cast %464 : vector<2x1x64xf32> to vector<2x64xf32>
    %cst_190 = arith.constant dense<0.000000e+00> : vector<2x64xf32>
    %466 = tpu.matmul %461, %19, %cst_190 {dimension_numbers = #tpu.dot_dimension_numbers<[1], [0], [0], [1], [0, 0, 1, 1], [], []>} : vector<2x64xf32>, vector<64x64xf32>, vector<2x64xf32> -> vector<2x64xf32>
    %467 = arith.mulf %466, %465 : vector<2x64xf32>
    %cst_191 = arith.constant dense<0.000000e+00> : vector<2xf32>
    %468 = vector.multi_reduction <add>, %467, %cst_191 [1] : vector<2x64xf32> to vector<2xf32>
    %469 = vector.shape_cast %468 : vector<2xf32> to vector<2x1xf32>
    %cst_192 = arith.constant 1.000000e-30 : f32
    %470 = vector.broadcast %cst_192 : f32 to vector<2x1xf32>
    %471 = arith.maximumf %469, %470 : vector<2x1xf32>
    %472 = tpu.reciprocal %471 {approx = true} : vector<2x1xf32> -> vector<2x1xf32>
    %473 = vector.broadcast %472 : vector<2x1xf32> to vector<2x64xf32>
    %474 = arith.mulf %467, %473 : vector<2x64xf32>
    %475 = math.log %472 : vector<2x1xf32>
    %476 = arith.subf %463, %475 : vector<2x1xf32>
    %c0_193 = arith.constant 0 : index
    %c35 = arith.constant 35 : index
    %c0_194 = arith.constant 0 : index
    %477 = vector.load %arg10[%c0_193, %c35, %c0_194] : memref<2x64x64xf32, #tpu.memory_space<vmem>>, vector<2x1x64xf32>
    %478 = vector.shape_cast %477 : vector<2x1x64xf32> to vector<2x64xf32>
    %cst_195 = arith.constant dense<0.000000e+00> : vector<2x64xf32>
    %479 = tpu.matmul %474, %19, %cst_195 {dimension_numbers = #tpu.dot_dimension_numbers<[1], [0], [0], [1], [0, 0, 1, 1], [], []>} : vector<2x64xf32>, vector<64x64xf32>, vector<2x64xf32> -> vector<2x64xf32>
    %480 = arith.mulf %479, %478 : vector<2x64xf32>
    %cst_196 = arith.constant dense<0.000000e+00> : vector<2xf32>
    %481 = vector.multi_reduction <add>, %480, %cst_196 [1] : vector<2x64xf32> to vector<2xf32>
    %482 = vector.shape_cast %481 : vector<2xf32> to vector<2x1xf32>
    %cst_197 = arith.constant 1.000000e-30 : f32
    %483 = vector.broadcast %cst_197 : f32 to vector<2x1xf32>
    %484 = arith.maximumf %482, %483 : vector<2x1xf32>
    %485 = tpu.reciprocal %484 {approx = true} : vector<2x1xf32> -> vector<2x1xf32>
    %486 = vector.broadcast %485 : vector<2x1xf32> to vector<2x64xf32>
    %487 = arith.mulf %480, %486 : vector<2x64xf32>
    %488 = math.log %485 : vector<2x1xf32>
    %489 = arith.subf %476, %488 : vector<2x1xf32>
    %c0_198 = arith.constant 0 : index
    %c36 = arith.constant 36 : index
    %c0_199 = arith.constant 0 : index
    %490 = vector.load %arg10[%c0_198, %c36, %c0_199] : memref<2x64x64xf32, #tpu.memory_space<vmem>>, vector<2x1x64xf32>
    %491 = vector.shape_cast %490 : vector<2x1x64xf32> to vector<2x64xf32>
    %cst_200 = arith.constant dense<0.000000e+00> : vector<2x64xf32>
    %492 = tpu.matmul %487, %19, %cst_200 {dimension_numbers = #tpu.dot_dimension_numbers<[1], [0], [0], [1], [0, 0, 1, 1], [], []>} : vector<2x64xf32>, vector<64x64xf32>, vector<2x64xf32> -> vector<2x64xf32>
    %493 = arith.mulf %492, %491 : vector<2x64xf32>
    %cst_201 = arith.constant dense<0.000000e+00> : vector<2xf32>
    %494 = vector.multi_reduction <add>, %493, %cst_201 [1] : vector<2x64xf32> to vector<2xf32>
    %495 = vector.shape_cast %494 : vector<2xf32> to vector<2x1xf32>
    %cst_202 = arith.constant 1.000000e-30 : f32
    %496 = vector.broadcast %cst_202 : f32 to vector<2x1xf32>
    %497 = arith.maximumf %495, %496 : vector<2x1xf32>
    %498 = tpu.reciprocal %497 {approx = true} : vector<2x1xf32> -> vector<2x1xf32>
    %499 = vector.broadcast %498 : vector<2x1xf32> to vector<2x64xf32>
    %500 = arith.mulf %493, %499 : vector<2x64xf32>
    %501 = math.log %498 : vector<2x1xf32>
    %502 = arith.subf %489, %501 : vector<2x1xf32>
    %c0_203 = arith.constant 0 : index
    %c37 = arith.constant 37 : index
    %c0_204 = arith.constant 0 : index
    %503 = vector.load %arg10[%c0_203, %c37, %c0_204] : memref<2x64x64xf32, #tpu.memory_space<vmem>>, vector<2x1x64xf32>
    %504 = vector.shape_cast %503 : vector<2x1x64xf32> to vector<2x64xf32>
    %cst_205 = arith.constant dense<0.000000e+00> : vector<2x64xf32>
    %505 = tpu.matmul %500, %19, %cst_205 {dimension_numbers = #tpu.dot_dimension_numbers<[1], [0], [0], [1], [0, 0, 1, 1], [], []>} : vector<2x64xf32>, vector<64x64xf32>, vector<2x64xf32> -> vector<2x64xf32>
    %506 = arith.mulf %505, %504 : vector<2x64xf32>
    %cst_206 = arith.constant dense<0.000000e+00> : vector<2xf32>
    %507 = vector.multi_reduction <add>, %506, %cst_206 [1] : vector<2x64xf32> to vector<2xf32>
    %508 = vector.shape_cast %507 : vector<2xf32> to vector<2x1xf32>
    %cst_207 = arith.constant 1.000000e-30 : f32
    %509 = vector.broadcast %cst_207 : f32 to vector<2x1xf32>
    %510 = arith.maximumf %508, %509 : vector<2x1xf32>
    %511 = tpu.reciprocal %510 {approx = true} : vector<2x1xf32> -> vector<2x1xf32>
    %512 = vector.broadcast %511 : vector<2x1xf32> to vector<2x64xf32>
    %513 = arith.mulf %506, %512 : vector<2x64xf32>
    %514 = math.log %511 : vector<2x1xf32>
    %515 = arith.subf %502, %514 : vector<2x1xf32>
    %c0_208 = arith.constant 0 : index
    %c38 = arith.constant 38 : index
    %c0_209 = arith.constant 0 : index
    %516 = vector.load %arg10[%c0_208, %c38, %c0_209] : memref<2x64x64xf32, #tpu.memory_space<vmem>>, vector<2x1x64xf32>
    %517 = vector.shape_cast %516 : vector<2x1x64xf32> to vector<2x64xf32>
    %cst_210 = arith.constant dense<0.000000e+00> : vector<2x64xf32>
    %518 = tpu.matmul %513, %19, %cst_210 {dimension_numbers = #tpu.dot_dimension_numbers<[1], [0], [0], [1], [0, 0, 1, 1], [], []>} : vector<2x64xf32>, vector<64x64xf32>, vector<2x64xf32> -> vector<2x64xf32>
    %519 = arith.mulf %518, %517 : vector<2x64xf32>
    %cst_211 = arith.constant dense<0.000000e+00> : vector<2xf32>
    %520 = vector.multi_reduction <add>, %519, %cst_211 [1] : vector<2x64xf32> to vector<2xf32>
    %521 = vector.shape_cast %520 : vector<2xf32> to vector<2x1xf32>
    %cst_212 = arith.constant 1.000000e-30 : f32
    %522 = vector.broadcast %cst_212 : f32 to vector<2x1xf32>
    %523 = arith.maximumf %521, %522 : vector<2x1xf32>
    %524 = tpu.reciprocal %523 {approx = true} : vector<2x1xf32> -> vector<2x1xf32>
    %525 = vector.broadcast %524 : vector<2x1xf32> to vector<2x64xf32>
    %526 = arith.mulf %519, %525 : vector<2x64xf32>
    %527 = math.log %524 : vector<2x1xf32>
    %528 = arith.subf %515, %527 : vector<2x1xf32>
    %c0_213 = arith.constant 0 : index
    %c39 = arith.constant 39 : index
    %c0_214 = arith.constant 0 : index
    %529 = vector.load %arg10[%c0_213, %c39, %c0_214] : memref<2x64x64xf32, #tpu.memory_space<vmem>>, vector<2x1x64xf32>
    %530 = vector.shape_cast %529 : vector<2x1x64xf32> to vector<2x64xf32>
    %cst_215 = arith.constant dense<0.000000e+00> : vector<2x64xf32>
    %531 = tpu.matmul %526, %19, %cst_215 {dimension_numbers = #tpu.dot_dimension_numbers<[1], [0], [0], [1], [0, 0, 1, 1], [], []>} : vector<2x64xf32>, vector<64x64xf32>, vector<2x64xf32> -> vector<2x64xf32>
    %532 = arith.mulf %531, %530 : vector<2x64xf32>
    %cst_216 = arith.constant dense<0.000000e+00> : vector<2xf32>
    %533 = vector.multi_reduction <add>, %532, %cst_216 [1] : vector<2x64xf32> to vector<2xf32>
    %534 = vector.shape_cast %533 : vector<2xf32> to vector<2x1xf32>
    %cst_217 = arith.constant 1.000000e-30 : f32
    %535 = vector.broadcast %cst_217 : f32 to vector<2x1xf32>
    %536 = arith.maximumf %534, %535 : vector<2x1xf32>
    %537 = tpu.reciprocal %536 {approx = true} : vector<2x1xf32> -> vector<2x1xf32>
    %538 = vector.broadcast %537 : vector<2x1xf32> to vector<2x64xf32>
    %539 = arith.mulf %532, %538 : vector<2x64xf32>
    %540 = math.log %537 : vector<2x1xf32>
    %541 = arith.subf %528, %540 : vector<2x1xf32>
    %c0_218 = arith.constant 0 : index
    %c40 = arith.constant 40 : index
    %c0_219 = arith.constant 0 : index
    %542 = vector.load %arg10[%c0_218, %c40, %c0_219] : memref<2x64x64xf32, #tpu.memory_space<vmem>>, vector<2x1x64xf32>
    %543 = vector.shape_cast %542 : vector<2x1x64xf32> to vector<2x64xf32>
    %cst_220 = arith.constant dense<0.000000e+00> : vector<2x64xf32>
    %544 = tpu.matmul %539, %19, %cst_220 {dimension_numbers = #tpu.dot_dimension_numbers<[1], [0], [0], [1], [0, 0, 1, 1], [], []>} : vector<2x64xf32>, vector<64x64xf32>, vector<2x64xf32> -> vector<2x64xf32>
    %545 = arith.mulf %544, %543 : vector<2x64xf32>
    %cst_221 = arith.constant dense<0.000000e+00> : vector<2xf32>
    %546 = vector.multi_reduction <add>, %545, %cst_221 [1] : vector<2x64xf32> to vector<2xf32>
    %547 = vector.shape_cast %546 : vector<2xf32> to vector<2x1xf32>
    %cst_222 = arith.constant 1.000000e-30 : f32
    %548 = vector.broadcast %cst_222 : f32 to vector<2x1xf32>
    %549 = arith.maximumf %547, %548 : vector<2x1xf32>
    %550 = tpu.reciprocal %549 {approx = true} : vector<2x1xf32> -> vector<2x1xf32>
    %551 = vector.broadcast %550 : vector<2x1xf32> to vector<2x64xf32>
    %552 = arith.mulf %545, %551 : vector<2x64xf32>
    %553 = math.log %550 : vector<2x1xf32>
    %554 = arith.subf %541, %553 : vector<2x1xf32>
    %c0_223 = arith.constant 0 : index
    %c41 = arith.constant 41 : index
    %c0_224 = arith.constant 0 : index
    %555 = vector.load %arg10[%c0_223, %c41, %c0_224] : memref<2x64x64xf32, #tpu.memory_space<vmem>>, vector<2x1x64xf32>
    %556 = vector.shape_cast %555 : vector<2x1x64xf32> to vector<2x64xf32>
    %cst_225 = arith.constant dense<0.000000e+00> : vector<2x64xf32>
    %557 = tpu.matmul %552, %19, %cst_225 {dimension_numbers = #tpu.dot_dimension_numbers<[1], [0], [0], [1], [0, 0, 1, 1], [], []>} : vector<2x64xf32>, vector<64x64xf32>, vector<2x64xf32> -> vector<2x64xf32>
    %558 = arith.mulf %557, %556 : vector<2x64xf32>
    %cst_226 = arith.constant dense<0.000000e+00> : vector<2xf32>
    %559 = vector.multi_reduction <add>, %558, %cst_226 [1] : vector<2x64xf32> to vector<2xf32>
    %560 = vector.shape_cast %559 : vector<2xf32> to vector<2x1xf32>
    %cst_227 = arith.constant 1.000000e-30 : f32
    %561 = vector.broadcast %cst_227 : f32 to vector<2x1xf32>
    %562 = arith.maximumf %560, %561 : vector<2x1xf32>
    %563 = tpu.reciprocal %562 {approx = true} : vector<2x1xf32> -> vector<2x1xf32>
    %564 = vector.broadcast %563 : vector<2x1xf32> to vector<2x64xf32>
    %565 = arith.mulf %558, %564 : vector<2x64xf32>
    %566 = math.log %563 : vector<2x1xf32>
    %567 = arith.subf %554, %566 : vector<2x1xf32>
    %c0_228 = arith.constant 0 : index
    %c42 = arith.constant 42 : index
    %c0_229 = arith.constant 0 : index
    %568 = vector.load %arg10[%c0_228, %c42, %c0_229] : memref<2x64x64xf32, #tpu.memory_space<vmem>>, vector<2x1x64xf32>
    %569 = vector.shape_cast %568 : vector<2x1x64xf32> to vector<2x64xf32>
    %cst_230 = arith.constant dense<0.000000e+00> : vector<2x64xf32>
    %570 = tpu.matmul %565, %19, %cst_230 {dimension_numbers = #tpu.dot_dimension_numbers<[1], [0], [0], [1], [0, 0, 1, 1], [], []>} : vector<2x64xf32>, vector<64x64xf32>, vector<2x64xf32> -> vector<2x64xf32>
    %571 = arith.mulf %570, %569 : vector<2x64xf32>
    %cst_231 = arith.constant dense<0.000000e+00> : vector<2xf32>
    %572 = vector.multi_reduction <add>, %571, %cst_231 [1] : vector<2x64xf32> to vector<2xf32>
    %573 = vector.shape_cast %572 : vector<2xf32> to vector<2x1xf32>
    %cst_232 = arith.constant 1.000000e-30 : f32
    %574 = vector.broadcast %cst_232 : f32 to vector<2x1xf32>
    %575 = arith.maximumf %573, %574 : vector<2x1xf32>
    %576 = tpu.reciprocal %575 {approx = true} : vector<2x1xf32> -> vector<2x1xf32>
    %577 = vector.broadcast %576 : vector<2x1xf32> to vector<2x64xf32>
    %578 = arith.mulf %571, %577 : vector<2x64xf32>
    %579 = math.log %576 : vector<2x1xf32>
    %580 = arith.subf %567, %579 : vector<2x1xf32>
    %c0_233 = arith.constant 0 : index
    %c43 = arith.constant 43 : index
    %c0_234 = arith.constant 0 : index
    %581 = vector.load %arg10[%c0_233, %c43, %c0_234] : memref<2x64x64xf32, #tpu.memory_space<vmem>>, vector<2x1x64xf32>
    %582 = vector.shape_cast %581 : vector<2x1x64xf32> to vector<2x64xf32>
    %cst_235 = arith.constant dense<0.000000e+00> : vector<2x64xf32>
    %583 = tpu.matmul %578, %19, %cst_235 {dimension_numbers = #tpu.dot_dimension_numbers<[1], [0], [0], [1], [0, 0, 1, 1], [], []>} : vector<2x64xf32>, vector<64x64xf32>, vector<2x64xf32> -> vector<2x64xf32>
    %584 = arith.mulf %583, %582 : vector<2x64xf32>
    %cst_236 = arith.constant dense<0.000000e+00> : vector<2xf32>
    %585 = vector.multi_reduction <add>, %584, %cst_236 [1] : vector<2x64xf32> to vector<2xf32>
    %586 = vector.shape_cast %585 : vector<2xf32> to vector<2x1xf32>
    %cst_237 = arith.constant 1.000000e-30 : f32
    %587 = vector.broadcast %cst_237 : f32 to vector<2x1xf32>
    %588 = arith.maximumf %586, %587 : vector<2x1xf32>
    %589 = tpu.reciprocal %588 {approx = true} : vector<2x1xf32> -> vector<2x1xf32>
    %590 = vector.broadcast %589 : vector<2x1xf32> to vector<2x64xf32>
    %591 = arith.mulf %584, %590 : vector<2x64xf32>
    %592 = math.log %589 : vector<2x1xf32>
    %593 = arith.subf %580, %592 : vector<2x1xf32>
    %c0_238 = arith.constant 0 : index
    %c44 = arith.constant 44 : index
    %c0_239 = arith.constant 0 : index
    %594 = vector.load %arg10[%c0_238, %c44, %c0_239] : memref<2x64x64xf32, #tpu.memory_space<vmem>>, vector<2x1x64xf32>
    %595 = vector.shape_cast %594 : vector<2x1x64xf32> to vector<2x64xf32>
    %cst_240 = arith.constant dense<0.000000e+00> : vector<2x64xf32>
    %596 = tpu.matmul %591, %19, %cst_240 {dimension_numbers = #tpu.dot_dimension_numbers<[1], [0], [0], [1], [0, 0, 1, 1], [], []>} : vector<2x64xf32>, vector<64x64xf32>, vector<2x64xf32> -> vector<2x64xf32>
    %597 = arith.mulf %596, %595 : vector<2x64xf32>
    %cst_241 = arith.constant dense<0.000000e+00> : vector<2xf32>
    %598 = vector.multi_reduction <add>, %597, %cst_241 [1] : vector<2x64xf32> to vector<2xf32>
    %599 = vector.shape_cast %598 : vector<2xf32> to vector<2x1xf32>
    %cst_242 = arith.constant 1.000000e-30 : f32
    %600 = vector.broadcast %cst_242 : f32 to vector<2x1xf32>
    %601 = arith.maximumf %599, %600 : vector<2x1xf32>
    %602 = tpu.reciprocal %601 {approx = true} : vector<2x1xf32> -> vector<2x1xf32>
    %603 = vector.broadcast %602 : vector<2x1xf32> to vector<2x64xf32>
    %604 = arith.mulf %597, %603 : vector<2x64xf32>
    %605 = math.log %602 : vector<2x1xf32>
    %606 = arith.subf %593, %605 : vector<2x1xf32>
    %c0_243 = arith.constant 0 : index
    %c45 = arith.constant 45 : index
    %c0_244 = arith.constant 0 : index
    %607 = vector.load %arg10[%c0_243, %c45, %c0_244] : memref<2x64x64xf32, #tpu.memory_space<vmem>>, vector<2x1x64xf32>
    %608 = vector.shape_cast %607 : vector<2x1x64xf32> to vector<2x64xf32>
    %cst_245 = arith.constant dense<0.000000e+00> : vector<2x64xf32>
    %609 = tpu.matmul %604, %19, %cst_245 {dimension_numbers = #tpu.dot_dimension_numbers<[1], [0], [0], [1], [0, 0, 1, 1], [], []>} : vector<2x64xf32>, vector<64x64xf32>, vector<2x64xf32> -> vector<2x64xf32>
    %610 = arith.mulf %609, %608 : vector<2x64xf32>
    %cst_246 = arith.constant dense<0.000000e+00> : vector<2xf32>
    %611 = vector.multi_reduction <add>, %610, %cst_246 [1] : vector<2x64xf32> to vector<2xf32>
    %612 = vector.shape_cast %611 : vector<2xf32> to vector<2x1xf32>
    %cst_247 = arith.constant 1.000000e-30 : f32
    %613 = vector.broadcast %cst_247 : f32 to vector<2x1xf32>
    %614 = arith.maximumf %612, %613 : vector<2x1xf32>
    %615 = tpu.reciprocal %614 {approx = true} : vector<2x1xf32> -> vector<2x1xf32>
    %616 = vector.broadcast %615 : vector<2x1xf32> to vector<2x64xf32>
    %617 = arith.mulf %610, %616 : vector<2x64xf32>
    %618 = math.log %615 : vector<2x1xf32>
    %619 = arith.subf %606, %618 : vector<2x1xf32>
    %c0_248 = arith.constant 0 : index
    %c46 = arith.constant 46 : index
    %c0_249 = arith.constant 0 : index
    %620 = vector.load %arg10[%c0_248, %c46, %c0_249] : memref<2x64x64xf32, #tpu.memory_space<vmem>>, vector<2x1x64xf32>
    %621 = vector.shape_cast %620 : vector<2x1x64xf32> to vector<2x64xf32>
    %cst_250 = arith.constant dense<0.000000e+00> : vector<2x64xf32>
    %622 = tpu.matmul %617, %19, %cst_250 {dimension_numbers = #tpu.dot_dimension_numbers<[1], [0], [0], [1], [0, 0, 1, 1], [], []>} : vector<2x64xf32>, vector<64x64xf32>, vector<2x64xf32> -> vector<2x64xf32>
    %623 = arith.mulf %622, %621 : vector<2x64xf32>
    %cst_251 = arith.constant dense<0.000000e+00> : vector<2xf32>
    %624 = vector.multi_reduction <add>, %623, %cst_251 [1] : vector<2x64xf32> to vector<2xf32>
    %625 = vector.shape_cast %624 : vector<2xf32> to vector<2x1xf32>
    %cst_252 = arith.constant 1.000000e-30 : f32
    %626 = vector.broadcast %cst_252 : f32 to vector<2x1xf32>
    %627 = arith.maximumf %625, %626 : vector<2x1xf32>
    %628 = tpu.reciprocal %627 {approx = true} : vector<2x1xf32> -> vector<2x1xf32>
    %629 = vector.broadcast %628 : vector<2x1xf32> to vector<2x64xf32>
    %630 = arith.mulf %623, %629 : vector<2x64xf32>
    %631 = math.log %628 : vector<2x1xf32>
    %632 = arith.subf %619, %631 : vector<2x1xf32>
    %c0_253 = arith.constant 0 : index
    %c47 = arith.constant 47 : index
    %c0_254 = arith.constant 0 : index
    %633 = vector.load %arg10[%c0_253, %c47, %c0_254] : memref<2x64x64xf32, #tpu.memory_space<vmem>>, vector<2x1x64xf32>
    %634 = vector.shape_cast %633 : vector<2x1x64xf32> to vector<2x64xf32>
    %cst_255 = arith.constant dense<0.000000e+00> : vector<2x64xf32>
    %635 = tpu.matmul %630, %19, %cst_255 {dimension_numbers = #tpu.dot_dimension_numbers<[1], [0], [0], [1], [0, 0, 1, 1], [], []>} : vector<2x64xf32>, vector<64x64xf32>, vector<2x64xf32> -> vector<2x64xf32>
    %636 = arith.mulf %635, %634 : vector<2x64xf32>
    %cst_256 = arith.constant dense<0.000000e+00> : vector<2xf32>
    %637 = vector.multi_reduction <add>, %636, %cst_256 [1] : vector<2x64xf32> to vector<2xf32>
    %638 = vector.shape_cast %637 : vector<2xf32> to vector<2x1xf32>
    %cst_257 = arith.constant 1.000000e-30 : f32
    %639 = vector.broadcast %cst_257 : f32 to vector<2x1xf32>
    %640 = arith.maximumf %638, %639 : vector<2x1xf32>
    %641 = tpu.reciprocal %640 {approx = true} : vector<2x1xf32> -> vector<2x1xf32>
    %642 = vector.broadcast %641 : vector<2x1xf32> to vector<2x64xf32>
    %643 = arith.mulf %636, %642 : vector<2x64xf32>
    %644 = math.log %641 : vector<2x1xf32>
    %645 = arith.subf %632, %644 : vector<2x1xf32>
    %c0_258 = arith.constant 0 : index
    %c48 = arith.constant 48 : index
    %c0_259 = arith.constant 0 : index
    %646 = vector.load %arg10[%c0_258, %c48, %c0_259] : memref<2x64x64xf32, #tpu.memory_space<vmem>>, vector<2x1x64xf32>
    %647 = vector.shape_cast %646 : vector<2x1x64xf32> to vector<2x64xf32>
    %cst_260 = arith.constant dense<0.000000e+00> : vector<2x64xf32>
    %648 = tpu.matmul %643, %19, %cst_260 {dimension_numbers = #tpu.dot_dimension_numbers<[1], [0], [0], [1], [0, 0, 1, 1], [], []>} : vector<2x64xf32>, vector<64x64xf32>, vector<2x64xf32> -> vector<2x64xf32>
    %649 = arith.mulf %648, %647 : vector<2x64xf32>
    %cst_261 = arith.constant dense<0.000000e+00> : vector<2xf32>
    %650 = vector.multi_reduction <add>, %649, %cst_261 [1] : vector<2x64xf32> to vector<2xf32>
    %651 = vector.shape_cast %650 : vector<2xf32> to vector<2x1xf32>
    %cst_262 = arith.constant 1.000000e-30 : f32
    %652 = vector.broadcast %cst_262 : f32 to vector<2x1xf32>
    %653 = arith.maximumf %651, %652 : vector<2x1xf32>
    %654 = tpu.reciprocal %653 {approx = true} : vector<2x1xf32> -> vector<2x1xf32>
    %655 = vector.broadcast %654 : vector<2x1xf32> to vector<2x64xf32>
    %656 = arith.mulf %649, %655 : vector<2x64xf32>
    %657 = math.log %654 : vector<2x1xf32>
    %658 = arith.subf %645, %657 : vector<2x1xf32>
    %c0_263 = arith.constant 0 : index
    %c49 = arith.constant 49 : index
    %c0_264 = arith.constant 0 : index
    %659 = vector.load %arg10[%c0_263, %c49, %c0_264] : memref<2x64x64xf32, #tpu.memory_space<vmem>>, vector<2x1x64xf32>
    %660 = vector.shape_cast %659 : vector<2x1x64xf32> to vector<2x64xf32>
    %cst_265 = arith.constant dense<0.000000e+00> : vector<2x64xf32>
    %661 = tpu.matmul %656, %19, %cst_265 {dimension_numbers = #tpu.dot_dimension_numbers<[1], [0], [0], [1], [0, 0, 1, 1], [], []>} : vector<2x64xf32>, vector<64x64xf32>, vector<2x64xf32> -> vector<2x64xf32>
    %662 = arith.mulf %661, %660 : vector<2x64xf32>
    %cst_266 = arith.constant dense<0.000000e+00> : vector<2xf32>
    %663 = vector.multi_reduction <add>, %662, %cst_266 [1] : vector<2x64xf32> to vector<2xf32>
    %664 = vector.shape_cast %663 : vector<2xf32> to vector<2x1xf32>
    %cst_267 = arith.constant 1.000000e-30 : f32
    %665 = vector.broadcast %cst_267 : f32 to vector<2x1xf32>
    %666 = arith.maximumf %664, %665 : vector<2x1xf32>
    %667 = tpu.reciprocal %666 {approx = true} : vector<2x1xf32> -> vector<2x1xf32>
    %668 = vector.broadcast %667 : vector<2x1xf32> to vector<2x64xf32>
    %669 = arith.mulf %662, %668 : vector<2x64xf32>
    %670 = math.log %667 : vector<2x1xf32>
    %671 = arith.subf %658, %670 : vector<2x1xf32>
    %c0_268 = arith.constant 0 : index
    %c50 = arith.constant 50 : index
    %c0_269 = arith.constant 0 : index
    %672 = vector.load %arg10[%c0_268, %c50, %c0_269] : memref<2x64x64xf32, #tpu.memory_space<vmem>>, vector<2x1x64xf32>
    %673 = vector.shape_cast %672 : vector<2x1x64xf32> to vector<2x64xf32>
    %cst_270 = arith.constant dense<0.000000e+00> : vector<2x64xf32>
    %674 = tpu.matmul %669, %19, %cst_270 {dimension_numbers = #tpu.dot_dimension_numbers<[1], [0], [0], [1], [0, 0, 1, 1], [], []>} : vector<2x64xf32>, vector<64x64xf32>, vector<2x64xf32> -> vector<2x64xf32>
    %675 = arith.mulf %674, %673 : vector<2x64xf32>
    %cst_271 = arith.constant dense<0.000000e+00> : vector<2xf32>
    %676 = vector.multi_reduction <add>, %675, %cst_271 [1] : vector<2x64xf32> to vector<2xf32>
    %677 = vector.shape_cast %676 : vector<2xf32> to vector<2x1xf32>
    %cst_272 = arith.constant 1.000000e-30 : f32
    %678 = vector.broadcast %cst_272 : f32 to vector<2x1xf32>
    %679 = arith.maximumf %677, %678 : vector<2x1xf32>
    %680 = tpu.reciprocal %679 {approx = true} : vector<2x1xf32> -> vector<2x1xf32>
    %681 = vector.broadcast %680 : vector<2x1xf32> to vector<2x64xf32>
    %682 = arith.mulf %675, %681 : vector<2x64xf32>
    %683 = math.log %680 : vector<2x1xf32>
    %684 = arith.subf %671, %683 : vector<2x1xf32>
    %c0_273 = arith.constant 0 : index
    %c51 = arith.constant 51 : index
    %c0_274 = arith.constant 0 : index
    %685 = vector.load %arg10[%c0_273, %c51, %c0_274] : memref<2x64x64xf32, #tpu.memory_space<vmem>>, vector<2x1x64xf32>
    %686 = vector.shape_cast %685 : vector<2x1x64xf32> to vector<2x64xf32>
    %cst_275 = arith.constant dense<0.000000e+00> : vector<2x64xf32>
    %687 = tpu.matmul %682, %19, %cst_275 {dimension_numbers = #tpu.dot_dimension_numbers<[1], [0], [0], [1], [0, 0, 1, 1], [], []>} : vector<2x64xf32>, vector<64x64xf32>, vector<2x64xf32> -> vector<2x64xf32>
    %688 = arith.mulf %687, %686 : vector<2x64xf32>
    %cst_276 = arith.constant dense<0.000000e+00> : vector<2xf32>
    %689 = vector.multi_reduction <add>, %688, %cst_276 [1] : vector<2x64xf32> to vector<2xf32>
    %690 = vector.shape_cast %689 : vector<2xf32> to vector<2x1xf32>
    %cst_277 = arith.constant 1.000000e-30 : f32
    %691 = vector.broadcast %cst_277 : f32 to vector<2x1xf32>
    %692 = arith.maximumf %690, %691 : vector<2x1xf32>
    %693 = tpu.reciprocal %692 {approx = true} : vector<2x1xf32> -> vector<2x1xf32>
    %694 = vector.broadcast %693 : vector<2x1xf32> to vector<2x64xf32>
    %695 = arith.mulf %688, %694 : vector<2x64xf32>
    %696 = math.log %693 : vector<2x1xf32>
    %697 = arith.subf %684, %696 : vector<2x1xf32>
    %c0_278 = arith.constant 0 : index
    %c52 = arith.constant 52 : index
    %c0_279 = arith.constant 0 : index
    %698 = vector.load %arg10[%c0_278, %c52, %c0_279] : memref<2x64x64xf32, #tpu.memory_space<vmem>>, vector<2x1x64xf32>
    %699 = vector.shape_cast %698 : vector<2x1x64xf32> to vector<2x64xf32>
    %cst_280 = arith.constant dense<0.000000e+00> : vector<2x64xf32>
    %700 = tpu.matmul %695, %19, %cst_280 {dimension_numbers = #tpu.dot_dimension_numbers<[1], [0], [0], [1], [0, 0, 1, 1], [], []>} : vector<2x64xf32>, vector<64x64xf32>, vector<2x64xf32> -> vector<2x64xf32>
    %701 = arith.mulf %700, %699 : vector<2x64xf32>
    %cst_281 = arith.constant dense<0.000000e+00> : vector<2xf32>
    %702 = vector.multi_reduction <add>, %701, %cst_281 [1] : vector<2x64xf32> to vector<2xf32>
    %703 = vector.shape_cast %702 : vector<2xf32> to vector<2x1xf32>
    %cst_282 = arith.constant 1.000000e-30 : f32
    %704 = vector.broadcast %cst_282 : f32 to vector<2x1xf32>
    %705 = arith.maximumf %703, %704 : vector<2x1xf32>
    %706 = tpu.reciprocal %705 {approx = true} : vector<2x1xf32> -> vector<2x1xf32>
    %707 = vector.broadcast %706 : vector<2x1xf32> to vector<2x64xf32>
    %708 = arith.mulf %701, %707 : vector<2x64xf32>
    %709 = math.log %706 : vector<2x1xf32>
    %710 = arith.subf %697, %709 : vector<2x1xf32>
    %c0_283 = arith.constant 0 : index
    %c53 = arith.constant 53 : index
    %c0_284 = arith.constant 0 : index
    %711 = vector.load %arg10[%c0_283, %c53, %c0_284] : memref<2x64x64xf32, #tpu.memory_space<vmem>>, vector<2x1x64xf32>
    %712 = vector.shape_cast %711 : vector<2x1x64xf32> to vector<2x64xf32>
    %cst_285 = arith.constant dense<0.000000e+00> : vector<2x64xf32>
    %713 = tpu.matmul %708, %19, %cst_285 {dimension_numbers = #tpu.dot_dimension_numbers<[1], [0], [0], [1], [0, 0, 1, 1], [], []>} : vector<2x64xf32>, vector<64x64xf32>, vector<2x64xf32> -> vector<2x64xf32>
    %714 = arith.mulf %713, %712 : vector<2x64xf32>
    %cst_286 = arith.constant dense<0.000000e+00> : vector<2xf32>
    %715 = vector.multi_reduction <add>, %714, %cst_286 [1] : vector<2x64xf32> to vector<2xf32>
    %716 = vector.shape_cast %715 : vector<2xf32> to vector<2x1xf32>
    %cst_287 = arith.constant 1.000000e-30 : f32
    %717 = vector.broadcast %cst_287 : f32 to vector<2x1xf32>
    %718 = arith.maximumf %716, %717 : vector<2x1xf32>
    %719 = tpu.reciprocal %718 {approx = true} : vector<2x1xf32> -> vector<2x1xf32>
    %720 = vector.broadcast %719 : vector<2x1xf32> to vector<2x64xf32>
    %721 = arith.mulf %714, %720 : vector<2x64xf32>
    %722 = math.log %719 : vector<2x1xf32>
    %723 = arith.subf %710, %722 : vector<2x1xf32>
    %c0_288 = arith.constant 0 : index
    %c54 = arith.constant 54 : index
    %c0_289 = arith.constant 0 : index
    %724 = vector.load %arg10[%c0_288, %c54, %c0_289] : memref<2x64x64xf32, #tpu.memory_space<vmem>>, vector<2x1x64xf32>
    %725 = vector.shape_cast %724 : vector<2x1x64xf32> to vector<2x64xf32>
    %cst_290 = arith.constant dense<0.000000e+00> : vector<2x64xf32>
    %726 = tpu.matmul %721, %19, %cst_290 {dimension_numbers = #tpu.dot_dimension_numbers<[1], [0], [0], [1], [0, 0, 1, 1], [], []>} : vector<2x64xf32>, vector<64x64xf32>, vector<2x64xf32> -> vector<2x64xf32>
    %727 = arith.mulf %726, %725 : vector<2x64xf32>
    %cst_291 = arith.constant dense<0.000000e+00> : vector<2xf32>
    %728 = vector.multi_reduction <add>, %727, %cst_291 [1] : vector<2x64xf32> to vector<2xf32>
    %729 = vector.shape_cast %728 : vector<2xf32> to vector<2x1xf32>
    %cst_292 = arith.constant 1.000000e-30 : f32
    %730 = vector.broadcast %cst_292 : f32 to vector<2x1xf32>
    %731 = arith.maximumf %729, %730 : vector<2x1xf32>
    %732 = tpu.reciprocal %731 {approx = true} : vector<2x1xf32> -> vector<2x1xf32>
    %733 = vector.broadcast %732 : vector<2x1xf32> to vector<2x64xf32>
    %734 = arith.mulf %727, %733 : vector<2x64xf32>
    %735 = math.log %732 : vector<2x1xf32>
    %736 = arith.subf %723, %735 : vector<2x1xf32>
    %c0_293 = arith.constant 0 : index
    %c55 = arith.constant 55 : index
    %c0_294 = arith.constant 0 : index
    %737 = vector.load %arg10[%c0_293, %c55, %c0_294] : memref<2x64x64xf32, #tpu.memory_space<vmem>>, vector<2x1x64xf32>
    %738 = vector.shape_cast %737 : vector<2x1x64xf32> to vector<2x64xf32>
    %cst_295 = arith.constant dense<0.000000e+00> : vector<2x64xf32>
    %739 = tpu.matmul %734, %19, %cst_295 {dimension_numbers = #tpu.dot_dimension_numbers<[1], [0], [0], [1], [0, 0, 1, 1], [], []>} : vector<2x64xf32>, vector<64x64xf32>, vector<2x64xf32> -> vector<2x64xf32>
    %740 = arith.mulf %739, %738 : vector<2x64xf32>
    %cst_296 = arith.constant dense<0.000000e+00> : vector<2xf32>
    %741 = vector.multi_reduction <add>, %740, %cst_296 [1] : vector<2x64xf32> to vector<2xf32>
    %742 = vector.shape_cast %741 : vector<2xf32> to vector<2x1xf32>
    %cst_297 = arith.constant 1.000000e-30 : f32
    %743 = vector.broadcast %cst_297 : f32 to vector<2x1xf32>
    %744 = arith.maximumf %742, %743 : vector<2x1xf32>
    %745 = tpu.reciprocal %744 {approx = true} : vector<2x1xf32> -> vector<2x1xf32>
    %746 = vector.broadcast %745 : vector<2x1xf32> to vector<2x64xf32>
    %747 = arith.mulf %740, %746 : vector<2x64xf32>
    %748 = math.log %745 : vector<2x1xf32>
    %749 = arith.subf %736, %748 : vector<2x1xf32>
    %c0_298 = arith.constant 0 : index
    %c56 = arith.constant 56 : index
    %c0_299 = arith.constant 0 : index
    %750 = vector.load %arg10[%c0_298, %c56, %c0_299] : memref<2x64x64xf32, #tpu.memory_space<vmem>>, vector<2x1x64xf32>
    %751 = vector.shape_cast %750 : vector<2x1x64xf32> to vector<2x64xf32>
    %cst_300 = arith.constant dense<0.000000e+00> : vector<2x64xf32>
    %752 = tpu.matmul %747, %19, %cst_300 {dimension_numbers = #tpu.dot_dimension_numbers<[1], [0], [0], [1], [0, 0, 1, 1], [], []>} : vector<2x64xf32>, vector<64x64xf32>, vector<2x64xf32> -> vector<2x64xf32>
    %753 = arith.mulf %752, %751 : vector<2x64xf32>
    %cst_301 = arith.constant dense<0.000000e+00> : vector<2xf32>
    %754 = vector.multi_reduction <add>, %753, %cst_301 [1] : vector<2x64xf32> to vector<2xf32>
    %755 = vector.shape_cast %754 : vector<2xf32> to vector<2x1xf32>
    %cst_302 = arith.constant 1.000000e-30 : f32
    %756 = vector.broadcast %cst_302 : f32 to vector<2x1xf32>
    %757 = arith.maximumf %755, %756 : vector<2x1xf32>
    %758 = tpu.reciprocal %757 {approx = true} : vector<2x1xf32> -> vector<2x1xf32>
    %759 = vector.broadcast %758 : vector<2x1xf32> to vector<2x64xf32>
    %760 = arith.mulf %753, %759 : vector<2x64xf32>
    %761 = math.log %758 : vector<2x1xf32>
    %762 = arith.subf %749, %761 : vector<2x1xf32>
    %c0_303 = arith.constant 0 : index
    %c57 = arith.constant 57 : index
    %c0_304 = arith.constant 0 : index
    %763 = vector.load %arg10[%c0_303, %c57, %c0_304] : memref<2x64x64xf32, #tpu.memory_space<vmem>>, vector<2x1x64xf32>
    %764 = vector.shape_cast %763 : vector<2x1x64xf32> to vector<2x64xf32>
    %cst_305 = arith.constant dense<0.000000e+00> : vector<2x64xf32>
    %765 = tpu.matmul %760, %19, %cst_305 {dimension_numbers = #tpu.dot_dimension_numbers<[1], [0], [0], [1], [0, 0, 1, 1], [], []>} : vector<2x64xf32>, vector<64x64xf32>, vector<2x64xf32> -> vector<2x64xf32>
    %766 = arith.mulf %765, %764 : vector<2x64xf32>
    %cst_306 = arith.constant dense<0.000000e+00> : vector<2xf32>
    %767 = vector.multi_reduction <add>, %766, %cst_306 [1] : vector<2x64xf32> to vector<2xf32>
    %768 = vector.shape_cast %767 : vector<2xf32> to vector<2x1xf32>
    %cst_307 = arith.constant 1.000000e-30 : f32
    %769 = vector.broadcast %cst_307 : f32 to vector<2x1xf32>
    %770 = arith.maximumf %768, %769 : vector<2x1xf32>
    %771 = tpu.reciprocal %770 {approx = true} : vector<2x1xf32> -> vector<2x1xf32>
    %772 = vector.broadcast %771 : vector<2x1xf32> to vector<2x64xf32>
    %773 = arith.mulf %766, %772 : vector<2x64xf32>
    %774 = math.log %771 : vector<2x1xf32>
    %775 = arith.subf %762, %774 : vector<2x1xf32>
    %c0_308 = arith.constant 0 : index
    %c58 = arith.constant 58 : index
    %c0_309 = arith.constant 0 : index
    %776 = vector.load %arg10[%c0_308, %c58, %c0_309] : memref<2x64x64xf32, #tpu.memory_space<vmem>>, vector<2x1x64xf32>
    %777 = vector.shape_cast %776 : vector<2x1x64xf32> to vector<2x64xf32>
    %cst_310 = arith.constant dense<0.000000e+00> : vector<2x64xf32>
    %778 = tpu.matmul %773, %19, %cst_310 {dimension_numbers = #tpu.dot_dimension_numbers<[1], [0], [0], [1], [0, 0, 1, 1], [], []>} : vector<2x64xf32>, vector<64x64xf32>, vector<2x64xf32> -> vector<2x64xf32>
    %779 = arith.mulf %778, %777 : vector<2x64xf32>
    %cst_311 = arith.constant dense<0.000000e+00> : vector<2xf32>
    %780 = vector.multi_reduction <add>, %779, %cst_311 [1] : vector<2x64xf32> to vector<2xf32>
    %781 = vector.shape_cast %780 : vector<2xf32> to vector<2x1xf32>
    %cst_312 = arith.constant 1.000000e-30 : f32
    %782 = vector.broadcast %cst_312 : f32 to vector<2x1xf32>
    %783 = arith.maximumf %781, %782 : vector<2x1xf32>
    %784 = tpu.reciprocal %783 {approx = true} : vector<2x1xf32> -> vector<2x1xf32>
    %785 = vector.broadcast %784 : vector<2x1xf32> to vector<2x64xf32>
    %786 = arith.mulf %779, %785 : vector<2x64xf32>
    %787 = math.log %784 : vector<2x1xf32>
    %788 = arith.subf %775, %787 : vector<2x1xf32>
    %c0_313 = arith.constant 0 : index
    %c59 = arith.constant 59 : index
    %c0_314 = arith.constant 0 : index
    %789 = vector.load %arg10[%c0_313, %c59, %c0_314] : memref<2x64x64xf32, #tpu.memory_space<vmem>>, vector<2x1x64xf32>
    %790 = vector.shape_cast %789 : vector<2x1x64xf32> to vector<2x64xf32>
    %cst_315 = arith.constant dense<0.000000e+00> : vector<2x64xf32>
    %791 = tpu.matmul %786, %19, %cst_315 {dimension_numbers = #tpu.dot_dimension_numbers<[1], [0], [0], [1], [0, 0, 1, 1], [], []>} : vector<2x64xf32>, vector<64x64xf32>, vector<2x64xf32> -> vector<2x64xf32>
    %792 = arith.mulf %791, %790 : vector<2x64xf32>
    %cst_316 = arith.constant dense<0.000000e+00> : vector<2xf32>
    %793 = vector.multi_reduction <add>, %792, %cst_316 [1] : vector<2x64xf32> to vector<2xf32>
    %794 = vector.shape_cast %793 : vector<2xf32> to vector<2x1xf32>
    %cst_317 = arith.constant 1.000000e-30 : f32
    %795 = vector.broadcast %cst_317 : f32 to vector<2x1xf32>
    %796 = arith.maximumf %794, %795 : vector<2x1xf32>
    %797 = tpu.reciprocal %796 {approx = true} : vector<2x1xf32> -> vector<2x1xf32>
    %798 = vector.broadcast %797 : vector<2x1xf32> to vector<2x64xf32>
    %799 = arith.mulf %792, %798 : vector<2x64xf32>
    %800 = math.log %797 : vector<2x1xf32>
    %801 = arith.subf %788, %800 : vector<2x1xf32>
    %c0_318 = arith.constant 0 : index
    %c60 = arith.constant 60 : index
    %c0_319 = arith.constant 0 : index
    %802 = vector.load %arg10[%c0_318, %c60, %c0_319] : memref<2x64x64xf32, #tpu.memory_space<vmem>>, vector<2x1x64xf32>
    %803 = vector.shape_cast %802 : vector<2x1x64xf32> to vector<2x64xf32>
    %cst_320 = arith.constant dense<0.000000e+00> : vector<2x64xf32>
    %804 = tpu.matmul %799, %19, %cst_320 {dimension_numbers = #tpu.dot_dimension_numbers<[1], [0], [0], [1], [0, 0, 1, 1], [], []>} : vector<2x64xf32>, vector<64x64xf32>, vector<2x64xf32> -> vector<2x64xf32>
    %805 = arith.mulf %804, %803 : vector<2x64xf32>
    %cst_321 = arith.constant dense<0.000000e+00> : vector<2xf32>
    %806 = vector.multi_reduction <add>, %805, %cst_321 [1] : vector<2x64xf32> to vector<2xf32>
    %807 = vector.shape_cast %806 : vector<2xf32> to vector<2x1xf32>
    %cst_322 = arith.constant 1.000000e-30 : f32
    %808 = vector.broadcast %cst_322 : f32 to vector<2x1xf32>
    %809 = arith.maximumf %807, %808 : vector<2x1xf32>
    %810 = tpu.reciprocal %809 {approx = true} : vector<2x1xf32> -> vector<2x1xf32>
    %811 = vector.broadcast %810 : vector<2x1xf32> to vector<2x64xf32>
    %812 = arith.mulf %805, %811 : vector<2x64xf32>
    %813 = math.log %810 : vector<2x1xf32>
    %814 = arith.subf %801, %813 : vector<2x1xf32>
    %c0_323 = arith.constant 0 : index
    %c61 = arith.constant 61 : index
    %c0_324 = arith.constant 0 : index
    %815 = vector.load %arg10[%c0_323, %c61, %c0_324] : memref<2x64x64xf32, #tpu.memory_space<vmem>>, vector<2x1x64xf32>
    %816 = vector.shape_cast %815 : vector<2x1x64xf32> to vector<2x64xf32>
    %cst_325 = arith.constant dense<0.000000e+00> : vector<2x64xf32>
    %817 = tpu.matmul %812, %19, %cst_325 {dimension_numbers = #tpu.dot_dimension_numbers<[1], [0], [0], [1], [0, 0, 1, 1], [], []>} : vector<2x64xf32>, vector<64x64xf32>, vector<2x64xf32> -> vector<2x64xf32>
    %818 = arith.mulf %817, %816 : vector<2x64xf32>
    %cst_326 = arith.constant dense<0.000000e+00> : vector<2xf32>
    %819 = vector.multi_reduction <add>, %818, %cst_326 [1] : vector<2x64xf32> to vector<2xf32>
    %820 = vector.shape_cast %819 : vector<2xf32> to vector<2x1xf32>
    %cst_327 = arith.constant 1.000000e-30 : f32
    %821 = vector.broadcast %cst_327 : f32 to vector<2x1xf32>
    %822 = arith.maximumf %820, %821 : vector<2x1xf32>
    %823 = tpu.reciprocal %822 {approx = true} : vector<2x1xf32> -> vector<2x1xf32>
    %824 = vector.broadcast %823 : vector<2x1xf32> to vector<2x64xf32>
    %825 = arith.mulf %818, %824 : vector<2x64xf32>
    %826 = math.log %823 : vector<2x1xf32>
    %827 = arith.subf %814, %826 : vector<2x1xf32>
    %c0_328 = arith.constant 0 : index
    %c62 = arith.constant 62 : index
    %c0_329 = arith.constant 0 : index
    %828 = vector.load %arg10[%c0_328, %c62, %c0_329] : memref<2x64x64xf32, #tpu.memory_space<vmem>>, vector<2x1x64xf32>
    %829 = vector.shape_cast %828 : vector<2x1x64xf32> to vector<2x64xf32>
    %cst_330 = arith.constant dense<0.000000e+00> : vector<2x64xf32>
    %830 = tpu.matmul %825, %19, %cst_330 {dimension_numbers = #tpu.dot_dimension_numbers<[1], [0], [0], [1], [0, 0, 1, 1], [], []>} : vector<2x64xf32>, vector<64x64xf32>, vector<2x64xf32> -> vector<2x64xf32>
    %831 = arith.mulf %830, %829 : vector<2x64xf32>
    %cst_331 = arith.constant dense<0.000000e+00> : vector<2xf32>
    %832 = vector.multi_reduction <add>, %831, %cst_331 [1] : vector<2x64xf32> to vector<2xf32>
    %833 = vector.shape_cast %832 : vector<2xf32> to vector<2x1xf32>
    %cst_332 = arith.constant 1.000000e-30 : f32
    %834 = vector.broadcast %cst_332 : f32 to vector<2x1xf32>
    %835 = arith.maximumf %833, %834 : vector<2x1xf32>
    %836 = tpu.reciprocal %835 {approx = true} : vector<2x1xf32> -> vector<2x1xf32>
    %837 = vector.broadcast %836 : vector<2x1xf32> to vector<2x64xf32>
    %838 = arith.mulf %831, %837 : vector<2x64xf32>
    %839 = math.log %836 : vector<2x1xf32>
    %840 = arith.subf %827, %839 : vector<2x1xf32>
    %c0_333 = arith.constant 0 : index
    %c63 = arith.constant 63 : index
    %c0_334 = arith.constant 0 : index
    %841 = vector.load %arg10[%c0_333, %c63, %c0_334] : memref<2x64x64xf32, #tpu.memory_space<vmem>>, vector<2x1x64xf32>
    %842 = vector.shape_cast %841 : vector<2x1x64xf32> to vector<2x64xf32>
    %cst_335 = arith.constant dense<0.000000e+00> : vector<2x64xf32>
    %843 = tpu.matmul %838, %19, %cst_335 {dimension_numbers = #tpu.dot_dimension_numbers<[1], [0], [0], [1], [0, 0, 1, 1], [], []>} : vector<2x64xf32>, vector<64x64xf32>, vector<2x64xf32> -> vector<2x64xf32>
    %844 = arith.mulf %843, %842 : vector<2x64xf32>
    %cst_336 = arith.constant dense<0.000000e+00> : vector<2xf32>
    %845 = vector.multi_reduction <add>, %844, %cst_336 [1] : vector<2x64xf32> to vector<2xf32>
    %846 = vector.shape_cast %845 : vector<2xf32> to vector<2x1xf32>
    %cst_337 = arith.constant 1.000000e-30 : f32
    %847 = vector.broadcast %cst_337 : f32 to vector<2x1xf32>
    %848 = arith.maximumf %846, %847 : vector<2x1xf32>
    %849 = tpu.reciprocal %848 {approx = true} : vector<2x1xf32> -> vector<2x1xf32>
    %850 = vector.broadcast %849 : vector<2x1xf32> to vector<2x64xf32>
    %851 = arith.mulf %844, %850 : vector<2x64xf32>
    %852 = math.log %849 : vector<2x1xf32>
    %853 = arith.subf %840, %852 : vector<2x1xf32>
    %c0_338 = arith.constant 0 : index
    %c0_339 = arith.constant 0 : index
    %854 = vector.load %arg8[%c0_338, %c0_339] : memref<2x64xf32, #tpu.memory_space<vmem>>, vector<2x64xf32>
    tpu.vector_store %arg8[%c0_338, %c0_339], %851 {strides = array<i32>} : memref<2x64xf32, #tpu.memory_space<vmem>>, vector<2x64xf32>,
    %c0_340 = arith.constant 0 : index
    %c0_341 = arith.constant 0 : index
    %855 = vector.load %arg9[%c0_340, %c0_341] : memref<2x1xf32, #tpu.memory_space<vmem>>, vector<2x1xf32>
    %856 = arith.addf %855, %853 : vector<2x1xf32>
    %857 = arith.addf %856, %18 : vector<2x1xf32>
    %c0_342 = arith.constant 0 : index
    %c0_343 = arith.constant 0 : index
    %858 = vector.load %arg9[%c0_342, %c0_343] : memref<2x1xf32, #tpu.memory_space<vmem>>, vector<2x1xf32>
    tpu.vector_store %arg9[%c0_342, %c0_343], %857 {strides = array<i32>} : memref<2x1xf32, #tpu.memory_space<vmem>>, vector<2x1xf32>,
    %c1_i32 = arith.constant 1 : i32
    %859 = arith.cmpi eq, %arg0, %c1_i32 : i32
    %860 = arith.extui %859 : i1 to i32
    %c0_i32_344 = arith.constant 0 : i32
    %861 = arith.cmpi ne, %860, %c0_i32_344 : i32
    scf.if %861 {
      %c0_345 = arith.constant 0 : index
      %c0_346 = arith.constant 0 : index
      %862 = vector.load %arg8[%c0_345, %c0_346] : memref<2x64xf32, #tpu.memory_space<vmem>>, vector<2x64xf32>
      %c0_347 = arith.constant 0 : index
      %c0_348 = arith.constant 0 : index
      %863 = vector.load %arg6[%c0_347, %c0_348] : memref<1x64xf32, #tpu.memory_space<vmem>>, vector<1x64xf32>
      %864 = vector.broadcast %863 : vector<1x64xf32> to vector<2x64xf32>
      %865 = arith.mulf %862, %864 : vector<2x64xf32>
      %cst_349 = arith.constant dense<0.000000e+00> : vector<2xf32>
      %866 = vector.multi_reduction <add>, %865, %cst_349 [1] : vector<2x64xf32> to vector<2xf32>
      %867 = vector.shape_cast %866 : vector<2xf32> to vector<2x1xf32>
      %c0_350 = arith.constant 0 : index
      %c0_351 = arith.constant 0 : index
      %868 = vector.load %arg9[%c0_350, %c0_351] : memref<2x1xf32, #tpu.memory_space<vmem>>, vector<2x1xf32>
      %869 = math.log %867 : vector<2x1xf32>
      %870 = arith.addf %868, %869 : vector<2x1xf32>
      %871 = vector.shape_cast %870 : vector<2x1xf32> to vector<1x2x1xf32>
      %cst_352 = arith.constant dense<0.000000e+00> : vector<1xf32>
      %872 = vector.multi_reduction <add>, %871, %cst_352 [1, 2] : vector<1x2x1xf32> to vector<1xf32>
      %873 = vector.shape_cast %872 : vector<1xf32> to vector<1x1x1xf32>
      %874 = vector.extract %873[0, 0, 0] : f32 from vector<1x1x1xf32>
      %cst_353 = arith.constant 0.000000e+00 : f32
      %875 = arith.subf %cst_353, %874 : f32
      %876 = vector.broadcast %875 : f32 to vector<1x1xf32>
      %c0_354 = arith.constant 0 : index
      %c0_355 = arith.constant 0 : index
      %877 = vector.load %arg7[%c0_354, %c0_355] : memref<1x1xf32, #tpu.memory_space<vmem>>, vector<1x1xf32>
      tpu.vector_store %arg7[%c0_354, %c0_355], %876 {strides = array<i32>} : memref<1x1xf32, #tpu.memory_space<vmem>>, vector<1x1xf32>,
    } else {
    }
    return
  }
  func.func @transform_0(%arg0: i32) -> (i32, i32, i32) {
    %c0_i32 = arith.constant 0 : i32
    %c0_i32_0 = arith.constant 0 : i32
    %c0_i32_1 = arith.constant 0 : i32
    return %c0_i32, %arg0, %c0_i32_0 : i32, i32, i32
  }
  func.func @transform_1(%arg0: i32) -> (i32, i32) {
    %c0_i32 = arith.constant 0 : i32
    %c0_i32_0 = arith.constant 0 : i32
    %c0_i32_1 = arith.constant 0 : i32
    return %c0_i32, %c0_i32_0 : i32, i32
  }
  func.func @transform_2(%arg0: i32) -> (i32, i32) {
    %c0_i32 = arith.constant 0 : i32
    %c0_i32_0 = arith.constant 0 : i32
    %c0_i32_1 = arith.constant 0 : i32
    return %c0_i32, %c0_i32_0 : i32, i32
  }
  func.func @transform_3(%arg0: i32) -> (i32, i32) {
    %c0_i32 = arith.constant 0 : i32
    %c0_i32_0 = arith.constant 0 : i32
    %c0_i32_1 = arith.constant 0 : i32
    return %c0_i32, %c0_i32_0 : i32, i32
  }
  func.func @transform_4(%arg0: i32) -> (i32, i32) {
    %c0_i32 = arith.constant 0 : i32
    %c0_i32_0 = arith.constant 0 : i32
    %c0_i32_1 = arith.constant 0 : i32
    return %c0_i32, %c0_i32_0 : i32, i32
  }
  func.func @transform_5(%arg0: i32) -> (i32, i32) {
    %c0_i32 = arith.constant 0 : i32
    %c0_i32_0 = arith.constant 0 : i32
    %c0_i32_1 = arith.constant 0 : i32
    return %c0_i32, %c0_i32_0 : i32, i32
  }
  func.func @transform_6(%arg0: i32) -> (i32, i32) {
    %c0_i32 = arith.constant 0 : i32
    %c0_i32_0 = arith.constant 0 : i32
    %c0_i32_1 = arith.constant 0 : i32
    return %c0_i32, %c0_i32_0 : i32, i32
  }
}

</mosaic_0001>

<llo_original>
// kernel: tpu_custom_call.1
$region0: #{tpu_custom_call.1}
  #allocation0 [shape = 'u32[]', space=smem, size = 0x4, offset = 0x4, fixed_abs, tag = 'smem constant byte address 0x4 - core index']
  #allocation1 [shape = 'u32[72,128]{1,0:T(1,128)}', space=vmem, size = 0x9000, scoped, tag = 'internal scratch']
  #allocation2 [shape = 'f32[2,64]{1,0:T(2,128)}', space=vmem, size = 0x400, scoped, tag = 'scratch operand']
  #allocation3 [shape = 'f32[2,1]{1,0:T(2,128)}', space=vmem, size = 0x400, scoped, tag = 'scratch operand']
  #allocation4 [shape = 'f32[2,64,64]{2,1,0:T(8,128)}', space=vmem, size = 0x10000, scoped, tag = 'scratch operand']
  %s0 = inlined_call_operand.vmem [shape: bf16[2,128,32], index: 0, kind: input, shape index: {}]
  %s1 = inlined_call_operand.vmem [shape: bf16[32,64], index: 1, kind: input, shape index: {}]
  %s2 = inlined_call_operand.vmem [shape: f32[1,64], index: 2, kind: input, shape index: {}]
  %s3 = inlined_call_operand.vmem [shape: f32[64,64], index: 3, kind: input, shape index: {}]
  %s4 = inlined_call_operand.vmem [shape: f32[1,64], index: 4, kind: input, shape index: {}]
  %s5 = inlined_call_operand.vmem [shape: f32[1,64], index: 5, kind: input, shape index: {}]
  %s6 = inlined_call_operand.hbm [shape: f32[1,1], index: 6, kind: output, shape index: {}]
  %s7 = sld [smem:[#allocation0]]
  $region106: #{tpu_custom_call.1} parent=0
    _
  %s9 = ssub.s32 1, %s7
  %s10 = scalar_select 0, %s9, %s7
  $region1: #{tpu_custom_call.1} parent=0
    #allocation5 [shape = 'u8[65536]{0}', space=vmem, size = 0x10000, scoped, tag = 'input window, operand 0']
    #allocation6 [shape = 'u8[512]{0}', space=vmem, size = 0x400, scoped, tag = 'output window, operand 0, single buffered']
    #allocation7 [shape = 's32[2]{0}', space=sflag, size = 0x8, scoped, tag = 'scoped memory for tpu_custom_call.1']
    %11 = vsyncpa [#allocation7], 0
    loop: start=0, step=1, limit=4
    $region2: #{tpu_custom_call.1} parent=1 // loop_pre_header
      _
    $region3: #{tpu_custom_call.1} parent=1 // loop_header
      %s13 = sphi 0, %s17
      %p14 = scmp.ge.s32.totalorder %s13, 4
      %s23 = sphi 0, %s25
      %s26 = sphi 0, %s23
      %s27 = sphi 0, %s26
      %s43 = sphi 0, %s27
      %s47 = sphi 0, %s47
      %s49 = sphi 0, %s47
      %s50 = sphi 0, %s49
      %s64 = sphi 0, %s50
      %s68 = sphi 0, %s68
      %s70 = sphi 0, %s68
      %s71 = sphi 0, %s70
      %s85 = sphi 0, %s71
      %s89 = sphi 0, %s89
      %s91 = sphi 0, %s89
      %s92 = sphi 0, %s91
      %s106 = sphi 0, %s92
      %s110 = sphi 0, %s110
      %s112 = sphi 0, %s110
      %s113 = sphi 0, %s112
      %s127 = sphi 0, %s113
      %s131 = sphi 0, %s131
      %s133 = sphi 0, %s131
      %s134 = sphi 0, %s133
      %s148 = sphi 0, %s134
      %s152 = sphi 0, %s152
      %s154 = sphi 0, %s152
      %s155 = sphi 0, %s154
      %s169 = sphi 0, %s155
    $region4: #{tpu_custom_call.1} parent=1 // loop_header_branch
      %16 = sbr.rel (%p14) target = $region8
    $region5: #{tpu_custom_call.1} parent=1 // loop_body
      %s18 = ssub.s32 %s13, 1
      %s19 = ssub.s32 %s13, 2
      %s20 = sadd.s32 %s13, 1
      %s21 = ssub.s32 %s13, %s20
      %p22 = scmp.eq.s32.totalorder %s21, 0
      %s24 = sadd.s32 %s23, 1
      %s25 = scalar_select %p22, %s23, %s24
      %p28 = pneg %p22
      %p29 = scmp.eq.s32.totalorder %s13, 1
      %p30 = por %p28, %p29
      %p31 = scmp.ne.s32.totalorder %s23, %s26
      %p32 = scmp.eq.s32.totalorder %s13, 0
      %p33 = por %p31, %p32
      %p34 = scmp.ne.s32.totalorder %s23, %s26
      %p35 = scmp.eq.s32.totalorder %s18, 1
      %p36 = por %p34, %p35
      %p37 = scmp.ne.s32.totalorder %s26, %s27
      %p38 = scmp.eq.s32.totalorder %s18, 0
      %p39 = por %p37, %p38
      %p40 = scmp.ne.s32.totalorder %s26, %s27
      %p41 = scmp.eq.s32.totalorder %s19, 1
      %p42 = por %p40, %p41
      %p44 = scmp.ne.s32.totalorder %s27, %s43
      %p45 = scmp.eq.s32.totalorder %s19, 0
      %p46 = por %p44, %p45
      %s48 = sadd.s32 %s47, 1
      %p51 = scmp.eq.s32.totalorder %s13, 1
      %p52 = scmp.ne.s32.totalorder %s47, %s49
      %p53 = scmp.eq.s32.totalorder %s13, 0
      %p54 = por %p52, %p53
      %p55 = scmp.ne.s32.totalorder %s47, %s49
      %p56 = scmp.eq.s32.totalorder %s18, 1
      %p57 = por %p55, %p56
      %p58 = scmp.ne.s32.totalorder %s49, %s50
      %p59 = scmp.eq.s32.totalorder %s18, 0
      %p60 = por %p58, %p59
      %p61 = scmp.ne.s32.totalorder %s49, %s50
      %p62 = scmp.eq.s32.totalorder %s19, 1
      %p63 = por %p61, %p62
      %p65 = scmp.ne.s32.totalorder %s50, %s64
      %p66 = scmp.eq.s32.totalorder %s19, 0
      %p67 = por %p65, %p66
      %s69 = sadd.s32 %s68, 1
      %p72 = scmp.eq.s32.totalorder %s13, 1
      %p73 = scmp.ne.s32.totalorder %s68, %s70
      %p74 = scmp.eq.s32.totalorder %s13, 0
      %p75 = por %p73, %p74
      %p76 = scmp.ne.s32.totalorder %s68, %s70
      %p77 = scmp.eq.s32.totalorder %s18, 1
      %p78 = por %p76, %p77
      %p79 = scmp.ne.s32.totalorder %s70, %s71
      %p80 = scmp.eq.s32.totalorder %s18, 0
      %p81 = por %p79, %p80
      %p82 = scmp.ne.s32.totalorder %s70, %s71
      %p83 = scmp.eq.s32.totalorder %s19, 1
      %p84 = por %p82, %p83
      %p86 = scmp.ne.s32.totalorder %s71, %s85
      %p87 = scmp.eq.s32.totalorder %s19, 0
      %p88 = por %p86, %p87
      %s90 = sadd.s32 %s89, 1
      %p93 = scmp.eq.s32.totalorder %s13, 1
      %p94 = scmp.ne.s32.totalorder %s89, %s91
      %p95 = scmp.eq.s32.totalorder %s13, 0
      %p96 = por %p94, %p95
      %p97 = scmp.ne.s32.totalorder %s89, %s91
      %p98 = scmp.eq.s32.totalorder %s18, 1
      %p99 = por %p97, %p98
      %p100 = scmp.ne.s32.totalorder %s91, %s92
      %p101 = scmp.eq.s32.totalorder %s18, 0
      %p102 = por %p100, %p101
      %p103 = scmp.ne.s32.totalorder %s91, %s92
      %p104 = scmp.eq.s32.totalorder %s19, 1
      %p105 = por %p103, %p104
      %p107 = scmp.ne.s32.totalorder %s92, %s106
      %p108 = scmp.eq.s32.totalorder %s19, 0
      %p109 = por %p107, %p108
      %s111 = sadd.s32 %s110, 1
      %p114 = scmp.eq.s32.totalorder %s13, 1
      %p115 = scmp.ne.s32.totalorder %s110, %s112
      %p116 = scmp.eq.s32.totalorder %s13, 0
      %p117 = por %p115, %p116
      %p118 = scmp.ne.s32.totalorder %s110, %s112
      %p119 = scmp.eq.s32.totalorder %s18, 1
      %p120 = por %p118, %p119
      %p121 = scmp.ne.s32.totalorder %s112, %s113
      %p122 = scmp.eq.s32.totalorder %s18, 0
      %p123 = por %p121, %p122
      %p124 = scmp.ne.s32.totalorder %s112, %s113
      %p125 = scmp.eq.s32.totalorder %s19, 1
      %p126 = por %p124, %p125
      %p128 = scmp.ne.s32.totalorder %s113, %s127
      %p129 = scmp.eq.s32.totalorder %s19, 0
      %p130 = por %p128, %p129
      %s132 = sadd.s32 %s131, 1
      %p135 = scmp.eq.s32.totalorder %s13, 1
      %p136 = scmp.ne.s32.totalorder %s131, %s133
      %p137 = scmp.eq.s32.totalorder %s13, 0
      %p138 = por %p136, %p137
      %p139 = scmp.ne.s32.totalorder %s131, %s133
      %p140 = scmp.eq.s32.totalorder %s18, 1
      %p141 = por %p139, %p140
      %p142 = scmp.ne.s32.totalorder %s133, %s134
      %p143 = scmp.eq.s32.totalorder %s18, 0
      %p144 = por %p142, %p143
      %p145 = scmp.ne.s32.totalorder %s133, %s134
      %p146 = scmp.eq.s32.totalorder %s19, 1
      %p147 = por %p145, %p146
      %p149 = scmp.ne.s32.totalorder %s134, %s148
      %p150 = scmp.eq.s32.totalorder %s19, 0
      %p151 = por %p149, %p150
      %s153 = sadd.s32 %s152, 1
      %p156 = scmp.eq.s32.totalorder %s13, 1
      %p157 = scmp.ne.s32.totalorder %s152, %s154
      %p158 = scmp.eq.s32.totalorder %s13, 0
      %p159 = por %p157, %p158
      %p160 = scmp.ne.s32.totalorder %s152, %s154
      %p161 = scmp.eq.s32.totalorder %s18, 1
      %p162 = por %p160, %p161
      %p163 = scmp.ne.s32.totalorder %s154, %s155
      %p164 = scmp.eq.s32.totalorder %s18, 0
      %p165 = por %p163, %p164
      %p166 = scmp.ne.s32.totalorder %s154, %s155
      %p167 = scmp.eq.s32.totalorder %s19, 1
      %p168 = por %p166, %p167
      %p170 = scmp.ne.s32.totalorder %s155, %s169
      %p171 = scmp.eq.s32.totalorder %s19, 0
      %p172 = por %p170, %p171
      %p173 = scmp.le.s32.totalorder 1, %s13
      %p174 = scmp.lt.s32.totalorder %s13, 3
      %p175 = pnand %p173, %p174
      %p176 = pneg %p175
      // Predicated region
      $region9: #{tpu_custom_call.1} parent=5 // pred_check
        _
      $region10: #{tpu_custom_call.1} parent=5 // pred_check_branch
        %178 = sbr.rel (%p175) target = $region12
      $region11: #{tpu_custom_call.1} parent=5 // pred_region
        %s179 = ssub.s32 %s13, 1
        // Predicated region
        $region13: #{tpu_custom_call.1} parent=11 // pred_check
          %p180 = pneg %p60
        $region14: #{tpu_custom_call.1} parent=11 // pred_check_branch
          %182 = sbr.rel (%p180) target = $region16
        $region15: #{tpu_custom_call.1} parent=11 // pred_region
          _
        $region16: #{tpu_custom_call.1} parent=11 // pred_fallthru
          _
        // Predicated region
        $region17: #{tpu_custom_call.1} parent=11 // pred_check
          %p183 = pneg %p81
        $region18: #{tpu_custom_call.1} parent=11 // pred_check_branch
          %185 = sbr.rel (%p183) target = $region20
        $region19: #{tpu_custom_call.1} parent=11 // pred_region
          _
        $region20: #{tpu_custom_call.1} parent=11 // pred_fallthru
          _
        // Predicated region
        $region21: #{tpu_custom_call.1} parent=11 // pred_check
          %p186 = pneg %p102
        $region22: #{tpu_custom_call.1} parent=11 // pred_check_branch
          %188 = sbr.rel (%p186) target = $region24
        $region23: #{tpu_custom_call.1} parent=11 // pred_region
          _
        $region24: #{tpu_custom_call.1} parent=11 // pred_fallthru
          _
        // Predicated region
        $region25: #{tpu_custom_call.1} parent=11 // pred_check
          %p189 = pneg %p123
        $region26: #{tpu_custom_call.1} parent=11 // pred_check_branch
          %191 = sbr.rel (%p189) target = $region28
        $region27: #{tpu_custom_call.1} parent=11 // pred_region
          _
        $region28: #{tpu_custom_call.1} parent=11 // pred_fallthru
          _
        // Predicated region
        $region29: #{tpu_custom_call.1} parent=11 // pred_check
          %p192 = pneg %p144
        $region30: #{tpu_custom_call.1} parent=11 // pred_check_branch
          %194 = sbr.rel (%p192) target = $region32
        $region31: #{tpu_custom_call.1} parent=11 // pred_region
          _
        $region32: #{tpu_custom_call.1} parent=11 // pred_fallthru
          _
      $region12: #{tpu_custom_call.1} parent=5 // pred_fallthru
        _
      %p195 = scmp.lt.s32.totalorder %s13, 2
      // Predicated region
      $region33: #{tpu_custom_call.1} parent=5 // pred_check
        %p196 = pneg %p195
      $region34: #{tpu_custom_call.1} parent=5 // pred_check_branch
        %198 = sbr.rel (%p196) target = $region36
      $region35: #{tpu_custom_call.1} parent=5 // pred_region
        // Predicated region
        $region37: #{tpu_custom_call.1} parent=35 // pred_check
          %p199 = pneg %p33
        $region38: #{tpu_custom_call.1} parent=35 // pred_check_branch
          %201 = sbr.rel (%p199) target = $region40
        $region39: #{tpu_custom_call.1} parent=35 // pred_region
          %s202 = sand.u32 %s23, 1
          %s203 = sand.u32 %s23, 1
          %s204 = smul.addr %s203, 64
          %s205 = scalar_lea.vmem [#allocation5], %s204
          %s206 = smul.u32 8, %s13
          %s207 = smul.addr %s206, 4
          %s208 = scalar_lea.vmem %s0, %s207
          // Predicated region
          $region41: #{tpu_custom_call.1} parent=39 // pred_check
            _
          $region42: #{tpu_custom_call.1} parent=39 // pred_check_branch
            %210 = sbr.rel (0) target = $region44
          $region43: #{tpu_custom_call.1} parent=39 // pred_region
            // Predicated region
            $region45: #{tpu_custom_call.1} parent=43 // pred_check
              _
            $region46: #{tpu_custom_call.1} parent=43 // pred_check_branch
              %212 = sbr.rel target = $region48
            $region47: #{tpu_custom_call.1} parent=43 // pred_region
              // Predicated region
              $region60: #{tpu_custom_call.1} parent=47 // pred_check
                _
              $region61: #{tpu_custom_call.1} parent=47 // pred_check_branch
                %258 = sbr.rel (0) target = $region63
              $region62: #{tpu_custom_call.1} parent=47 // pred_region
                loop: start=0, step=1, limit=1
                $region64: #{tpu_custom_call.1} parent=62 // loop_pre_header
                  _
                $region65: #{tpu_custom_call.1} parent=62 // loop_header
                  %s260 = sphi 0, %s264
                  %p261 = scmp.ge.s32.totalorder %s260, 1
                  %s265 = sphi %s208, %s208
                  %s266 = sphi %s205, %s205
                $region66: #{tpu_custom_call.1} parent=62 // loop_header_branch
                  %263 = sbr.rel (%p261) target = $region70
                $region67: #{tpu_custom_call.1} parent=62 // loop_body
                  _
                $region68: #{tpu_custom_call.1} parent=62 // loop_footer
                  %s264 = sadd.s32 1, %s260
                $region69: #{tpu_custom_call.1} parent=62 // loop_footer_branch
                  %259 = sbr.rel target = $region65
                $region70: #{tpu_custom_call.1} parent=62 // loop_exit
                  _
                %s268 = ssub.s32 16, 1
                loop: start=0, step=1, limit=1
                $region71: #{tpu_custom_call.1} parent=62 // loop_pre_header
                  _
                $region72: #{tpu_custom_call.1} parent=62 // loop_header
                  %s270 = sphi 0, %s274
                  %p271 = scmp.ge.s32.totalorder %s270, 1
                  %s275 = sphi %s208, %s208
                  %s276 = sphi %s205, %s205
                $region73: #{tpu_custom_call.1} parent=62 // loop_header_branch
                  %273 = sbr.rel (%p271) target = $region77
                $region74: #{tpu_custom_call.1} parent=62 // loop_body
                  %v277 = vld [vmem:[%s275] sm:%s268]
                  %278 = vst [vmem:[%s276] sm:%s268] %v277
                  %v279 = vld [vmem:[%s275 + $0x4] sm:%s268]
                  %280 = vst [vmem:[%s276 + $0x4] sm:%s268] %v279
                  %v281 = vld [vmem:[%s275 + $0x8] sm:%s268]
                  %282 = vst [vmem:[%s276 + $0x8] sm:%s268] %v281
                  %v283 = vld [vmem:[%s275 + $0xc] sm:%s268]
                  %284 = vst [vmem:[%s276 + $0xc] sm:%s268] %v283
                  %v285 = vld [vmem:[%s275 + $0x10] sm:%s268]
                  %286 = vst [vmem:[%s276 + $0x10] sm:%s268] %v285
                  %v287 = vld [vmem:[%s275 + $0x14] sm:%s268]
                  %288 = vst [vmem:[%s276 + $0x14] sm:%s268] %v287
                  %v289 = vld [vmem:[%s275 + $0x18] sm:%s268]
                  %290 = vst [vmem:[%s276 + $0x18] sm:%s268] %v289
                  %v291 = vld [vmem:[%s275 + $0x1c] sm:%s268]
                  %292 = vst [vmem:[%s276 + $0x1c] sm:%s268] %v291
                  %v293 = vld [vmem:[%s275 + $0x40] sm:%s268]
                  %294 = vst [vmem:[%s276 + $0x20] sm:%s268] %v293
                  %v295 = vld [vmem:[%s275 + $0x44] sm:%s268]
                  %296 = vst [vmem:[%s276 + $0x24] sm:%s268] %v295
                  %v297 = vld [vmem:[%s275 + $0x48] sm:%s268]
                  %298 = vst [vmem:[%s276 + $0x28] sm:%s268] %v297
                  %v299 = vld [vmem:[%s275 + $0x4c] sm:%s268]
                  %300 = vst [vmem:[%s276 + $0x2c] sm:%s268] %v299
                  %v301 = vld [vmem:[%s275 + $0x50] sm:%s268]
                  %302 = vst [vmem:[%s276 + $0x30] sm:%s268] %v301
                  %v303 = vld [vmem:[%s275 + $0x54] sm:%s268]
                  %304 = vst [vmem:[%s276 + $0x34] sm:%s268] %v303
                  %v305 = vld [vmem:[%s275 + $0x58] sm:%s268]
                  %306 = vst [vmem:[%s276 + $0x38] sm:%s268] %v305
                  %v307 = vld [vmem:[%s275 + $0x5c] sm:%s268]
                  %308 = vst [vmem:[%s276 + $0x3c] sm:%s268] %v307
                $region75: #{tpu_custom_call.1} parent=62 // loop_footer
                  %s274 = sadd.s32 1, %s270
                $region76: #{tpu_custom_call.1} parent=62 // loop_footer_branch
                  %269 = sbr.rel target = $region72
                $region77: #{tpu_custom_call.1} parent=62 // loop_exit
                  _
              $region63: #{tpu_custom_call.1} parent=47 // pred_fallthru
                _
            $region48: #{tpu_custom_call.1} parent=43 // pred_fallthru
              _
            // Predicated region
            $region49: #{tpu_custom_call.1} parent=43 // pred_check
              _
            $region50: #{tpu_custom_call.1} parent=43 // pred_check_branch
              %214 = sbr.rel (0) target = $region52
            $region51: #{tpu_custom_call.1} parent=43 // pred_region
              %s216 = ssub.s32 16, 1
              loop: start=0, step=1, limit=1
              $region53: #{tpu_custom_call.1} parent=51 // loop_pre_header
                _
              $region54: #{tpu_custom_call.1} parent=51 // loop_header
                %s218 = sphi 0, %s222
                %p219 = scmp.ge.s32.totalorder %s218, 1
                %s223 = sphi %s208, %s208
                %s224 = sphi %s205, %s205
              $region55: #{tpu_custom_call.1} parent=51 // loop_header_branch
                %221 = sbr.rel (%p219) target = $region59
              $region56: #{tpu_custom_call.1} parent=51 // loop_body
                %v225 = vld [vmem:[%s223] sm:%s216]
                %226 = vst [vmem:[%s224] sm:%s216] %v225
                %v227 = vld [vmem:[%s223 + $0x4] sm:%s216]
                %228 = vst [vmem:[%s224 + $0x4] sm:%s216] %v227
                %v229 = vld [vmem:[%s223 + $0x8] sm:%s216]
                %230 = vst [vmem:[%s224 + $0x8] sm:%s216] %v229
                %v231 = vld [vmem:[%s223 + $0xc] sm:%s216]
                %232 = vst [vmem:[%s224 + $0xc] sm:%s216] %v231
                %v233 = vld [vmem:[%s223 + $0x10] sm:%s216]
                %234 = vst [vmem:[%s224 + $0x10] sm:%s216] %v233
                %v235 = vld [vmem:[%s223 + $0x14] sm:%s216]
                %236 = vst [vmem:[%s224 + $0x14] sm:%s216] %v235
                %v237 = vld [vmem:[%s223 + $0x18] sm:%s216]
                %238 = vst [vmem:[%s224 + $0x18] sm:%s216] %v237
                %v239 = vld [vmem:[%s223 + $0x1c] sm:%s216]
                %240 = vst [vmem:[%s224 + $0x1c] sm:%s216] %v239
                %v241 = vld [vmem:[%s223 + $0x40] sm:%s216]
                %242 = vst [vmem:[%s224 + $0x20] sm:%s216] %v241
                %v243 = vld [vmem:[%s223 + $0x44] sm:%s216]
                %244 = vst [vmem:[%s224 + $0x24] sm:%s216] %v243
                %v245 = vld [vmem:[%s223 + $0x48] sm:%s216]
                %246 = vst [vmem:[%s224 + $0x28] sm:%s216] %v245
                %v247 = vld [vmem:[%s223 + $0x4c] sm:%s216]
                %248 = vst [vmem:[%s224 + $0x2c] sm:%s216] %v247
                %v249 = vld [vmem:[%s223 + $0x50] sm:%s216]
                %250 = vst [vmem:[%s224 + $0x30] sm:%s216] %v249
                %v251 = vld [vmem:[%s223 + $0x54] sm:%s216]
                %252 = vst [vmem:[%s224 + $0x34] sm:%s216] %v251
                %v253 = vld [vmem:[%s223 + $0x58] sm:%s216]
                %254 = vst [vmem:[%s224 + $0x38] sm:%s216] %v253
                %v255 = vld [vmem:[%s223 + $0x5c] sm:%s216]
                %256 = vst [vmem:[%s224 + $0x3c] sm:%s216] %v255
              $region57: #{tpu_custom_call.1} parent=51 // loop_footer
                %s222 = sadd.s32 1, %s218
              $region58: #{tpu_custom_call.1} parent=51 // loop_footer_branch
                %217 = sbr.rel target = $region54
              $region59: #{tpu_custom_call.1} parent=51 // loop_exit
                _
            $region52: #{tpu_custom_call.1} parent=43 // pred_fallthru
              _
          $region44: #{tpu_custom_call.1} parent=39 // pred_fallthru
            _
          %309 = vnop
        $region40: #{tpu_custom_call.1} parent=35 // pred_fallthru
          _
      $region36: #{tpu_custom_call.1} parent=5 // pred_fallthru
        _
      %p310 = scmp.le.s32.totalorder 1, %s13
      %p311 = scmp.lt.s32.totalorder %s13, 3
      %p312 = pnand %p310, %p311
      %p313 = pneg %p312
      // Predicated region
      $region78: #{tpu_custom_call.1} parent=5 // pred_check
        _
      $region79: #{tpu_custom_call.1} parent=5 // pred_check_branch
        %315 = sbr.rel (%p312) target = $region81
      $region80: #{tpu_custom_call.1} parent=5 // pred_region
        %s316 = ssub.s32 %s13, 1
        %s317 = sand.u32 %s26, 1
        %s318 = sand.u32 %s26, 1
        %s319 = smul.addr %s318, 64
        %s320 = scalar_lea.vmem [#allocation5], %s319
        // Predicated region
        $region82: #{tpu_custom_call.1} parent=80 // pred_check
          %p321 = pneg %p39
        $region83: #{tpu_custom_call.1} parent=80 // pred_check_branch
          %323 = sbr.rel (%p321) target = $region85
        $region84: #{tpu_custom_call.1} parent=80 // pred_region
          _
        $region85: #{tpu_custom_call.1} parent=80 // pred_fallthru
          _
        %s324 = sand.u32 %s26, 1
        %s325 = sand.u32 %s26, 1
        %s326 = smul.addr %s325, 64
        %s327 = scalar_lea.vmem [#allocation5], %s326
        %p328 = pneg %p39
        %p329 = pneg %p36
        %p330 = pneg %p60
        %p331 = pneg %p57
        %p332 = pneg %p81
        %p333 = pneg %p78
        %p334 = pneg %p102
        %p335 = pneg %p99
        %p336 = pneg %p123
        %p337 = pneg %p120
        %p338 = pneg %p144
        %p339 = pneg %p141
        %p340 = pneg %p165
        %p341 = pneg %p162
        %s342 = smul.u32 8, %s18
        %p344 = scmp.eq.s32.totalorder %s18, 0
        // Predicated region
        $region86: #{tpu_custom_call.1} parent=80 // pred_check
          %p345 = pneg %p344
        $region87: #{tpu_custom_call.1} parent=80 // pred_check_branch
          %347 = sbr.rel (%p345) target = $region89
        $region88: #{tpu_custom_call.1} parent=80 // pred_region
          %v348 = vld [vmem:[%s4] sm:$0x1]
          %v350 = vperm.slane %v348, 0
          %vm352 = vcmask 517120
          %353 = vst.msk [vmem:[#allocation2] sm:$0x3] %vm352, %v350
          %vm354 = vcmask 1024
          %355 = vst.msk [vmem:[#allocation3] sm:$0x3] %vm354, 0.0
        $region89: #{tpu_custom_call.1} parent=80 // pred_fallthru
          _
        %v356 = vld [vmem:[%s320] sm:$0xf]
        %v357 = vld [vmem:[%s320 + $0x4] sm:$0xf]
        %v358 = vld [vmem:[%s320 + $0x8] sm:$0xf]
        %v359 = vld [vmem:[%s320 + $0xc] sm:$0xf]
        %v360 = vld [vmem:[%s320 + $0x10] sm:$0xf]
        %v361 = vld [vmem:[%s320 + $0x14] sm:$0xf]
        %v362 = vld [vmem:[%s320 + $0x18] sm:$0xf]
        %v363 = vld [vmem:[%s320 + $0x1c] sm:$0xf]
        %v364 = vld [vmem:[%s320 + $0x20] sm:$0xf]
        %v365 = vld [vmem:[%s320 + $0x24] sm:$0xf]
        %v366 = vld [vmem:[%s320 + $0x28] sm:$0xf]
        %v367 = vld [vmem:[%s320 + $0x2c] sm:$0xf]
        %v368 = vld [vmem:[%s320 + $0x30] sm:$0xf]
        %v369 = vld [vmem:[%s320 + $0x34] sm:$0xf]
        %v370 = vld [vmem:[%s320 + $0x38] sm:$0xf]
        %v371 = vld [vmem:[%s320 + $0x3c] sm:$0xf]
        %v372 = vld [vmem:[%s1] sm:$0xf]
        %v373 = vld [vmem:[%s1 + $0x4] sm:$0xf]
        %v374 = vld [vmem:[%s1 + $0x8] sm:$0xf]
        %v375 = vld [vmem:[%s1 + $0xc] sm:$0xf]
        %v376 = vld [vmem:[%s2] sm:$0x1]
        %v378 = vperm.slane %v376, 0
        %v396 = vunpack.c.l.b16 %v356
        %v397 = vunpack.c.l.b16 %v357
        %v398 = vunpack.c.l.b16 %v358
        %v399 = vunpack.c.l.b16 %v359
        %v400 = vunpack.c.l.b16 %v360
        %v401 = vunpack.c.l.b16 %v361
        %v402 = vunpack.c.l.b16 %v362
        %v403 = vunpack.c.l.b16 %v363
        %v404 = vunpack.c.l.b16 %v364
        %v405 = vunpack.c.l.b16 %v365
        %v406 = vunpack.c.l.b16 %v366
        %v407 = vunpack.c.l.b16 %v367
        %v408 = vunpack.c.l.b16 %v368
        %v409 = vunpack.c.l.b16 %v369
        %v410 = vunpack.c.l.b16 %v370
        %v411 = vunpack.c.l.b16 %v371
        %v412 = vpack.c.b16 %v397, %v396
        %v413 = vpack.c.b16 %v399, %v398
        %v414 = vpack.c.b16 %v401, %v400
        %v415 = vpack.c.b16 %v403, %v402
        %v416 = vpack.c.b16 %v405, %v404
        %v417 = vpack.c.b16 %v407, %v406
        %v418 = vpack.c.b16 %v409, %v408
        %v419 = vpack.c.b16 %v411, %v410
        %v424 = vunpack.c.l.b16 %v372
        %v425 = vunpack.c.l.b16 %v373
        %v426 = vunpack.c.l.b16 %v374
        %v427 = vunpack.c.l.b16 %v375
        %v428 = vpack.c.b16 %v425, %v424
        %v429 = vpack.c.b16 %v427, %v426
        %vm432 = vcmask 261120
        %v434 = vsel %vm432, %v412, 0
        %v437 = vsel %vm432, %v413, 0
        %v440 = vsel %vm432, %v414, 0
        %v443 = vsel %vm432, %v415, 0
        %v446 = vsel %vm432, %v416, 0
        %v449 = vsel %vm432, %v417, 0
        %v452 = vsel %vm432, %v418, 0
        %v455 = vsel %vm432, %v419, 0
        %457 = vmatpush.bf16.msra.mxu0 0
        %458 = vmatpush.bf16.msra.mxu0 0
        %459 = vmatpush.bf16.msra.mxu0 0
        %460 = vmatpush.bf16.msra.mxu0 0
        %461 = vmatpush.bf16.msra.mxu0 0
        %462 = vmatpush.bf16.msra.mxu0 0
        %463 = vmatpush.bf16.msra.mxu0 %v429
        %464 = vmatpush.bf16.msra.mxu0 %v428
        %465 = vmatmul.bf16.gmra.mxu0 %v434
        %v466 = vpop.f32.mrf.mxu0
        %v467 = vadd.f32 %v378, %v466
        %v468 = vpop.f32.mrf.mxu0
        %v469 = vadd.f32 %v378, %v468
        %470 = vmatmul.bf16.gmra.mxu0 %v437
        %v471 = vpop.f32.mrf.mxu0
        %v472 = vadd.f32 %v378, %v471
        %v473 = vpop.f32.mrf.mxu0
        %v474 = vadd.f32 %v378, %v473
        %475 = vmatmul.bf16.gmra.mxu0 %v440
        %v476 = vpop.f32.mrf.mxu0
        %v477 = vadd.f32 %v378, %v476
        %v478 = vpop.f32.mrf.mxu0
        %v479 = vadd.f32 %v378, %v478
        %480 = vmatmul.bf16.gmra.mxu0 %v443
        %v481 = vpop.f32.mrf.mxu0
        %v482 = vadd.f32 %v378, %v481
        %v483 = vpop.f32.mrf.mxu0
        %v484 = vadd.f32 %v378, %v483
        %485 = vmatmul.bf16.gmra.mxu0 %v446
        %v486 = vpop.f32.mrf.mxu0
        %v487 = vadd.f32 %v378, %v486
        %v488 = vpop.f32.mrf.mxu0
        %v489 = vadd.f32 %v378, %v488
        %490 = vmatmul.bf16.gmra.mxu0 %v449
        %v491 = vpop.f32.mrf.mxu0
        %v492 = vadd.f32 %v378, %v491
        %v493 = vpop.f32.mrf.mxu0
        %v494 = vadd.f32 %v378, %v493
        %495 = vmatmul.bf16.gmra.mxu0 %v452
        %v496 = vpop.f32.mrf.mxu0
        %v497 = vadd.f32 %v378, %v496
        %v498 = vpop.f32.mrf.mxu0
        %v499 = vadd.f32 %v378, %v498
        %500 = vmatmul.bf16.gmra.mxu0 %v455
        %v501 = vpop.f32.mrf.mxu0
        %v502 = vadd.f32 %v378, %v501
        %v503 = vpop.f32.mrf.mxu0
        %v504 = vadd.f32 %v378, %v503
        %505 = vdwg.mxu0
        %vm506 = vcmask 523264
        %v507 = vsel %vm506, %v467, -inf
        %508 = vmax.xlane.f32.xlu0 %v507
        %v509 = vpop.xlane.xlu0 %508
        %v510 = vsel %vm506, %v469, -inf
        %511 = vmax.xlane.f32.xlu0 %v510
        %v512 = vpop.xlane.xlu0 %511
        %v513 = vsel %vm506, %v472, -inf
        %514 = vmax.xlane.f32.xlu0 %v513
        %v515 = vpop.xlane.xlu0 %514
        %v516 = vsel %vm506, %v474, -inf
        %517 = vmax.xlane.f32.xlu0 %v516
        %v518 = vpop.xlane.xlu0 %517
        %v519 = vsel %vm506, %v477, -inf
        %520 = vmax.xlane.f32.xlu0 %v519
        %v521 = vpop.xlane.xlu0 %520
        %v522 = vsel %vm506, %v479, -inf
        %523 = vmax.xlane.f32.xlu0 %v522
        %v524 = vpop.xlane.xlu0 %523
        %v525 = vsel %vm506, %v482, -inf
        %526 = vmax.xlane.f32.xlu0 %v525
        %v527 = vpop.xlane.xlu0 %526
        %v528 = vsel %vm506, %v484, -inf
        %529 = vmax.xlane.f32.xlu0 %v528
        %v530 = vpop.xlane.xlu0 %529
        %v531 = vsel %vm506, %v487, -inf
        %532 = vmax.xlane.f32.xlu0 %v531
        %v533 = vpop.xlane.xlu0 %532
        %v534 = vsel %vm506, %v489, -inf
        %535 = vmax.xlane.f32.xlu0 %v534
        %v536 = vpop.xlane.xlu0 %535
        %v537 = vsel %vm506, %v492, -inf
        %538 = vmax.xlane.f32.xlu0 %v537
        %v539 = vpop.xlane.xlu0 %538
        %v540 = vsel %vm506, %v494, -inf
        %541 = vmax.xlane.f32.xlu0 %v540
        %v542 = vpop.xlane.xlu0 %541
        %v543 = vsel %vm506, %v497, -inf
        %544 = vmax.xlane.f32.xlu0 %v543
        %v545 = vpop.xlane.xlu0 %544
        %v546 = vsel %vm506, %v499, -inf
        %547 = vmax.xlane.f32.xlu0 %v546
        %v548 = vpop.xlane.xlu0 %547
        %v549 = vsel %vm506, %v502, -inf
        %550 = vmax.xlane.f32.xlu0 %v549
        %v551 = vpop.xlane.xlu0 %550
        %v552 = vsel %vm506, %v504, -inf
        %553 = vmax.xlane.f32.xlu0 %v552
        %v554 = vpop.xlane.xlu0 %553
        %v555 = vsub.f32 %v467, %v509
        %v556 = vsub.f32 %v469, %v512
        %v557 = vsub.f32 %v472, %v515
        %v558 = vsub.f32 %v474, %v518
        %v559 = vsub.f32 %v477, %v521
        %v560 = vsub.f32 %v479, %v524
        %v561 = vsub.f32 %v482, %v527
        %v562 = vsub.f32 %v484, %v530
        %v563 = vsub.f32 %v487, %v533
        %v564 = vsub.f32 %v489, %v536
        %v565 = vsub.f32 %v492, %v539
        %v566 = vsub.f32 %v494, %v542
        %v567 = vsub.f32 %v497, %v545
        %v568 = vsub.f32 %v499, %v548
        %v569 = vsub.f32 %v502, %v551
        %v570 = vsub.f32 %v504, %v554
        %v571 = vmul.f32 %v555, 1.442695
        %v572 = vpow.pop %v571
        %v573 = vmul.f32 %v556, 1.442695
        %v574 = vpow.pop %v573
        %v575 = vmul.f32 %v557, 1.442695
        %v576 = vpow.pop %v575
        %v577 = vmul.f32 %v558, 1.442695
        %v578 = vpow.pop %v577
        %v579 = vmul.f32 %v559, 1.442695
        %v580 = vpow.pop %v579
        %v581 = vmul.f32 %v560, 1.442695
        %v582 = vpow.pop %v581
        %v583 = vmul.f32 %v561, 1.442695
        %v584 = vpow.pop %v583
        %v585 = vmul.f32 %v562, 1.442695
        %v586 = vpow.pop %v585
        %v587 = vmul.f32 %v563, 1.442695
        %v588 = vpow.pop %v587
        %v589 = vmul.f32 %v564, 1.442695
        %v590 = vpow.pop %v589
        %v591 = vmul.f32 %v565, 1.442695
        %v592 = vpow.pop %v591
        %v593 = vmul.f32 %v566, 1.442695
        %v594 = vpow.pop %v593
        %v595 = vmul.f32 %v567, 1.442695
        %v596 = vpow.pop %v595
        %v597 = vmul.f32 %v568, 1.442695
        %v598 = vpow.pop %v597
        %v599 = vmul.f32 %v569, 1.442695
        %v600 = vpow.pop %v599
        %v601 = vmul.f32 %v570, 1.442695
        %v602 = vpow.pop %v601
        %603 = vst.msk [vmem:[#allocation4] sm:$0xff] %vm506, %v572
        %604 = vst.msk [vmem:[#allocation4 + $0x8] sm:$0xff] %vm506, %v574
        %605 = vst.msk [vmem:[#allocation4 + $0x10] sm:$0xff] %vm506, %v576
        %606 = vst.msk [vmem:[#allocation4 + $0x18] sm:$0xff] %vm506, %v578
        %607 = vst.msk [vmem:[#allocation4 + $0x20] sm:$0xff] %vm506, %v580
        %608 = vst.msk [vmem:[#allocation4 + $0x28] sm:$0xff] %vm506, %v582
        %609 = vst.msk [vmem:[#allocation4 + $0x30] sm:$0xff] %vm506, %v584
        %610 = vst.msk [vmem:[#allocation4 + $0x38] sm:$0xff] %vm506, %v586
        %611 = vst.msk [vmem:[#allocation4 + $0x40] sm:$0xff] %vm506, %v588
        %612 = vst.msk [vmem:[#allocation4 + $0x48] sm:$0xff] %vm506, %v590
        %613 = vst.msk [vmem:[#allocation4 + $0x50] sm:$0xff] %vm506, %v592
        %614 = vst.msk [vmem:[#allocation4 + $0x58] sm:$0xff] %vm506, %v594
        %615 = vst.msk [vmem:[#allocation4 + $0x60] sm:$0xff] %vm506, %v596
        %616 = vst.msk [vmem:[#allocation4 + $0x68] sm:$0xff] %vm506, %v598
        %617 = vst.msk [vmem:[#allocation4 + $0x70] sm:$0xff] %vm506, %v600
        %618 = vst.msk [vmem:[#allocation4 + $0x78] sm:$0xff] %vm506, %v602
        %v619 = vadd.f32 %v509, %v512
        %v620 = vadd.f32 %v619, %v515
        %v621 = vadd.f32 %v620, %v518
        %v622 = vadd.f32 %v621, %v521
        %v623 = vadd.f32 %v622, %v524
        %v624 = vadd.f32 %v623, %v527
        %v625 = vadd.f32 %v624, %v530
        %v626 = vrot.slane %v625, 4
        %v627 = vadd.f32 %v625, %v626
        %v628 = vrot.slane %v627, 2
        %v629 = vadd.f32 %v627, %v628
        %v630 = vrot.slane %v629, 1
        %v631 = vadd.f32 %v629, %v630
        %v632 = vadd.f32 %v533, %v536
        %v633 = vadd.f32 %v632, %v539
        %v634 = vadd.f32 %v633, %v542
        %v635 = vadd.f32 %v634, %v545
        %v636 = vadd.f32 %v635, %v548
        %v637 = vadd.f32 %v636, %v551
        %v638 = vadd.f32 %v637, %v554
        %v639 = vrot.slane %v638, 4
        %v640 = vadd.f32 %v638, %v639
        %v641 = vrot.slane %v640, 2
        %v642 = vadd.f32 %v640, %v641
        %v643 = vrot.slane %v642, 1
        %v644 = vadd.f32 %v642, %v643
        %v645 = vld [vmem:[%s3] sm:$0xff]
        %v646 = vld [vmem:[%s3 + $0x8] sm:$0xff]
        %v647 = vld [vmem:[%s3 + $0x10] sm:$0xff]
        %v648 = vld [vmem:[%s3 + $0x18] sm:$0xff]
        %v649 = vld [vmem:[%s3 + $0x20] sm:$0xff]
        %v650 = vld [vmem:[%s3 + $0x28] sm:$0xff]
        %v651 = vld [vmem:[%s3 + $0x30] sm:$0xff]
        %v652 = vld [vmem:[%s3 + $0x38] sm:$0xff]
        %v653 = vld [vmem:[#allocation2] sm:$0x3]
        %v654 = vld [vmem:[#allocation4] sm:$0x1]
        %v655 = vld [vmem:[#allocation4 + $0x40] sm:$0x1]
        %v657 = vsel %vm506, %v653, 0
        %659 = vmatpush.msra.mxu0 0.0
        %660 = vmatpush.msra.mxu0 0.0
        %661 = vmatpush.msra.mxu0 0.0
        %662 = vmatpush.msra.mxu0 0.0
        %663 = vmatpush.msra.mxu0 0.0
        %664 = vmatpush.msra.mxu0 0.0
        %665 = vmatpush.msra.mxu0 0.0
        %666 = vmatpush.msra.mxu0 0.0
        %667 = vmatpush.msra.mxu0 %v652
        %668 = vmatpush.msra.mxu0 %v651
        %669 = vmatpush.msra.mxu0 %v650
        %670 = vmatpush.msra.mxu0 %v649
        %671 = vmatpush.msra.mxu0 %v648
        %672 = vmatpush.msra.mxu0 %v647
        %673 = vmatpush.msra.mxu0 %v646
        %674 = vmatpush.msra.mxu0 %v645
        %675 = vmatmul.f32.gmra.mxu0 %v657
        %v676 = vpop.f32.mrf.mxu0
        %v677 = vadd.f32 0.0, %v676
        %678 = vdwg.mxu0
        %v681 = vrot.slane %v655, 7
        %vm682 = vcmask 1041409
        %v683 = vsel %vm682, %v681, %v654
        %v685 = vmul.f32 %v677, %v683
        %vm686 = vcmask 517120
        %v687 = vsel %vm686, %v685, 0.0
        %688 = vadd.xlane.f32.xlu0 %v687
        %v689 = vpop.xlane.xlu0 %688
        %v690 = vmax.f32 %v689, 1e-30
        %v691 = vrcp.pop %v690
        %v692 = vmul.f32 %v685, %v691
        %v693 = vlog2.pop %v691
        %v694 = vmul.f32 %v693, 0.6931472
        %v695 = vsub.f32 0.0, %v694
        %v696 = vld [vmem:[#allocation4 + $0x1] sm:$0x1]
        %v697 = vld [vmem:[#allocation4 + $0x41] sm:$0x1]
        %v699 = vsel %vm506, %v692, 0
        %701 = vmatpush.msra.mxu0 0.0
        %702 = vmatpush.msra.mxu0 0.0
        %703 = vmatpush.msra.mxu0 0.0
        %704 = vmatpush.msra.mxu0 0.0
        %705 = vmatpush.msra.mxu0 0.0
        %706 = vmatpush.msra.mxu0 0.0
        %707 = vmatpush.msra.mxu0 0.0
        %708 = vmatpush.msra.mxu0 0.0
        %709 = vmatpush.msra.mxu0 %v652
        %710 = vmatpush.msra.mxu0 %v651
        %711 = vmatpush.msra.mxu0 %v650
        %712 = vmatpush.msra.mxu0 %v649
        %713 = vmatpush.msra.mxu0 %v648
        %714 = vmatpush.msra.mxu0 %v647
        %715 = vmatpush.msra.mxu0 %v646
        %716 = vmatpush.msra.mxu0 %v645
        %717 = vmatmul.f32.gmra.mxu0 %v699
        %v718 = vpop.f32.mrf.mxu0
        %v719 = vadd.f32 0.0, %v718
        %720 = vdwg.mxu0
        %v723 = vrot.slane %v697, 7
        %v724 = vsel %vm682, %v723, %v696
        %v726 = vmul.f32 %v719, %v724
        %v727 = vsel %vm686, %v726, 0.0
        %728 = vadd.xlane.f32.xlu0 %v727
        %v729 = vpop.xlane.xlu0 %728
        %v730 = vmax.f32 %v729, 1e-30
        %v731 = vrcp.pop %v730
        %v732 = vmul.f32 %v726, %v731
        %v733 = vlog2.pop %v731
        %v734 = vmul.f32 %v733, 0.6931472
        %v735 = vsub.f32 %v695, %v734
        %v736 = vld [vmem:[#allocation4 + $0x2] sm:$0x1]
        %v737 = vld [vmem:[#allocation4 + $0x42] sm:$0x1]
        %v739 = vsel %vm506, %v732, 0
        %741 = vmatpush.msra.mxu0 0.0
        %742 = vmatpush.msra.mxu0 0.0
        %743 = vmatpush.msra.mxu0 0.0
        %744 = vmatpush.msra.mxu0 0.0
        %745 = vmatpush.msra.mxu0 0.0
        %746 = vmatpush.msra.mxu0 0.0
        %747 = vmatpush.msra.mxu0 0.0
        %748 = vmatpush.msra.mxu0 0.0
        %749 = vmatpush.msra.mxu0 %v652
        %750 = vmatpush.msra.mxu0 %v651
        %751 = vmatpush.msra.mxu0 %v650
        %752 = vmatpush.msra.mxu0 %v649
        %753 = vmatpush.msra.mxu0 %v648
        %754 = vmatpush.msra.mxu0 %v647
        %755 = vmatpush.msra.mxu0 %v646
        %756 = vmatpush.msra.mxu0 %v645
        %757 = vmatmul.f32.gmra.mxu0 %v739
        %v758 = vpop.f32.mrf.mxu0
        %v759 = vadd.f32 0.0, %v758
        %760 = vdwg.mxu0
        %v763 = vrot.slane %v737, 7
        %v764 = vsel %vm682, %v763, %v736
        %v766 = vmul.f32 %v759, %v764
        %v767 = vsel %vm686, %v766, 0.0
        %768 = vadd.xlane.f32.xlu0 %v767
        %v769 = vpop.xlane.xlu0 %768
        %v770 = vmax.f32 %v769, 1e-30
        %v771 = vrcp.pop %v770
        %v772 = vmul.f32 %v766, %v771
        %v773 = vlog2.pop %v771
        %v774 = vmul.f32 %v773, 0.6931472
        %v775 = vsub.f32 %v735, %v774
        %v776 = vld [vmem:[#allocation4 + $0x3] sm:$0x1]
        %v777 = vld [vmem:[#allocation4 + $0x43] sm:$0x1]
        %v779 = vsel %vm506, %v772, 0
        %781 = vmatpush.msra.mxu0 0.0
        %782 = vmatpush.msra.mxu0 0.0
        %783 = vmatpush.msra.mxu0 0.0
        %784 = vmatpush.msra.mxu0 0.0
        %785 = vmatpush.msra.mxu0 0.0
        %786 = vmatpush.msra.mxu0 0.0
        %787 = vmatpush.msra.mxu0 0.0
        %788 = vmatpush.msra.mxu0 0.0
        %789 = vmatpush.msra.mxu0 %v652
        %790 = vmatpush.msra.mxu0 %v651
        %791 = vmatpush.msra.mxu0 %v650
        %792 = vmatpush.msra.mxu0 %v649
        %793 = vmatpush.msra.mxu0 %v648
        %794 = vmatpush.msra.mxu0 %v647
        %795 = vmatpush.msra.mxu0 %v646
        %796 = vmatpush.msra.mxu0 %v645
        %797 = vmatmul.f32.gmra.mxu0 %v779
        %v798 = vpop.f32.mrf.mxu0
        %v799 = vadd.f32 0.0, %v798
        %800 = vdwg.mxu0
        %v803 = vrot.slane %v777, 7
        %v804 = vsel %vm682, %v803, %v776
        %v806 = vmul.f32 %v799, %v804
        %v807 = vsel %vm686, %v806, 0.0
        %808 = vadd.xlane.f32.xlu0 %v807
        %v809 = vpop.xlane.xlu0 %808
        %v810 = vmax.f32 %v809, 1e-30
        %v811 = vrcp.pop %v810
        %v812 = vmul.f32 %v806, %v811
        %v813 = vlog2.pop %v811
        %v814 = vmul.f32 %v813, 0.6931472
        %v815 = vsub.f32 %v775, %v814
        %v816 = vld [vmem:[#allocation4 + $0x4] sm:$0x1]
        %v817 = vld [vmem:[#allocation4 + $0x44] sm:$0x1]
        %v819 = vsel %vm506, %v812, 0
        %821 = vmatpush.msra.mxu0 0.0
        %822 = vmatpush.msra.mxu0 0.0
        %823 = vmatpush.msra.mxu0 0.0
        %824 = vmatpush.msra.mxu0 0.0
        %825 = vmatpush.msra.mxu0 0.0
        %826 = vmatpush.msra.mxu0 0.0
        %827 = vmatpush.msra.mxu0 0.0
        %828 = vmatpush.msra.mxu0 0.0
        %829 = vmatpush.msra.mxu0 %v652
        %830 = vmatpush.msra.mxu0 %v651
        %831 = vmatpush.msra.mxu0 %v650
        %832 = vmatpush.msra.mxu0 %v649
        %833 = vmatpush.msra.mxu0 %v648
        %834 = vmatpush.msra.mxu0 %v647
        %835 = vmatpush.msra.mxu0 %v646
        %836 = vmatpush.msra.mxu0 %v645
        %837 = vmatmul.f32.gmra.mxu0 %v819
        %v838 = vpop.f32.mrf.mxu0
        %v839 = vadd.f32 0.0, %v838
        %840 = vdwg.mxu0
        %v843 = vrot.slane %v817, 7
        %v844 = vsel %vm682, %v843, %v816
        %v846 = vmul.f32 %v839, %v844
        %v847 = vsel %vm686, %v846, 0.0
        %848 = vadd.xlane.f32.xlu0 %v847
        %v849 = vpop.xlane.xlu0 %848
        %v850 = vmax.f32 %v849, 1e-30
        %v851 = vrcp.pop %v850
        %v852 = vmul.f32 %v846, %v851
        %v853 = vlog2.pop %v851
        %v854 = vmul.f32 %v853, 0.6931472
        %v855 = vsub.f32 %v815, %v854
        %v856 = vld [vmem:[#allocation4 + $0x5] sm:$0x1]
        %v857 = vld [vmem:[#allocation4 + $0x45] sm:$0x1]
        %v859 = vsel %vm506, %v852, 0
        %861 = vmatpush.msra.mxu0 0.0
        %862 = vmatpush.msra.mxu0 0.0
        %863 = vmatpush.msra.mxu0 0.0
        %864 = vmatpush.msra.mxu0 0.0
        %865 = vmatpush.msra.mxu0 0.0
        %866 = vmatpush.msra.mxu0 0.0
        %867 = vmatpush.msra.mxu0 0.0
        %868 = vmatpush.msra.mxu0 0.0
        %869 = vmatpush.msra.mxu0 %v652
        %870 = vmatpush.msra.mxu0 %v651
        %871 = vmatpush.msra.mxu0 %v650
        %872 = vmatpush.msra.mxu0 %v649
        %873 = vmatpush.msra.mxu0 %v648
        %874 = vmatpush.msra.mxu0 %v647
        %875 = vmatpush.msra.mxu0 %v646
        %876 = vmatpush.msra.mxu0 %v645
        %877 = vmatmul.f32.gmra.mxu0 %v859
        %v878 = vpop.f32.mrf.mxu0
        %v879 = vadd.f32 0.0, %v878
        %880 = vdwg.mxu0
        %v883 = vrot.slane %v857, 7
        %v884 = vsel %vm682, %v883, %v856
        %v886 = vmul.f32 %v879, %v884
        %v887 = vsel %vm686, %v886, 0.0
        %888 = vadd.xlane.f32.xlu0 %v887
        %v889 = vpop.xlane.xlu0 %888
        %v890 = vmax.f32 %v889, 1e-30
        %v891 = vrcp.pop %v890
        %v892 = vmul.f32 %v886, %v891
        %v893 = vlog2.pop %v891
        %v894 = vmul.f32 %v893, 0.6931472
        %v895 = vsub.f32 %v855, %v894
        %v896 = vld [vmem:[#allocation4 + $0x6] sm:$0x1]
        %v897 = vld [vmem:[#allocation4 + $0x46] sm:$0x1]
        %v899 = vsel %vm506, %v892, 0
        %901 = vmatpush.msra.mxu0 0.0
        %902 = vmatpush.msra.mxu0 0.0
        %903 = vmatpush.msra.mxu0 0.0
        %904 = vmatpush.msra.mxu0 0.0
        %905 = vmatpush.msra.mxu0 0.0
        %906 = vmatpush.msra.mxu0 0.0
        %907 = vmatpush.msra.mxu0 0.0
        %908 = vmatpush.msra.mxu0 0.0
        %909 = vmatpush.msra.mxu0 %v652
        %910 = vmatpush.msra.mxu0 %v651
        %911 = vmatpush.msra.mxu0 %v650
        %912 = vmatpush.msra.mxu0 %v649
        %913 = vmatpush.msra.mxu0 %v648
        %914 = vmatpush.msra.mxu0 %v647
        %915 = vmatpush.msra.mxu0 %v646
        %916 = vmatpush.msra.mxu0 %v645
        %917 = vmatmul.f32.gmra.mxu0 %v899
        %v918 = vpop.f32.mrf.mxu0
        %v919 = vadd.f32 0.0, %v918
        %920 = vdwg.mxu0
        %v923 = vrot.slane %v897, 7
        %v924 = vsel %vm682, %v923, %v896
        %v926 = vmul.f32 %v919, %v924
        %v927 = vsel %vm686, %v926, 0.0
        %928 = vadd.xlane.f32.xlu0 %v927
        %v929 = vpop.xlane.xlu0 %928
        %v930 = vmax.f32 %v929, 1e-30
        %v931 = vrcp.pop %v930
        %v932 = vmul.f32 %v926, %v931
        %v933 = vlog2.pop %v931
        %v934 = vmul.f32 %v933, 0.6931472
        %v935 = vsub.f32 %v895, %v934
        %v936 = vld [vmem:[#allocation4 + $0x7] sm:$0x1]
        %v937 = vld [vmem:[#allocation4 + $0x47] sm:$0x1]
        %v939 = vsel %vm506, %v932, 0
        %941 = vmatpush.msra.mxu0 0.0
        %942 = vmatpush.msra.mxu0 0.0
        %943 = vmatpush.msra.mxu0 0.0
        %944 = vmatpush.msra.mxu0 0.0
        %945 = vmatpush.msra.mxu0 0.0
        %946 = vmatpush.msra.mxu0 0.0
        %947 = vmatpush.msra.mxu0 0.0
        %948 = vmatpush.msra.mxu0 0.0
        %949 = vmatpush.msra.mxu0 %v652
        %950 = vmatpush.msra.mxu0 %v651
        %951 = vmatpush.msra.mxu0 %v650
        %952 = vmatpush.msra.mxu0 %v649
        %953 = vmatpush.msra.mxu0 %v648
        %954 = vmatpush.msra.mxu0 %v647
        %955 = vmatpush.msra.mxu0 %v646
        %956 = vmatpush.msra.mxu0 %v645
        %957 = vmatmul.f32.gmra.mxu0 %v939
        %v958 = vpop.f32.mrf.mxu0
        %v959 = vadd.f32 0.0, %v958
        %960 = vdwg.mxu0
        %v963 = vrot.slane %v937, 7
        %v964 = vsel %vm682, %v963, %v936
        %v966 = vmul.f32 %v959, %v964
        %v967 = vsel %vm686, %v966, 0.0
        %968 = vadd.xlane.f32.xlu0 %v967
        %v969 = vpop.xlane.xlu0 %968
        %v970 = vmax.f32 %v969, 1e-30
        %v971 = vrcp.pop %v970
        %v972 = vmul.f32 %v966, %v971
        %v973 = vlog2.pop %v971
        %v974 = vmul.f32 %v973, 0.6931472
        %v975 = vsub.f32 %v935, %v974
        %v976 = vld [vmem:[#allocation4 + $0x8] sm:$0x1]
        %v977 = vld [vmem:[#allocation4 + $0x48] sm:$0x1]
        %v979 = vsel %vm506, %v972, 0
        %981 = vmatpush.msra.mxu0 0.0
        %982 = vmatpush.msra.mxu0 0.0
        %983 = vmatpush.msra.mxu0 0.0
        %984 = vmatpush.msra.mxu0 0.0
        %985 = vmatpush.msra.mxu0 0.0
        %986 = vmatpush.msra.mxu0 0.0
        %987 = vmatpush.msra.mxu0 0.0
        %988 = vmatpush.msra.mxu0 0.0
        %989 = vmatpush.msra.mxu0 %v652
        %990 = vmatpush.msra.mxu0 %v651
        %991 = vmatpush.msra.mxu0 %v650
        %992 = vmatpush.msra.mxu0 %v649
        %993 = vmatpush.msra.mxu0 %v648
        %994 = vmatpush.msra.mxu0 %v647
        %995 = vmatpush.msra.mxu0 %v646
        %996 = vmatpush.msra.mxu0 %v645
        %997 = vmatmul.f32.gmra.mxu0 %v979
        %v998 = vpop.f32.mrf.mxu0
        %v999 = vadd.f32 0.0, %v998
        %1000 = vdwg.mxu0
        %v1003 = vrot.slane %v977, 7
        %v1004 = vsel %vm682, %v1003, %v976
        %v1006 = vmul.f32 %v999, %v1004
        %v1007 = vsel %vm686, %v1006, 0.0
        %1008 = vadd.xlane.f32.xlu0 %v1007
        %v1009 = vpop.xlane.xlu0 %1008
        %v1010 = vmax.f32 %v1009, 1e-30
        %v1011 = vrcp.pop %v1010
        %v1012 = vmul.f32 %v1006, %v1011
        %v1013 = vlog2.pop %v1011
        %v1014 = vmul.f32 %v1013, 0.6931472
        %v1015 = vsub.f32 %v975, %v1014
        %v1016 = vld [vmem:[#allocation4 + $0x9] sm:$0x1]
        %v1017 = vld [vmem:[#allocation4 + $0x49] sm:$0x1]
        %v1019 = vsel %vm506, %v1012, 0
        %1021 = vmatpush.msra.mxu0 0.0
        %1022 = vmatpush.msra.mxu0 0.0
        %1023 = vmatpush.msra.mxu0 0.0
        %1024 = vmatpush.msra.mxu0 0.0
        %1025 = vmatpush.msra.mxu0 0.0
        %1026 = vmatpush.msra.mxu0 0.0
        %1027 = vmatpush.msra.mxu0 0.0
        %1028 = vmatpush.msra.mxu0 0.0
        %1029 = vmatpush.msra.mxu0 %v652
        %1030 = vmatpush.msra.mxu0 %v651
        %1031 = vmatpush.msra.mxu0 %v650
        %1032 = vmatpush.msra.mxu0 %v649
        %1033 = vmatpush.msra.mxu0 %v648
        %1034 = vmatpush.msra.mxu0 %v647
        %1035 = vmatpush.msra.mxu0 %v646
        %1036 = vmatpush.msra.mxu0 %v645
        %1037 = vmatmul.f32.gmra.mxu0 %v1019
        %v1038 = vpop.f32.mrf.mxu0
        %v1039 = vadd.f32 0.0, %v1038
        %1040 = vdwg.mxu0
        %v1043 = vrot.slane %v1017, 7
        %v1044 = vsel %vm682, %v1043, %v1016
        %v1046 = vmul.f32 %v1039, %v1044
        %v1047 = vsel %vm686, %v1046, 0.0
        %1048 = vadd.xlane.f32.xlu0 %v1047
        %v1049 = vpop.xlane.xlu0 %1048
        %v1050 = vmax.f32 %v1049, 1e-30
        %v1051 = vrcp.pop %v1050
        %v1052 = vmul.f32 %v1046, %v1051
        %v1053 = vlog2.pop %v1051
        %v1054 = vmul.f32 %v1053, 0.6931472
        %v1055 = vsub.f32 %v1015, %v1054
        %v1056 = vld [vmem:[#allocation4 + $0xa] sm:$0x1]
        %v1057 = vld [vmem:[#allocation4 + $0x4a] sm:$0x1]
        %v1059 = vsel %vm506, %v1052, 0
        %1061 = vmatpush.msra.mxu0 0.0
        %1062 = vmatpush.msra.mxu0 0.0
        %1063 = vmatpush.msra.mxu0 0.0
        %1064 = vmatpush.msra.mxu0 0.0
        %1065 = vmatpush.msra.mxu0 0.0
        %1066 = vmatpush.msra.mxu0 0.0
        %1067 = vmatpush.msra.mxu0 0.0
        %1068 = vmatpush.msra.mxu0 0.0
        %1069 = vmatpush.msra.mxu0 %v652
        %1070 = vmatpush.msra.mxu0 %v651
        %1071 = vmatpush.msra.mxu0 %v650
        %1072 = vmatpush.msra.mxu0 %v649
        %1073 = vmatpush.msra.mxu0 %v648
        %1074 = vmatpush.msra.mxu0 %v647
        %1075 = vmatpush.msra.mxu0 %v646
        %1076 = vmatpush.msra.mxu0 %v645
        %1077 = vmatmul.f32.gmra.mxu0 %v1059
        %v1078 = vpop.f32.mrf.mxu0
        %v1079 = vadd.f32 0.0, %v1078
        %1080 = vdwg.mxu0
        %v1083 = vrot.slane %v1057, 7
        %v1084 = vsel %vm682, %v1083, %v1056
        %v1086 = vmul.f32 %v1079, %v1084
        %v1087 = vsel %vm686, %v1086, 0.0
        %1088 = vadd.xlane.f32.xlu0 %v1087
        %v1089 = vpop.xlane.xlu0 %1088
        %v1090 = vmax.f32 %v1089, 1e-30
        %v1091 = vrcp.pop %v1090
        %v1092 = vmul.f32 %v1086, %v1091
        %v1093 = vlog2.pop %v1091
        %v1094 = vmul.f32 %v1093, 0.6931472
        %v1095 = vsub.f32 %v1055, %v1094
        %v1096 = vld [vmem:[#allocation4 + $0xb] sm:$0x1]
        %v1097 = vld [vmem:[#allocation4 + $0x4b] sm:$0x1]
        %v1099 = vsel %vm506, %v1092, 0
        %1101 = vmatpush.msra.mxu0 0.0
        %1102 = vmatpush.msra.mxu0 0.0
        %1103 = vmatpush.msra.mxu0 0.0
        %1104 = vmatpush.msra.mxu0 0.0
        %1105 = vmatpush.msra.mxu0 0.0
        %1106 = vmatpush.msra.mxu0 0.0
        %1107 = vmatpush.msra.mxu0 0.0
        %1108 = vmatpush.msra.mxu0 0.0
        %1109 = vmatpush.msra.mxu0 %v652
        %1110 = vmatpush.msra.mxu0 %v651
        %1111 = vmatpush.msra.mxu0 %v650
        %1112 = vmatpush.msra.mxu0 %v649
        %1113 = vmatpush.msra.mxu0 %v648
        %1114 = vmatpush.msra.mxu0 %v647
        %1115 = vmatpush.msra.mxu0 %v646
        %1116 = vmatpush.msra.mxu0 %v645
        %1117 = vmatmul.f32.gmra.mxu0 %v1099
        %v1118 = vpop.f32.mrf.mxu0
        %v1119 = vadd.f32 0.0, %v1118
        %1120 = vdwg.mxu0
        %v1123 = vrot.slane %v1097, 7
        %v1124 = vsel %vm682, %v1123, %v1096
        %v1126 = vmul.f32 %v1119, %v1124
        %v1127 = vsel %vm686, %v1126, 0.0
        %1128 = vadd.xlane.f32.xlu0 %v1127
        %v1129 = vpop.xlane.xlu0 %1128
        %v1130 = vmax.f32 %v1129, 1e-30
        %v1131 = vrcp.pop %v1130
        %v1132 = vmul.f32 %v1126, %v1131
        %v1133 = vlog2.pop %v1131
        %v1134 = vmul.f32 %v1133, 0.6931472
        %v1135 = vsub.f32 %v1095, %v1134
        %v1136 = vld [vmem:[#allocation4 + $0xc] sm:$0x1]
        %v1137 = vld [vmem:[#allocation4 + $0x4c] sm:$0x1]
        %v1139 = vsel %vm506, %v1132, 0
        %1141 = vmatpush.msra.mxu0 0.0
        %1142 = vmatpush.msra.mxu0 0.0
        %1143 = vmatpush.msra.mxu0 0.0
        %1144 = vmatpush.msra.mxu0 0.0
        %1145 = vmatpush.msra.mxu0 0.0
        %1146 = vmatpush.msra.mxu0 0.0
        %1147 = vmatpush.msra.mxu0 0.0
        %1148 = vmatpush.msra.mxu0 0.0
        %1149 = vmatpush.msra.mxu0 %v652
        %1150 = vmatpush.msra.mxu0 %v651
        %1151 = vmatpush.msra.mxu0 %v650
        %1152 = vmatpush.msra.mxu0 %v649
        %1153 = vmatpush.msra.mxu0 %v648
        %1154 = vmatpush.msra.mxu0 %v647
        %1155 = vmatpush.msra.mxu0 %v646
        %1156 = vmatpush.msra.mxu0 %v645
        %1157 = vmatmul.f32.gmra.mxu0 %v1139
        %v1158 = vpop.f32.mrf.mxu0
        %v1159 = vadd.f32 0.0, %v1158
        %1160 = vdwg.mxu0
        %v1163 = vrot.slane %v1137, 7
        %v1164 = vsel %vm682, %v1163, %v1136
        %v1166 = vmul.f32 %v1159, %v1164
        %v1167 = vsel %vm686, %v1166, 0.0
        %1168 = vadd.xlane.f32.xlu0 %v1167
        %v1169 = vpop.xlane.xlu0 %1168
        %v1170 = vmax.f32 %v1169, 1e-30
        %v1171 = vrcp.pop %v1170
        %v1172 = vmul.f32 %v1166, %v1171
        %v1173 = vlog2.pop %v1171
        %v1174 = vmul.f32 %v1173, 0.6931472
        %v1175 = vsub.f32 %v1135, %v1174
        %v1176 = vld [vmem:[#allocation4 + $0xd] sm:$0x1]
        %v1177 = vld [vmem:[#allocation4 + $0x4d] sm:$0x1]
        %v1179 = vsel %vm506, %v1172, 0
        %1181 = vmatpush.msra.mxu0 0.0
        %1182 = vmatpush.msra.mxu0 0.0
        %1183 = vmatpush.msra.mxu0 0.0
        %1184 = vmatpush.msra.mxu0 0.0
        %1185 = vmatpush.msra.mxu0 0.0
        %1186 = vmatpush.msra.mxu0 0.0
        %1187 = vmatpush.msra.mxu0 0.0
        %1188 = vmatpush.msra.mxu0 0.0
        %1189 = vmatpush.msra.mxu0 %v652
        %1190 = vmatpush.msra.mxu0 %v651
        %1191 = vmatpush.msra.mxu0 %v650
        %1192 = vmatpush.msra.mxu0 %v649
        %1193 = vmatpush.msra.mxu0 %v648
        %1194 = vmatpush.msra.mxu0 %v647
        %1195 = vmatpush.msra.mxu0 %v646
        %1196 = vmatpush.msra.mxu0 %v645
        %1197 = vmatmul.f32.gmra.mxu0 %v1179
        %v1198 = vpop.f32.mrf.mxu0
        %v1199 = vadd.f32 0.0, %v1198
        %1200 = vdwg.mxu0
        %v1203 = vrot.slane %v1177, 7
        %v1204 = vsel %vm682, %v1203, %v1176
        %v1206 = vmul.f32 %v1199, %v1204
        %v1207 = vsel %vm686, %v1206, 0.0
        %1208 = vadd.xlane.f32.xlu0 %v1207
        %v1209 = vpop.xlane.xlu0 %1208
        %v1210 = vmax.f32 %v1209, 1e-30
        %v1211 = vrcp.pop %v1210
        %v1212 = vmul.f32 %v1206, %v1211
        %v1213 = vlog2.pop %v1211
        %v1214 = vmul.f32 %v1213, 0.6931472
        %v1215 = vsub.f32 %v1175, %v1214
        %v1216 = vld [vmem:[#allocation4 + $0xe] sm:$0x1]
        %v1217 = vld [vmem:[#allocation4 + $0x4e] sm:$0x1]
        %v1219 = vsel %vm506, %v1212, 0
        %1221 = vmatpush.msra.mxu0 0.0
        %1222 = vmatpush.msra.mxu0 0.0
        %1223 = vmatpush.msra.mxu0 0.0
        %1224 = vmatpush.msra.mxu0 0.0
        %1225 = vmatpush.msra.mxu0 0.0
        %1226 = vmatpush.msra.mxu0 0.0
        %1227 = vmatpush.msra.mxu0 0.0
        %1228 = vmatpush.msra.mxu0 0.0
        %1229 = vmatpush.msra.mxu0 %v652
        %1230 = vmatpush.msra.mxu0 %v651
        %1231 = vmatpush.msra.mxu0 %v650
        %1232 = vmatpush.msra.mxu0 %v649
        %1233 = vmatpush.msra.mxu0 %v648
        %1234 = vmatpush.msra.mxu0 %v647
        %1235 = vmatpush.msra.mxu0 %v646
        %1236 = vmatpush.msra.mxu0 %v645
        %1237 = vmatmul.f32.gmra.mxu0 %v1219
        %v1238 = vpop.f32.mrf.mxu0
        %v1239 = vadd.f32 0.0, %v1238
        %1240 = vdwg.mxu0
        %v1243 = vrot.slane %v1217, 7
        %v1244 = vsel %vm682, %v1243, %v1216
        %v1246 = vmul.f32 %v1239, %v1244
        %v1247 = vsel %vm686, %v1246, 0.0
        %1248 = vadd.xlane.f32.xlu0 %v1247
        %v1249 = vpop.xlane.xlu0 %1248
        %v1250 = vmax.f32 %v1249, 1e-30
        %v1251 = vrcp.pop %v1250
        %v1252 = vmul.f32 %v1246, %v1251
        %v1253 = vlog2.pop %v1251
        %v1254 = vmul.f32 %v1253, 0.6931472
        %v1255 = vsub.f32 %v1215, %v1254
        %v1256 = vld [vmem:[#allocation4 + $0xf] sm:$0x1]
        %v1257 = vld [vmem:[#allocation4 + $0x4f] sm:$0x1]
        %v1259 = vsel %vm506, %v1252, 0
        %1261 = vmatpush.msra.mxu0 0.0
        %1262 = vmatpush.msra.mxu0 0.0
        %1263 = vmatpush.msra.mxu0 0.0
        %1264 = vmatpush.msra.mxu0 0.0
        %1265 = vmatpush.msra.mxu0 0.0
        %1266 = vmatpush.msra.mxu0 0.0
        %1267 = vmatpush.msra.mxu0 0.0
        %1268 = vmatpush.msra.mxu0 0.0
        %1269 = vmatpush.msra.mxu0 %v652
        %1270 = vmatpush.msra.mxu0 %v651
        %1271 = vmatpush.msra.mxu0 %v650
        %1272 = vmatpush.msra.mxu0 %v649
        %1273 = vmatpush.msra.mxu0 %v648
        %1274 = vmatpush.msra.mxu0 %v647
        %1275 = vmatpush.msra.mxu0 %v646
        %1276 = vmatpush.msra.mxu0 %v645
        %1277 = vmatmul.f32.gmra.mxu0 %v1259
        %v1278 = vpop.f32.mrf.mxu0
        %v1279 = vadd.f32 0.0, %v1278
        %1280 = vdwg.mxu0
        %v1283 = vrot.slane %v1257, 7
        %v1284 = vsel %vm682, %v1283, %v1256
        %v1286 = vmul.f32 %v1279, %v1284
        %v1287 = vsel %vm686, %v1286, 0.0
        %1288 = vadd.xlane.f32.xlu0 %v1287
        %v1289 = vpop.xlane.xlu0 %1288
        %v1290 = vmax.f32 %v1289, 1e-30
        %v1291 = vrcp.pop %v1290
        %v1292 = vmul.f32 %v1286, %v1291
        %v1293 = vlog2.pop %v1291
        %v1294 = vmul.f32 %v1293, 0.6931472
        %v1295 = vsub.f32 %v1255, %v1294
        %v1296 = vld [vmem:[#allocation4 + $0x10] sm:$0x1]
        %v1297 = vld [vmem:[#allocation4 + $0x50] sm:$0x1]
        %v1299 = vsel %vm506, %v1292, 0
        %1301 = vmatpush.msra.mxu0 0.0
        %1302 = vmatpush.msra.mxu0 0.0
        %1303 = vmatpush.msra.mxu0 0.0
        %1304 = vmatpush.msra.mxu0 0.0
        %1305 = vmatpush.msra.mxu0 0.0
        %1306 = vmatpush.msra.mxu0 0.0
        %1307 = vmatpush.msra.mxu0 0.0
        %1308 = vmatpush.msra.mxu0 0.0
        %1309 = vmatpush.msra.mxu0 %v652
        %1310 = vmatpush.msra.mxu0 %v651
        %1311 = vmatpush.msra.mxu0 %v650
        %1312 = vmatpush.msra.mxu0 %v649
        %1313 = vmatpush.msra.mxu0 %v648
        %1314 = vmatpush.msra.mxu0 %v647
        %1315 = vmatpush.msra.mxu0 %v646
        %1316 = vmatpush.msra.mxu0 %v645
        %1317 = vmatmul.f32.gmra.mxu0 %v1299
        %v1318 = vpop.f32.mrf.mxu0
        %v1319 = vadd.f32 0.0, %v1318
        %1320 = vdwg.mxu0
        %v1323 = vrot.slane %v1297, 7
        %v1324 = vsel %vm682, %v1323, %v1296
        %v1326 = vmul.f32 %v1319, %v1324
        %v1327 = vsel %vm686, %v1326, 0.0
        %1328 = vadd.xlane.f32.xlu0 %v1327
        %v1329 = vpop.xlane.xlu0 %1328
        %v1330 = vmax.f32 %v1329, 1e-30
        %v1331 = vrcp.pop %v1330
        %v1332 = vmul.f32 %v1326, %v1331
        %v1333 = vlog2.pop %v1331
        %v1334 = vmul.f32 %v1333, 0.6931472
        %v1335 = vsub.f32 %v1295, %v1334
        %v1336 = vld [vmem:[#allocation4 + $0x11] sm:$0x1]
        %v1337 = vld [vmem:[#allocation4 + $0x51] sm:$0x1]
        %v1339 = vsel %vm506, %v1332, 0
        %1341 = vmatpush.msra.mxu0 0.0
        %1342 = vmatpush.msra.mxu0 0.0
        %1343 = vmatpush.msra.mxu0 0.0
        %1344 = vmatpush.msra.mxu0 0.0
        %1345 = vmatpush.msra.mxu0 0.0
        %1346 = vmatpush.msra.mxu0 0.0
        %1347 = vmatpush.msra.mxu0 0.0
        %1348 = vmatpush.msra.mxu0 0.0
        %1349 = vmatpush.msra.mxu0 %v652
        %1350 = vmatpush.msra.mxu0 %v651
        %1351 = vmatpush.msra.mxu0 %v650
        %1352 = vmatpush.msra.mxu0 %v649
        %1353 = vmatpush.msra.mxu0 %v648
        %1354 = vmatpush.msra.mxu0 %v647
        %1355 = vmatpush.msra.mxu0 %v646
        %1356 = vmatpush.msra.mxu0 %v645
        %1357 = vmatmul.f32.gmra.mxu0 %v1339
        %v1358 = vpop.f32.mrf.mxu0
        %v1359 = vadd.f32 0.0, %v1358
        %1360 = vdwg.mxu0
        %v1363 = vrot.slane %v1337, 7
        %v1364 = vsel %vm682, %v1363, %v1336
        %v1366 = vmul.f32 %v1359, %v1364
        %v1367 = vsel %vm686, %v1366, 0.0
        %1368 = vadd.xlane.f32.xlu0 %v1367
        %v1369 = vpop.xlane.xlu0 %1368
        %v1370 = vmax.f32 %v1369, 1e-30
        %v1371 = vrcp.pop %v1370
        %v1372 = vmul.f32 %v1366, %v1371
        %v1373 = vlog2.pop %v1371
        %v1374 = vmul.f32 %v1373, 0.6931472
        %v1375 = vsub.f32 %v1335, %v1374
        %v1376 = vld [vmem:[#allocation4 + $0x12] sm:$0x1]
        %v1377 = vld [vmem:[#allocation4 + $0x52] sm:$0x1]
        %v1379 = vsel %vm506, %v1372, 0
        %1381 = vmatpush.msra.mxu0 0.0
        %1382 = vmatpush.msra.mxu0 0.0
        %1383 = vmatpush.msra.mxu0 0.0
        %1384 = vmatpush.msra.mxu0 0.0
        %1385 = vmatpush.msra.mxu0 0.0
        %1386 = vmatpush.msra.mxu0 0.0
        %1387 = vmatpush.msra.mxu0 0.0
        %1388 = vmatpush.msra.mxu0 0.0
        %1389 = vmatpush.msra.mxu0 %v652
        %1390 = vmatpush.msra.mxu0 %v651
        %1391 = vmatpush.msra.mxu0 %v650
        %1392 = vmatpush.msra.mxu0 %v649
        %1393 = vmatpush.msra.mxu0 %v648
        %1394 = vmatpush.msra.mxu0 %v647
        %1395 = vmatpush.msra.mxu0 %v646
        %1396 = vmatpush.msra.mxu0 %v645
        %1397 = vmatmul.f32.gmra.mxu0 %v1379
        %v1398 = vpop.f32.mrf.mxu0
        %v1399 = vadd.f32 0.0, %v1398
        %1400 = vdwg.mxu0
        %v1403 = vrot.slane %v1377, 7
        %v1404 = vsel %vm682, %v1403, %v1376
        %v1406 = vmul.f32 %v1399, %v1404
        %v1407 = vsel %vm686, %v1406, 0.0
        %1408 = vadd.xlane.f32.xlu0 %v1407
        %v1409 = vpop.xlane.xlu0 %1408
        %v1410 = vmax.f32 %v1409, 1e-30
        %v1411 = vrcp.pop %v1410
        %v1412 = vmul.f32 %v1406, %v1411
        %v1413 = vlog2.pop %v1411
        %v1414 = vmul.f32 %v1413, 0.6931472
        %v1415 = vsub.f32 %v1375, %v1414
        %v1416 = vld [vmem:[#allocation4 + $0x13] sm:$0x1]
        %v1417 = vld [vmem:[#allocation4 + $0x53] sm:$0x1]
        %v1419 = vsel %vm506, %v1412, 0
        %1421 = vmatpush.msra.mxu0 0.0
        %1422 = vmatpush.msra.mxu0 0.0
        %1423 = vmatpush.msra.mxu0 0.0
        %1424 = vmatpush.msra.mxu0 0.0
        %1425 = vmatpush.msra.mxu0 0.0
        %1426 = vmatpush.msra.mxu0 0.0
        %1427 = vmatpush.msra.mxu0 0.0
        %1428 = vmatpush.msra.mxu0 0.0
        %1429 = vmatpush.msra.mxu0 %v652
        %1430 = vmatpush.msra.mxu0 %v651
        %1431 = vmatpush.msra.mxu0 %v650
        %1432 = vmatpush.msra.mxu0 %v649
        %1433 = vmatpush.msra.mxu0 %v648
        %1434 = vmatpush.msra.mxu0 %v647
        %1435 = vmatpush.msra.mxu0 %v646
        %1436 = vmatpush.msra.mxu0 %v645
        %1437 = vmatmul.f32.gmra.mxu0 %v1419
        %v1438 = vpop.f32.mrf.mxu0
        %v1439 = vadd.f32 0.0, %v1438
        %1440 = vdwg.mxu0
        %v1443 = vrot.slane %v1417, 7
        %v1444 = vsel %vm682, %v1443, %v1416
        %v1446 = vmul.f32 %v1439, %v1444
        %v1447 = vsel %vm686, %v1446, 0.0
        %1448 = vadd.xlane.f32.xlu0 %v1447
        %v1449 = vpop.xlane.xlu0 %1448
        %v1450 = vmax.f32 %v1449, 1e-30
        %v1451 = vrcp.pop %v1450
        %v1452 = vmul.f32 %v1446, %v1451
        %v1453 = vlog2.pop %v1451
        %v1454 = vmul.f32 %v1453, 0.6931472
        %v1455 = vsub.f32 %v1415, %v1454
        %v1456 = vld [vmem:[#allocation4 + $0x14] sm:$0x1]
        %v1457 = vld [vmem:[#allocation4 + $0x54] sm:$0x1]
        %v1459 = vsel %vm506, %v1452, 0
        %1461 = vmatpush.msra.mxu0 0.0
        %1462 = vmatpush.msra.mxu0 0.0
        %1463 = vmatpush.msra.mxu0 0.0
        %1464 = vmatpush.msra.mxu0 0.0
        %1465 = vmatpush.msra.mxu0 0.0
        %1466 = vmatpush.msra.mxu0 0.0
        %1467 = vmatpush.msra.mxu0 0.0
        %1468 = vmatpush.msra.mxu0 0.0
        %1469 = vmatpush.msra.mxu0 %v652
        %1470 = vmatpush.msra.mxu0 %v651
        %1471 = vmatpush.msra.mxu0 %v650
        %1472 = vmatpush.msra.mxu0 %v649
        %1473 = vmatpush.msra.mxu0 %v648
        %1474 = vmatpush.msra.mxu0 %v647
        %1475 = vmatpush.msra.mxu0 %v646
        %1476 = vmatpush.msra.mxu0 %v645
        %1477 = vmatmul.f32.gmra.mxu0 %v1459
        %v1478 = vpop.f32.mrf.mxu0
        %v1479 = vadd.f32 0.0, %v1478
        %1480 = vdwg.mxu0
        %v1483 = vrot.slane %v1457, 7
        %v1484 = vsel %vm682, %v1483, %v1456
        %v1486 = vmul.f32 %v1479, %v1484
        %v1487 = vsel %vm686, %v1486, 0.0
        %1488 = vadd.xlane.f32.xlu0 %v1487
        %v1489 = vpop.xlane.xlu0 %1488
        %v1490 = vmax.f32 %v1489, 1e-30
        %v1491 = vrcp.pop %v1490
        %v1492 = vmul.f32 %v1486, %v1491
        %v1493 = vlog2.pop %v1491
        %v1494 = vmul.f32 %v1493, 0.6931472
        %v1495 = vsub.f32 %v1455, %v1494
        %v1496 = vld [vmem:[#allocation4 + $0x15] sm:$0x1]
        %v1497 = vld [vmem:[#allocation4 + $0x55] sm:$0x1]
        %v1499 = vsel %vm506, %v1492, 0
        %1501 = vmatpush.msra.mxu0 0.0
        %1502 = vmatpush.msra.mxu0 0.0
        %1503 = vmatpush.msra.mxu0 0.0
        %1504 = vmatpush.msra.mxu0 0.0
        %1505 = vmatpush.msra.mxu0 0.0
        %1506 = vmatpush.msra.mxu0 0.0
        %1507 = vmatpush.msra.mxu0 0.0
        %1508 = vmatpush.msra.mxu0 0.0
        %1509 = vmatpush.msra.mxu0 %v652
        %1510 = vmatpush.msra.mxu0 %v651
        %1511 = vmatpush.msra.mxu0 %v650
        %1512 = vmatpush.msra.mxu0 %v649
        %1513 = vmatpush.msra.mxu0 %v648
        %1514 = vmatpush.msra.mxu0 %v647
        %1515 = vmatpush.msra.mxu0 %v646
        %1516 = vmatpush.msra.mxu0 %v645
        %1517 = vmatmul.f32.gmra.mxu0 %v1499
        %v1518 = vpop.f32.mrf.mxu0
        %v1519 = vadd.f32 0.0, %v1518
        %1520 = vdwg.mxu0
        %v1523 = vrot.slane %v1497, 7
        %v1524 = vsel %vm682, %v1523, %v1496
        %v1526 = vmul.f32 %v1519, %v1524
        %v1527 = vsel %vm686, %v1526, 0.0
        %1528 = vadd.xlane.f32.xlu0 %v1527
        %v1529 = vpop.xlane.xlu0 %1528
        %v1530 = vmax.f32 %v1529, 1e-30
        %v1531 = vrcp.pop %v1530
        %v1532 = vmul.f32 %v1526, %v1531
        %v1533 = vlog2.pop %v1531
        %v1534 = vmul.f32 %v1533, 0.6931472
        %v1535 = vsub.f32 %v1495, %v1534
        %v1536 = vld [vmem:[#allocation4 + $0x16] sm:$0x1]
        %v1537 = vld [vmem:[#allocation4 + $0x56] sm:$0x1]
        %v1539 = vsel %vm506, %v1532, 0
        %1541 = vmatpush.msra.mxu0 0.0
        %1542 = vmatpush.msra.mxu0 0.0
        %1543 = vmatpush.msra.mxu0 0.0
        %1544 = vmatpush.msra.mxu0 0.0
        %1545 = vmatpush.msra.mxu0 0.0
        %1546 = vmatpush.msra.mxu0 0.0
        %1547 = vmatpush.msra.mxu0 0.0
        %1548 = vmatpush.msra.mxu0 0.0
        %1549 = vmatpush.msra.mxu0 %v652
        %1550 = vmatpush.msra.mxu0 %v651
        %1551 = vmatpush.msra.mxu0 %v650
        %1552 = vmatpush.msra.mxu0 %v649
        %1553 = vmatpush.msra.mxu0 %v648
        %1554 = vmatpush.msra.mxu0 %v647
        %1555 = vmatpush.msra.mxu0 %v646
        %1556 = vmatpush.msra.mxu0 %v645
        %1557 = vmatmul.f32.gmra.mxu0 %v1539
        %v1558 = vpop.f32.mrf.mxu0
        %v1559 = vadd.f32 0.0, %v1558
        %1560 = vdwg.mxu0
        %v1563 = vrot.slane %v1537, 7
        %v1564 = vsel %vm682, %v1563, %v1536
        %v1566 = vmul.f32 %v1559, %v1564
        %v1567 = vsel %vm686, %v1566, 0.0
        %1568 = vadd.xlane.f32.xlu0 %v1567
        %v1569 = vpop.xlane.xlu0 %1568
        %v1570 = vmax.f32 %v1569, 1e-30
        %v1571 = vrcp.pop %v1570
        %v1572 = vmul.f32 %v1566, %v1571
        %v1573 = vlog2.pop %v1571
        %v1574 = vmul.f32 %v1573, 0.6931472
        %v1575 = vsub.f32 %v1535, %v1574
        %v1576 = vld [vmem:[#allocation4 + $0x17] sm:$0x1]
        %v1577 = vld [vmem:[#allocation4 + $0x57] sm:$0x1]
        %v1579 = vsel %vm506, %v1572, 0
        %1581 = vmatpush.msra.mxu0 0.0
        %1582 = vmatpush.msra.mxu0 0.0
        %1583 = vmatpush.msra.mxu0 0.0
        %1584 = vmatpush.msra.mxu0 0.0
        %1585 = vmatpush.msra.mxu0 0.0
        %1586 = vmatpush.msra.mxu0 0.0
        %1587 = vmatpush.msra.mxu0 0.0
        %1588 = vmatpush.msra.mxu0 0.0
        %1589 = vmatpush.msra.mxu0 %v652
        %1590 = vmatpush.msra.mxu0 %v651
        %1591 = vmatpush.msra.mxu0 %v650
        %1592 = vmatpush.msra.mxu0 %v649
        %1593 = vmatpush.msra.mxu0 %v648
        %1594 = vmatpush.msra.mxu0 %v647
        %1595 = vmatpush.msra.mxu0 %v646
        %1596 = vmatpush.msra.mxu0 %v645
        %1597 = vmatmul.f32.gmra.mxu0 %v1579
        %v1598 = vpop.f32.mrf.mxu0
        %v1599 = vadd.f32 0.0, %v1598
        %1600 = vdwg.mxu0
        %v1603 = vrot.slane %v1577, 7
        %v1604 = vsel %vm682, %v1603, %v1576
        %v1606 = vmul.f32 %v1599, %v1604
        %v1607 = vsel %vm686, %v1606, 0.0
        %1608 = vadd.xlane.f32.xlu0 %v1607
        %v1609 = vpop.xlane.xlu0 %1608
        %v1610 = vmax.f32 %v1609, 1e-30
        %v1611 = vrcp.pop %v1610
        %v1612 = vmul.f32 %v1606, %v1611
        %v1613 = vlog2.pop %v1611
        %v1614 = vmul.f32 %v1613, 0.6931472
        %v1615 = vsub.f32 %v1575, %v1614
        %v1616 = vld [vmem:[#allocation4 + $0x18] sm:$0x1]
        %v1617 = vld [vmem:[#allocation4 + $0x58] sm:$0x1]
        %v1619 = vsel %vm506, %v1612, 0
        %1621 = vmatpush.msra.mxu0 0.0
        %1622 = vmatpush.msra.mxu0 0.0
        %1623 = vmatpush.msra.mxu0 0.0
        %1624 = vmatpush.msra.mxu0 0.0
        %1625 = vmatpush.msra.mxu0 0.0
        %1626 = vmatpush.msra.mxu0 0.0
        %1627 = vmatpush.msra.mxu0 0.0
        %1628 = vmatpush.msra.mxu0 0.0
        %1629 = vmatpush.msra.mxu0 %v652
        %1630 = vmatpush.msra.mxu0 %v651
        %1631 = vmatpush.msra.mxu0 %v650
        %1632 = vmatpush.msra.mxu0 %v649
        %1633 = vmatpush.msra.mxu0 %v648
        %1634 = vmatpush.msra.mxu0 %v647
        %1635 = vmatpush.msra.mxu0 %v646
        %1636 = vmatpush.msra.mxu0 %v645
        %1637 = vmatmul.f32.gmra.mxu0 %v1619
        %v1638 = vpop.f32.mrf.mxu0
        %v1639 = vadd.f32 0.0, %v1638
        %1640 = vdwg.mxu0
        %v1643 = vrot.slane %v1617, 7
        %v1644 = vsel %vm682, %v1643, %v1616
        %v1646 = vmul.f32 %v1639, %v1644
        %v1647 = vsel %vm686, %v1646, 0.0
        %1648 = vadd.xlane.f32.xlu0 %v1647
        %v1649 = vpop.xlane.xlu0 %1648
        %v1650 = vmax.f32 %v1649, 1e-30
        %v1651 = vrcp.pop %v1650
        %v1652 = vmul.f32 %v1646, %v1651
        %v1653 = vlog2.pop %v1651
        %v1654 = vmul.f32 %v1653, 0.6931472
        %v1655 = vsub.f32 %v1615, %v1654
        %v1656 = vld [vmem:[#allocation4 + $0x19] sm:$0x1]
        %v1657 = vld [vmem:[#allocation4 + $0x59] sm:$0x1]
        %v1659 = vsel %vm506, %v1652, 0
        %1661 = vmatpush.msra.mxu0 0.0
        %1662 = vmatpush.msra.mxu0 0.0
        %1663 = vmatpush.msra.mxu0 0.0
        %1664 = vmatpush.msra.mxu0 0.0
        %1665 = vmatpush.msra.mxu0 0.0
        %1666 = vmatpush.msra.mxu0 0.0
        %1667 = vmatpush.msra.mxu0 0.0
        %1668 = vmatpush.msra.mxu0 0.0
        %1669 = vmatpush.msra.mxu0 %v652
        %1670 = vmatpush.msra.mxu0 %v651
        %1671 = vmatpush.msra.mxu0 %v650
        %1672 = vmatpush.msra.mxu0 %v649
        %1673 = vmatpush.msra.mxu0 %v648
        %1674 = vmatpush.msra.mxu0 %v647
        %1675 = vmatpush.msra.mxu0 %v646
        %1676 = vmatpush.msra.mxu0 %v645
        %1677 = vmatmul.f32.gmra.mxu0 %v1659
        %v1678 = vpop.f32.mrf.mxu0
        %v1679 = vadd.f32 0.0, %v1678
        %1680 = vdwg.mxu0
        %v1683 = vrot.slane %v1657, 7
        %v1684 = vsel %vm682, %v1683, %v1656
        %v1686 = vmul.f32 %v1679, %v1684
        %v1687 = vsel %vm686, %v1686, 0.0
        %1688 = vadd.xlane.f32.xlu0 %v1687
        %v1689 = vpop.xlane.xlu0 %1688
        %v1690 = vmax.f32 %v1689, 1e-30
        %v1691 = vrcp.pop %v1690
        %v1692 = vmul.f32 %v1686, %v1691
        %v1693 = vlog2.pop %v1691
        %v1694 = vmul.f32 %v1693, 0.6931472
        %v1695 = vsub.f32 %v1655, %v1694
        %v1696 = vld [vmem:[#allocation4 + $0x1a] sm:$0x1]
        %v1697 = vld [vmem:[#allocation4 + $0x5a] sm:$0x1]
        %v1699 = vsel %vm506, %v1692, 0
        %1701 = vmatpush.msra.mxu0 0.0
        %1702 = vmatpush.msra.mxu0 0.0
        %1703 = vmatpush.msra.mxu0 0.0
        %1704 = vmatpush.msra.mxu0 0.0
        %1705 = vmatpush.msra.mxu0 0.0
        %1706 = vmatpush.msra.mxu0 0.0
        %1707 = vmatpush.msra.mxu0 0.0
        %1708 = vmatpush.msra.mxu0 0.0
        %1709 = vmatpush.msra.mxu0 %v652
        %1710 = vmatpush.msra.mxu0 %v651
        %1711 = vmatpush.msra.mxu0 %v650
        %1712 = vmatpush.msra.mxu0 %v649
        %1713 = vmatpush.msra.mxu0 %v648
        %1714 = vmatpush.msra.mxu0 %v647
        %1715 = vmatpush.msra.mxu0 %v646
        %1716 = vmatpush.msra.mxu0 %v645
        %1717 = vmatmul.f32.gmra.mxu0 %v1699
        %v1718 = vpop.f32.mrf.mxu0
        %v1719 = vadd.f32 0.0, %v1718
        %1720 = vdwg.mxu0
        %v1723 = vrot.slane %v1697, 7
        %v1724 = vsel %vm682, %v1723, %v1696
        %v1726 = vmul.f32 %v1719, %v1724
        %v1727 = vsel %vm686, %v1726, 0.0
        %1728 = vadd.xlane.f32.xlu0 %v1727
        %v1729 = vpop.xlane.xlu0 %1728
        %v1730 = vmax.f32 %v1729, 1e-30
        %v1731 = vrcp.pop %v1730
        %v1732 = vmul.f32 %v1726, %v1731
        %v1733 = vlog2.pop %v1731
        %v1734 = vmul.f32 %v1733, 0.6931472
        %v1735 = vsub.f32 %v1695, %v1734
        %v1736 = vld [vmem:[#allocation4 + $0x1b] sm:$0x1]
        %v1737 = vld [vmem:[#allocation4 + $0x5b] sm:$0x1]
        %v1739 = vsel %vm506, %v1732, 0
        %1741 = vmatpush.msra.mxu0 0.0
        %1742 = vmatpush.msra.mxu0 0.0
        %1743 = vmatpush.msra.mxu0 0.0
        %1744 = vmatpush.msra.mxu0 0.0
        %1745 = vmatpush.msra.mxu0 0.0
        %1746 = vmatpush.msra.mxu0 0.0
        %1747 = vmatpush.msra.mxu0 0.0
        %1748 = vmatpush.msra.mxu0 0.0
        %1749 = vmatpush.msra.mxu0 %v652
        %1750 = vmatpush.msra.mxu0 %v651
        %1751 = vmatpush.msra.mxu0 %v650
        %1752 = vmatpush.msra.mxu0 %v649
        %1753 = vmatpush.msra.mxu0 %v648
        %1754 = vmatpush.msra.mxu0 %v647
        %1755 = vmatpush.msra.mxu0 %v646
        %1756 = vmatpush.msra.mxu0 %v645
        %1757 = vmatmul.f32.gmra.mxu0 %v1739
        %v1758 = vpop.f32.mrf.mxu0
        %v1759 = vadd.f32 0.0, %v1758
        %1760 = vdwg.mxu0
        %v1763 = vrot.slane %v1737, 7
        %v1764 = vsel %vm682, %v1763, %v1736
        %v1766 = vmul.f32 %v1759, %v1764
        %v1767 = vsel %vm686, %v1766, 0.0
        %1768 = vadd.xlane.f32.xlu0 %v1767
        %v1769 = vpop.xlane.xlu0 %1768
        %v1770 = vmax.f32 %v1769, 1e-30
        %v1771 = vrcp.pop %v1770
        %v1772 = vmul.f32 %v1766, %v1771
        %v1773 = vlog2.pop %v1771
        %v1774 = vmul.f32 %v1773, 0.6931472
        %v1775 = vsub.f32 %v1735, %v1774
        %v1776 = vld [vmem:[#allocation4 + $0x1c] sm:$0x1]
        %v1777 = vld [vmem:[#allocation4 + $0x5c] sm:$0x1]
        %v1779 = vsel %vm506, %v1772, 0
        %1781 = vmatpush.msra.mxu0 0.0
        %1782 = vmatpush.msra.mxu0 0.0
        %1783 = vmatpush.msra.mxu0 0.0
        %1784 = vmatpush.msra.mxu0 0.0
        %1785 = vmatpush.msra.mxu0 0.0
        %1786 = vmatpush.msra.mxu0 0.0
        %1787 = vmatpush.msra.mxu0 0.0
        %1788 = vmatpush.msra.mxu0 0.0
        %1789 = vmatpush.msra.mxu0 %v652
        %1790 = vmatpush.msra.mxu0 %v651
        %1791 = vmatpush.msra.mxu0 %v650
        %1792 = vmatpush.msra.mxu0 %v649
        %1793 = vmatpush.msra.mxu0 %v648
        %1794 = vmatpush.msra.mxu0 %v647
        %1795 = vmatpush.msra.mxu0 %v646
        %1796 = vmatpush.msra.mxu0 %v645
        %1797 = vmatmul.f32.gmra.mxu0 %v1779
        %v1798 = vpop.f32.mrf.mxu0
        %v1799 = vadd.f32 0.0, %v1798
        %1800 = vdwg.mxu0
        %v1803 = vrot.slane %v1777, 7
        %v1804 = vsel %vm682, %v1803, %v1776
        %v1806 = vmul.f32 %v1799, %v1804
        %v1807 = vsel %vm686, %v1806, 0.0
        %1808 = vadd.xlane.f32.xlu0 %v1807
        %v1809 = vpop.xlane.xlu0 %1808
        %v1810 = vmax.f32 %v1809, 1e-30
        %v1811 = vrcp.pop %v1810
        %v1812 = vmul.f32 %v1806, %v1811
        %v1813 = vlog2.pop %v1811
        %v1814 = vmul.f32 %v1813, 0.6931472
        %v1815 = vsub.f32 %v1775, %v1814
        %v1816 = vld [vmem:[#allocation4 + $0x1d] sm:$0x1]
        %v1817 = vld [vmem:[#allocation4 + $0x5d] sm:$0x1]
        %v1819 = vsel %vm506, %v1812, 0
        %1821 = vmatpush.msra.mxu0 0.0
        %1822 = vmatpush.msra.mxu0 0.0
        %1823 = vmatpush.msra.mxu0 0.0
        %1824 = vmatpush.msra.mxu0 0.0
        %1825 = vmatpush.msra.mxu0 0.0
        %1826 = vmatpush.msra.mxu0 0.0
        %1827 = vmatpush.msra.mxu0 0.0
        %1828 = vmatpush.msra.mxu0 0.0
        %1829 = vmatpush.msra.mxu0 %v652
        %1830 = vmatpush.msra.mxu0 %v651
        %1831 = vmatpush.msra.mxu0 %v650
        %1832 = vmatpush.msra.mxu0 %v649
        %1833 = vmatpush.msra.mxu0 %v648
        %1834 = vmatpush.msra.mxu0 %v647
        %1835 = vmatpush.msra.mxu0 %v646
        %1836 = vmatpush.msra.mxu0 %v645
        %1837 = vmatmul.f32.gmra.mxu0 %v1819
        %v1838 = vpop.f32.mrf.mxu0
        %v1839 = vadd.f32 0.0, %v1838
        %1840 = vdwg.mxu0
        %v1843 = vrot.slane %v1817, 7
        %v1844 = vsel %vm682, %v1843, %v1816
        %v1846 = vmul.f32 %v1839, %v1844
        %v1847 = vsel %vm686, %v1846, 0.0
        %1848 = vadd.xlane.f32.xlu0 %v1847
        %v1849 = vpop.xlane.xlu0 %1848
        %v1850 = vmax.f32 %v1849, 1e-30
        %v1851 = vrcp.pop %v1850
        %v1852 = vmul.f32 %v1846, %v1851
        %v1853 = vlog2.pop %v1851
        %v1854 = vmul.f32 %v1853, 0.6931472
        %v1855 = vsub.f32 %v1815, %v1854
        %v1856 = vld [vmem:[#allocation4 + $0x1e] sm:$0x1]
        %v1857 = vld [vmem:[#allocation4 + $0x5e] sm:$0x1]
        %v1859 = vsel %vm506, %v1852, 0
        %1861 = vmatpush.msra.mxu0 0.0
        %1862 = vmatpush.msra.mxu0 0.0
        %1863 = vmatpush.msra.mxu0 0.0
        %1864 = vmatpush.msra.mxu0 0.0
        %1865 = vmatpush.msra.mxu0 0.0
        %1866 = vmatpush.msra.mxu0 0.0
        %1867 = vmatpush.msra.mxu0 0.0
        %1868 = vmatpush.msra.mxu0 0.0
        %1869 = vmatpush.msra.mxu0 %v652
        %1870 = vmatpush.msra.mxu0 %v651
        %1871 = vmatpush.msra.mxu0 %v650
        %1872 = vmatpush.msra.mxu0 %v649
        %1873 = vmatpush.msra.mxu0 %v648
        %1874 = vmatpush.msra.mxu0 %v647
        %1875 = vmatpush.msra.mxu0 %v646
        %1876 = vmatpush.msra.mxu0 %v645
        %1877 = vmatmul.f32.gmra.mxu0 %v1859
        %v1878 = vpop.f32.mrf.mxu0
        %v1879 = vadd.f32 0.0, %v1878
        %1880 = vdwg.mxu0
        %v1883 = vrot.slane %v1857, 7
        %v1884 = vsel %vm682, %v1883, %v1856
        %v1886 = vmul.f32 %v1879, %v1884
        %v1887 = vsel %vm686, %v1886, 0.0
        %1888 = vadd.xlane.f32.xlu0 %v1887
        %v1889 = vpop.xlane.xlu0 %1888
        %v1890 = vmax.f32 %v1889, 1e-30
        %v1891 = vrcp.pop %v1890
        %v1892 = vmul.f32 %v1886, %v1891
        %v1893 = vlog2.pop %v1891
        %v1894 = vmul.f32 %v1893, 0.6931472
        %v1895 = vsub.f32 %v1855, %v1894
        %v1896 = vld [vmem:[#allocation4 + $0x1f] sm:$0x1]
        %v1897 = vld [vmem:[#allocation4 + $0x5f] sm:$0x1]
        %v1899 = vsel %vm506, %v1892, 0
        %1901 = vmatpush.msra.mxu0 0.0
        %1902 = vmatpush.msra.mxu0 0.0
        %1903 = vmatpush.msra.mxu0 0.0
        %1904 = vmatpush.msra.mxu0 0.0
        %1905 = vmatpush.msra.mxu0 0.0
        %1906 = vmatpush.msra.mxu0 0.0
        %1907 = vmatpush.msra.mxu0 0.0
        %1908 = vmatpush.msra.mxu0 0.0
        %1909 = vmatpush.msra.mxu0 %v652
        %1910 = vmatpush.msra.mxu0 %v651
        %1911 = vmatpush.msra.mxu0 %v650
        %1912 = vmatpush.msra.mxu0 %v649
        %1913 = vmatpush.msra.mxu0 %v648
        %1914 = vmatpush.msra.mxu0 %v647
        %1915 = vmatpush.msra.mxu0 %v646
        %1916 = vmatpush.msra.mxu0 %v645
        %1917 = vmatmul.f32.gmra.mxu0 %v1899
        %v1918 = vpop.f32.mrf.mxu0
        %v1919 = vadd.f32 0.0, %v1918
        %1920 = vdwg.mxu0
        %v1923 = vrot.slane %v1897, 7
        %v1924 = vsel %vm682, %v1923, %v1896
        %v1926 = vmul.f32 %v1919, %v1924
        %v1927 = vsel %vm686, %v1926, 0.0
        %1928 = vadd.xlane.f32.xlu0 %v1927
        %v1929 = vpop.xlane.xlu0 %1928
        %v1930 = vmax.f32 %v1929, 1e-30
        %v1931 = vrcp.pop %v1930
        %v1932 = vmul.f32 %v1926, %v1931
        %v1933 = vlog2.pop %v1931
        %v1934 = vmul.f32 %v1933, 0.6931472
        %v1935 = vsub.f32 %v1895, %v1934
        %v1936 = vld [vmem:[#allocation4 + $0x20] sm:$0x1]
        %v1937 = vld [vmem:[#allocation4 + $0x60] sm:$0x1]
        %v1939 = vsel %vm506, %v1932, 0
        %1941 = vmatpush.msra.mxu0 0.0
        %1942 = vmatpush.msra.mxu0 0.0
        %1943 = vmatpush.msra.mxu0 0.0
        %1944 = vmatpush.msra.mxu0 0.0
        %1945 = vmatpush.msra.mxu0 0.0
        %1946 = vmatpush.msra.mxu0 0.0
        %1947 = vmatpush.msra.mxu0 0.0
        %1948 = vmatpush.msra.mxu0 0.0
        %1949 = vmatpush.msra.mxu0 %v652
        %1950 = vmatpush.msra.mxu0 %v651
        %1951 = vmatpush.msra.mxu0 %v650
        %1952 = vmatpush.msra.mxu0 %v649
        %1953 = vmatpush.msra.mxu0 %v648
        %1954 = vmatpush.msra.mxu0 %v647
        %1955 = vmatpush.msra.mxu0 %v646
        %1956 = vmatpush.msra.mxu0 %v645
        %1957 = vmatmul.f32.gmra.mxu0 %v1939
        %v1958 = vpop.f32.mrf.mxu0
        %v1959 = vadd.f32 0.0, %v1958
        %1960 = vdwg.mxu0
        %v1963 = vrot.slane %v1937, 7
        %v1964 = vsel %vm682, %v1963, %v1936
        %v1966 = vmul.f32 %v1959, %v1964
        %v1967 = vsel %vm686, %v1966, 0.0
        %1968 = vadd.xlane.f32.xlu0 %v1967
        %v1969 = vpop.xlane.xlu0 %1968
        %v1970 = vmax.f32 %v1969, 1e-30
        %v1971 = vrcp.pop %v1970
        %v1972 = vmul.f32 %v1966, %v1971
        %v1973 = vlog2.pop %v1971
        %v1974 = vmul.f32 %v1973, 0.6931472
        %v1975 = vsub.f32 %v1935, %v1974
        %v1976 = vld [vmem:[#allocation4 + $0x21] sm:$0x1]
        %v1977 = vld [vmem:[#allocation4 + $0x61] sm:$0x1]
        %v1979 = vsel %vm506, %v1972, 0
        %1981 = vmatpush.msra.mxu0 0.0
        %1982 = vmatpush.msra.mxu0 0.0
        %1983 = vmatpush.msra.mxu0 0.0
        %1984 = vmatpush.msra.mxu0 0.0
        %1985 = vmatpush.msra.mxu0 0.0
        %1986 = vmatpush.msra.mxu0 0.0
        %1987 = vmatpush.msra.mxu0 0.0
        %1988 = vmatpush.msra.mxu0 0.0
        %1989 = vmatpush.msra.mxu0 %v652
        %1990 = vmatpush.msra.mxu0 %v651
        %1991 = vmatpush.msra.mxu0 %v650
        %1992 = vmatpush.msra.mxu0 %v649
        %1993 = vmatpush.msra.mxu0 %v648
        %1994 = vmatpush.msra.mxu0 %v647
        %1995 = vmatpush.msra.mxu0 %v646
        %1996 = vmatpush.msra.mxu0 %v645
        %1997 = vmatmul.f32.gmra.mxu0 %v1979
        %v1998 = vpop.f32.mrf.mxu0
        %v1999 = vadd.f32 0.0, %v1998
        %2000 = vdwg.mxu0
        %v2003 = vrot.slane %v1977, 7
        %v2004 = vsel %vm682, %v2003, %v1976
        %v2006 = vmul.f32 %v1999, %v2004
        %v2007 = vsel %vm686, %v2006, 0.0
        %2008 = vadd.xlane.f32.xlu0 %v2007
        %v2009 = vpop.xlane.xlu0 %2008
        %v2010 = vmax.f32 %v2009, 1e-30
        %v2011 = vrcp.pop %v2010
        %v2012 = vmul.f32 %v2006, %v2011
        %v2013 = vlog2.pop %v2011
        %v2014 = vmul.f32 %v2013, 0.6931472
        %v2015 = vsub.f32 %v1975, %v2014
        %v2016 = vld [vmem:[#allocation4 + $0x22] sm:$0x1]
        %v2017 = vld [vmem:[#allocation4 + $0x62] sm:$0x1]
        %v2019 = vsel %vm506, %v2012, 0
        %2021 = vmatpush.msra.mxu0 0.0
        %2022 = vmatpush.msra.mxu0 0.0
        %2023 = vmatpush.msra.mxu0 0.0
        %2024 = vmatpush.msra.mxu0 0.0
        %2025 = vmatpush.msra.mxu0 0.0
        %2026 = vmatpush.msra.mxu0 0.0
        %2027 = vmatpush.msra.mxu0 0.0
        %2028 = vmatpush.msra.mxu0 0.0
        %2029 = vmatpush.msra.mxu0 %v652
        %2030 = vmatpush.msra.mxu0 %v651
        %2031 = vmatpush.msra.mxu0 %v650
        %2032 = vmatpush.msra.mxu0 %v649
        %2033 = vmatpush.msra.mxu0 %v648
        %2034 = vmatpush.msra.mxu0 %v647
        %2035 = vmatpush.msra.mxu0 %v646
        %2036 = vmatpush.msra.mxu0 %v645
        %2037 = vmatmul.f32.gmra.mxu0 %v2019
        %v2038 = vpop.f32.mrf.mxu0
        %v2039 = vadd.f32 0.0, %v2038
        %2040 = vdwg.mxu0
        %v2043 = vrot.slane %v2017, 7
        %v2044 = vsel %vm682, %v2043, %v2016
        %v2046 = vmul.f32 %v2039, %v2044
        %v2047 = vsel %vm686, %v2046, 0.0
        %2048 = vadd.xlane.f32.xlu0 %v2047
        %v2049 = vpop.xlane.xlu0 %2048
        %v2050 = vmax.f32 %v2049, 1e-30
        %v2051 = vrcp.pop %v2050
        %v2052 = vmul.f32 %v2046, %v2051
        %v2053 = vlog2.pop %v2051
        %v2054 = vmul.f32 %v2053, 0.6931472
        %v2055 = vsub.f32 %v2015, %v2054
        %v2056 = vld [vmem:[#allocation4 + $0x23] sm:$0x1]
        %v2057 = vld [vmem:[#allocation4 + $0x63] sm:$0x1]
        %v2059 = vsel %vm506, %v2052, 0
        %2061 = vmatpush.msra.mxu0 0.0
        %2062 = vmatpush.msra.mxu0 0.0
        %2063 = vmatpush.msra.mxu0 0.0
        %2064 = vmatpush.msra.mxu0 0.0
        %2065 = vmatpush.msra.mxu0 0.0
        %2066 = vmatpush.msra.mxu0 0.0
        %2067 = vmatpush.msra.mxu0 0.0
        %2068 = vmatpush.msra.mxu0 0.0
        %2069 = vmatpush.msra.mxu0 %v652
        %2070 = vmatpush.msra.mxu0 %v651
        %2071 = vmatpush.msra.mxu0 %v650
        %2072 = vmatpush.msra.mxu0 %v649
        %2073 = vmatpush.msra.mxu0 %v648
        %2074 = vmatpush.msra.mxu0 %v647
        %2075 = vmatpush.msra.mxu0 %v646
        %2076 = vmatpush.msra.mxu0 %v645
        %2077 = vmatmul.f32.gmra.mxu0 %v2059
        %v2078 = vpop.f32.mrf.mxu0
        %v2079 = vadd.f32 0.0, %v2078
        %2080 = vdwg.mxu0
        %v2083 = vrot.slane %v2057, 7
        %v2084 = vsel %vm682, %v2083, %v2056
        %v2086 = vmul.f32 %v2079, %v2084
        %v2087 = vsel %vm686, %v2086, 0.0
        %2088 = vadd.xlane.f32.xlu0 %v2087
        %v2089 = vpop.xlane.xlu0 %2088
        %v2090 = vmax.f32 %v2089, 1e-30
        %v2091 = vrcp.pop %v2090
        %v2092 = vmul.f32 %v2086, %v2091
        %v2093 = vlog2.pop %v2091
        %v2094 = vmul.f32 %v2093, 0.6931472
        %v2095 = vsub.f32 %v2055, %v2094
        %v2096 = vld [vmem:[#allocation4 + $0x24] sm:$0x1]
        %v2097 = vld [vmem:[#allocation4 + $0x64] sm:$0x1]
        %v2099 = vsel %vm506, %v2092, 0
        %2101 = vmatpush.msra.mxu0 0.0
        %2102 = vmatpush.msra.mxu0 0.0
        %2103 = vmatpush.msra.mxu0 0.0
        %2104 = vmatpush.msra.mxu0 0.0
        %2105 = vmatpush.msra.mxu0 0.0
        %2106 = vmatpush.msra.mxu0 0.0
        %2107 = vmatpush.msra.mxu0 0.0
        %2108 = vmatpush.msra.mxu0 0.0
        %2109 = vmatpush.msra.mxu0 %v652
        %2110 = vmatpush.msra.mxu0 %v651
        %2111 = vmatpush.msra.mxu0 %v650
        %2112 = vmatpush.msra.mxu0 %v649
        %2113 = vmatpush.msra.mxu0 %v648
        %2114 = vmatpush.msra.mxu0 %v647
        %2115 = vmatpush.msra.mxu0 %v646
        %2116 = vmatpush.msra.mxu0 %v645
        %2117 = vmatmul.f32.gmra.mxu0 %v2099
        %v2118 = vpop.f32.mrf.mxu0
        %v2119 = vadd.f32 0.0, %v2118
        %2120 = vdwg.mxu0
        %v2123 = vrot.slane %v2097, 7
        %v2124 = vsel %vm682, %v2123, %v2096
        %v2126 = vmul.f32 %v2119, %v2124
        %v2127 = vsel %vm686, %v2126, 0.0
        %2128 = vadd.xlane.f32.xlu0 %v2127
        %v2129 = vpop.xlane.xlu0 %2128
        %v2130 = vmax.f32 %v2129, 1e-30
        %v2131 = vrcp.pop %v2130
        %v2132 = vmul.f32 %v2126, %v2131
        %v2133 = vlog2.pop %v2131
        %v2134 = vmul.f32 %v2133, 0.6931472
        %v2135 = vsub.f32 %v2095, %v2134
        %v2136 = vld [vmem:[#allocation4 + $0x25] sm:$0x1]
        %v2137 = vld [vmem:[#allocation4 + $0x65] sm:$0x1]
        %v2139 = vsel %vm506, %v2132, 0
        %2141 = vmatpush.msra.mxu0 0.0
        %2142 = vmatpush.msra.mxu0 0.0
        %2143 = vmatpush.msra.mxu0 0.0
        %2144 = vmatpush.msra.mxu0 0.0
        %2145 = vmatpush.msra.mxu0 0.0
        %2146 = vmatpush.msra.mxu0 0.0
        %2147 = vmatpush.msra.mxu0 0.0
        %2148 = vmatpush.msra.mxu0 0.0
        %2149 = vmatpush.msra.mxu0 %v652
        %2150 = vmatpush.msra.mxu0 %v651
        %2151 = vmatpush.msra.mxu0 %v650
        %2152 = vmatpush.msra.mxu0 %v649
        %2153 = vmatpush.msra.mxu0 %v648
        %2154 = vmatpush.msra.mxu0 %v647
        %2155 = vmatpush.msra.mxu0 %v646
        %2156 = vmatpush.msra.mxu0 %v645
        %2157 = vmatmul.f32.gmra.mxu0 %v2139
        %v2158 = vpop.f32.mrf.mxu0
        %v2159 = vadd.f32 0.0, %v2158
        %2160 = vdwg.mxu0
        %v2163 = vrot.slane %v2137, 7
        %v2164 = vsel %vm682, %v2163, %v2136
        %v2166 = vmul.f32 %v2159, %v2164
        %v2167 = vsel %vm686, %v2166, 0.0
        %2168 = vadd.xlane.f32.xlu0 %v2167
        %v2169 = vpop.xlane.xlu0 %2168
        %v2170 = vmax.f32 %v2169, 1e-30
        %v2171 = vrcp.pop %v2170
        %v2172 = vmul.f32 %v2166, %v2171
        %v2173 = vlog2.pop %v2171
        %v2174 = vmul.f32 %v2173, 0.6931472
        %v2175 = vsub.f32 %v2135, %v2174
        %v2176 = vld [vmem:[#allocation4 + $0x26] sm:$0x1]
        %v2177 = vld [vmem:[#allocation4 + $0x66] sm:$0x1]
        %v2179 = vsel %vm506, %v2172, 0
        %2181 = vmatpush.msra.mxu0 0.0
        %2182 = vmatpush.msra.mxu0 0.0
        %2183 = vmatpush.msra.mxu0 0.0
        %2184 = vmatpush.msra.mxu0 0.0
        %2185 = vmatpush.msra.mxu0 0.0
        %2186 = vmatpush.msra.mxu0 0.0
        %2187 = vmatpush.msra.mxu0 0.0
        %2188 = vmatpush.msra.mxu0 0.0
        %2189 = vmatpush.msra.mxu0 %v652
        %2190 = vmatpush.msra.mxu0 %v651
        %2191 = vmatpush.msra.mxu0 %v650
        %2192 = vmatpush.msra.mxu0 %v649
        %2193 = vmatpush.msra.mxu0 %v648
        %2194 = vmatpush.msra.mxu0 %v647
        %2195 = vmatpush.msra.mxu0 %v646
        %2196 = vmatpush.msra.mxu0 %v645
        %2197 = vmatmul.f32.gmra.mxu0 %v2179
        %v2198 = vpop.f32.mrf.mxu0
        %v2199 = vadd.f32 0.0, %v2198
        %2200 = vdwg.mxu0
        %v2203 = vrot.slane %v2177, 7
        %v2204 = vsel %vm682, %v2203, %v2176
        %v2206 = vmul.f32 %v2199, %v2204
        %v2207 = vsel %vm686, %v2206, 0.0
        %2208 = vadd.xlane.f32.xlu0 %v2207
        %v2209 = vpop.xlane.xlu0 %2208
        %v2210 = vmax.f32 %v2209, 1e-30
        %v2211 = vrcp.pop %v2210
        %v2212 = vmul.f32 %v2206, %v2211
        %v2213 = vlog2.pop %v2211
        %v2214 = vmul.f32 %v2213, 0.6931472
        %v2215 = vsub.f32 %v2175, %v2214
        %v2216 = vld [vmem:[#allocation4 + $0x27] sm:$0x1]
        %v2217 = vld [vmem:[#allocation4 + $0x67] sm:$0x1]
        %v2219 = vsel %vm506, %v2212, 0
        %2221 = vmatpush.msra.mxu0 0.0
        %2222 = vmatpush.msra.mxu0 0.0
        %2223 = vmatpush.msra.mxu0 0.0
        %2224 = vmatpush.msra.mxu0 0.0
        %2225 = vmatpush.msra.mxu0 0.0
        %2226 = vmatpush.msra.mxu0 0.0
        %2227 = vmatpush.msra.mxu0 0.0
        %2228 = vmatpush.msra.mxu0 0.0
        %2229 = vmatpush.msra.mxu0 %v652
        %2230 = vmatpush.msra.mxu0 %v651
        %2231 = vmatpush.msra.mxu0 %v650
        %2232 = vmatpush.msra.mxu0 %v649
        %2233 = vmatpush.msra.mxu0 %v648
        %2234 = vmatpush.msra.mxu0 %v647
        %2235 = vmatpush.msra.mxu0 %v646
        %2236 = vmatpush.msra.mxu0 %v645
        %2237 = vmatmul.f32.gmra.mxu0 %v2219
        %v2238 = vpop.f32.mrf.mxu0
        %v2239 = vadd.f32 0.0, %v2238
        %2240 = vdwg.mxu0
        %v2243 = vrot.slane %v2217, 7
        %v2244 = vsel %vm682, %v2243, %v2216
        %v2246 = vmul.f32 %v2239, %v2244
        %v2247 = vsel %vm686, %v2246, 0.0
        %2248 = vadd.xlane.f32.xlu0 %v2247
        %v2249 = vpop.xlane.xlu0 %2248
        %v2250 = vmax.f32 %v2249, 1e-30
        %v2251 = vrcp.pop %v2250
        %v2252 = vmul.f32 %v2246, %v2251
        %v2253 = vlog2.pop %v2251
        %v2254 = vmul.f32 %v2253, 0.6931472
        %v2255 = vsub.f32 %v2215, %v2254
        %v2256 = vld [vmem:[#allocation4 + $0x28] sm:$0x1]
        %v2257 = vld [vmem:[#allocation4 + $0x68] sm:$0x1]
        %v2259 = vsel %vm506, %v2252, 0
        %2261 = vmatpush.msra.mxu0 0.0
        %2262 = vmatpush.msra.mxu0 0.0
        %2263 = vmatpush.msra.mxu0 0.0
        %2264 = vmatpush.msra.mxu0 0.0
        %2265 = vmatpush.msra.mxu0 0.0
        %2266 = vmatpush.msra.mxu0 0.0
        %2267 = vmatpush.msra.mxu0 0.0
        %2268 = vmatpush.msra.mxu0 0.0
        %2269 = vmatpush.msra.mxu0 %v652
        %2270 = vmatpush.msra.mxu0 %v651
        %2271 = vmatpush.msra.mxu0 %v650
        %2272 = vmatpush.msra.mxu0 %v649
        %2273 = vmatpush.msra.mxu0 %v648
        %2274 = vmatpush.msra.mxu0 %v647
        %2275 = vmatpush.msra.mxu0 %v646
        %2276 = vmatpush.msra.mxu0 %v645
        %2277 = vmatmul.f32.gmra.mxu0 %v2259
        %v2278 = vpop.f32.mrf.mxu0
        %v2279 = vadd.f32 0.0, %v2278
        %2280 = vdwg.mxu0
        %v2283 = vrot.slane %v2257, 7
        %v2284 = vsel %vm682, %v2283, %v2256
        %v2286 = vmul.f32 %v2279, %v2284
        %v2287 = vsel %vm686, %v2286, 0.0
        %2288 = vadd.xlane.f32.xlu0 %v2287
        %v2289 = vpop.xlane.xlu0 %2288
        %v2290 = vmax.f32 %v2289, 1e-30
        %v2291 = vrcp.pop %v2290
        %v2292 = vmul.f32 %v2286, %v2291
        %v2293 = vlog2.pop %v2291
        %v2294 = vmul.f32 %v2293, 0.6931472
        %v2295 = vsub.f32 %v2255, %v2294
        %v2296 = vld [vmem:[#allocation4 + $0x29] sm:$0x1]
        %v2297 = vld [vmem:[#allocation4 + $0x69] sm:$0x1]
        %v2299 = vsel %vm506, %v2292, 0
        %2301 = vmatpush.msra.mxu0 0.0
        %2302 = vmatpush.msra.mxu0 0.0
        %2303 = vmatpush.msra.mxu0 0.0
        %2304 = vmatpush.msra.mxu0 0.0
        %2305 = vmatpush.msra.mxu0 0.0
        %2306 = vmatpush.msra.mxu0 0.0
        %2307 = vmatpush.msra.mxu0 0.0
        %2308 = vmatpush.msra.mxu0 0.0
        %2309 = vmatpush.msra.mxu0 %v652
        %2310 = vmatpush.msra.mxu0 %v651
        %2311 = vmatpush.msra.mxu0 %v650
        %2312 = vmatpush.msra.mxu0 %v649
        %2313 = vmatpush.msra.mxu0 %v648
        %2314 = vmatpush.msra.mxu0 %v647
        %2315 = vmatpush.msra.mxu0 %v646
        %2316 = vmatpush.msra.mxu0 %v645
        %2317 = vmatmul.f32.gmra.mxu0 %v2299
        %v2318 = vpop.f32.mrf.mxu0
        %v2319 = vadd.f32 0.0, %v2318
        %2320 = vdwg.mxu0
        %v2323 = vrot.slane %v2297, 7
        %v2324 = vsel %vm682, %v2323, %v2296
        %v2326 = vmul.f32 %v2319, %v2324
        %v2327 = vsel %vm686, %v2326, 0.0
        %2328 = vadd.xlane.f32.xlu0 %v2327
        %v2329 = vpop.xlane.xlu0 %2328
        %v2330 = vmax.f32 %v2329, 1e-30
        %v2331 = vrcp.pop %v2330
        %v2332 = vmul.f32 %v2326, %v2331
        %v2333 = vlog2.pop %v2331
        %v2334 = vmul.f32 %v2333, 0.6931472
        %v2335 = vsub.f32 %v2295, %v2334
        %v2336 = vld [vmem:[#allocation4 + $0x2a] sm:$0x1]
        %v2337 = vld [vmem:[#allocation4 + $0x6a] sm:$0x1]
        %v2339 = vsel %vm506, %v2332, 0
        %2341 = vmatpush.msra.mxu0 0.0
        %2342 = vmatpush.msra.mxu0 0.0
        %2343 = vmatpush.msra.mxu0 0.0
        %2344 = vmatpush.msra.mxu0 0.0
        %2345 = vmatpush.msra.mxu0 0.0
        %2346 = vmatpush.msra.mxu0 0.0
        %2347 = vmatpush.msra.mxu0 0.0
        %2348 = vmatpush.msra.mxu0 0.0
        %2349 = vmatpush.msra.mxu0 %v652
        %2350 = vmatpush.msra.mxu0 %v651
        %2351 = vmatpush.msra.mxu0 %v650
        %2352 = vmatpush.msra.mxu0 %v649
        %2353 = vmatpush.msra.mxu0 %v648
        %2354 = vmatpush.msra.mxu0 %v647
        %2355 = vmatpush.msra.mxu0 %v646
        %2356 = vmatpush.msra.mxu0 %v645
        %2357 = vmatmul.f32.gmra.mxu0 %v2339
        %v2358 = vpop.f32.mrf.mxu0
        %v2359 = vadd.f32 0.0, %v2358
        %2360 = vdwg.mxu0
        %v2363 = vrot.slane %v2337, 7
        %v2364 = vsel %vm682, %v2363, %v2336
        %v2366 = vmul.f32 %v2359, %v2364
        %v2367 = vsel %vm686, %v2366, 0.0
        %2368 = vadd.xlane.f32.xlu0 %v2367
        %v2369 = vpop.xlane.xlu0 %2368
        %v2370 = vmax.f32 %v2369, 1e-30
        %v2371 = vrcp.pop %v2370
        %v2372 = vmul.f32 %v2366, %v2371
        %v2373 = vlog2.pop %v2371
        %v2374 = vmul.f32 %v2373, 0.6931472
        %v2375 = vsub.f32 %v2335, %v2374
        %v2376 = vld [vmem:[#allocation4 + $0x2b] sm:$0x1]
        %v2377 = vld [vmem:[#allocation4 + $0x6b] sm:$0x1]
        %v2379 = vsel %vm506, %v2372, 0
        %2381 = vmatpush.msra.mxu0 0.0
        %2382 = vmatpush.msra.mxu0 0.0
        %2383 = vmatpush.msra.mxu0 0.0
        %2384 = vmatpush.msra.mxu0 0.0
        %2385 = vmatpush.msra.mxu0 0.0
        %2386 = vmatpush.msra.mxu0 0.0
        %2387 = vmatpush.msra.mxu0 0.0
        %2388 = vmatpush.msra.mxu0 0.0
        %2389 = vmatpush.msra.mxu0 %v652
        %2390 = vmatpush.msra.mxu0 %v651
        %2391 = vmatpush.msra.mxu0 %v650
        %2392 = vmatpush.msra.mxu0 %v649
        %2393 = vmatpush.msra.mxu0 %v648
        %2394 = vmatpush.msra.mxu0 %v647
        %2395 = vmatpush.msra.mxu0 %v646
        %2396 = vmatpush.msra.mxu0 %v645
        %2397 = vmatmul.f32.gmra.mxu0 %v2379
        %v2398 = vpop.f32.mrf.mxu0
        %v2399 = vadd.f32 0.0, %v2398
        %2400 = vdwg.mxu0
        %v2403 = vrot.slane %v2377, 7
        %v2404 = vsel %vm682, %v2403, %v2376
        %v2406 = vmul.f32 %v2399, %v2404
        %v2407 = vsel %vm686, %v2406, 0.0
        %2408 = vadd.xlane.f32.xlu0 %v2407
        %v2409 = vpop.xlane.xlu0 %2408
        %v2410 = vmax.f32 %v2409, 1e-30
        %v2411 = vrcp.pop %v2410
        %v2412 = vmul.f32 %v2406, %v2411
        %v2413 = vlog2.pop %v2411
        %v2414 = vmul.f32 %v2413, 0.6931472
        %v2415 = vsub.f32 %v2375, %v2414
        %v2416 = vld [vmem:[#allocation4 + $0x2c] sm:$0x1]
        %v2417 = vld [vmem:[#allocation4 + $0x6c] sm:$0x1]
        %v2419 = vsel %vm506, %v2412, 0
        %2421 = vmatpush.msra.mxu0 0.0
        %2422 = vmatpush.msra.mxu0 0.0
        %2423 = vmatpush.msra.mxu0 0.0
        %2424 = vmatpush.msra.mxu0 0.0
        %2425 = vmatpush.msra.mxu0 0.0
        %2426 = vmatpush.msra.mxu0 0.0
        %2427 = vmatpush.msra.mxu0 0.0
        %2428 = vmatpush.msra.mxu0 0.0
        %2429 = vmatpush.msra.mxu0 %v652
        %2430 = vmatpush.msra.mxu0 %v651
        %2431 = vmatpush.msra.mxu0 %v650
        %2432 = vmatpush.msra.mxu0 %v649
        %2433 = vmatpush.msra.mxu0 %v648
        %2434 = vmatpush.msra.mxu0 %v647
        %2435 = vmatpush.msra.mxu0 %v646
        %2436 = vmatpush.msra.mxu0 %v645
        %2437 = vmatmul.f32.gmra.mxu0 %v2419
        %v2438 = vpop.f32.mrf.mxu0
        %v2439 = vadd.f32 0.0, %v2438
        %2440 = vdwg.mxu0
        %v2443 = vrot.slane %v2417, 7
        %v2444 = vsel %vm682, %v2443, %v2416
        %v2446 = vmul.f32 %v2439, %v2444
        %v2447 = vsel %vm686, %v2446, 0.0
        %2448 = vadd.xlane.f32.xlu0 %v2447
        %v2449 = vpop.xlane.xlu0 %2448
        %v2450 = vmax.f32 %v2449, 1e-30
        %v2451 = vrcp.pop %v2450
        %v2452 = vmul.f32 %v2446, %v2451
        %v2453 = vlog2.pop %v2451
        %v2454 = vmul.f32 %v2453, 0.6931472
        %v2455 = vsub.f32 %v2415, %v2454
        %v2456 = vld [vmem:[#allocation4 + $0x2d] sm:$0x1]
        %v2457 = vld [vmem:[#allocation4 + $0x6d] sm:$0x1]
        %v2459 = vsel %vm506, %v2452, 0
        %2461 = vmatpush.msra.mxu0 0.0
        %2462 = vmatpush.msra.mxu0 0.0
        %2463 = vmatpush.msra.mxu0 0.0
        %2464 = vmatpush.msra.mxu0 0.0
        %2465 = vmatpush.msra.mxu0 0.0
        %2466 = vmatpush.msra.mxu0 0.0
        %2467 = vmatpush.msra.mxu0 0.0
        %2468 = vmatpush.msra.mxu0 0.0
        %2469 = vmatpush.msra.mxu0 %v652
        %2470 = vmatpush.msra.mxu0 %v651
        %2471 = vmatpush.msra.mxu0 %v650
        %2472 = vmatpush.msra.mxu0 %v649
        %2473 = vmatpush.msra.mxu0 %v648
        %2474 = vmatpush.msra.mxu0 %v647
        %2475 = vmatpush.msra.mxu0 %v646
        %2476 = vmatpush.msra.mxu0 %v645
        %2477 = vmatmul.f32.gmra.mxu0 %v2459
        %v2478 = vpop.f32.mrf.mxu0
        %v2479 = vadd.f32 0.0, %v2478
        %2480 = vdwg.mxu0
        %v2483 = vrot.slane %v2457, 7
        %v2484 = vsel %vm682, %v2483, %v2456
        %v2486 = vmul.f32 %v2479, %v2484
        %v2487 = vsel %vm686, %v2486, 0.0
        %2488 = vadd.xlane.f32.xlu0 %v2487
        %v2489 = vpop.xlane.xlu0 %2488
        %v2490 = vmax.f32 %v2489, 1e-30
        %v2491 = vrcp.pop %v2490
        %v2492 = vmul.f32 %v2486, %v2491
        %v2493 = vlog2.pop %v2491
        %v2494 = vmul.f32 %v2493, 0.6931472
        %v2495 = vsub.f32 %v2455, %v2494
        %v2496 = vld [vmem:[#allocation4 + $0x2e] sm:$0x1]
        %v2497 = vld [vmem:[#allocation4 + $0x6e] sm:$0x1]
        %v2499 = vsel %vm506, %v2492, 0
        %2501 = vmatpush.msra.mxu0 0.0
        %2502 = vmatpush.msra.mxu0 0.0
        %2503 = vmatpush.msra.mxu0 0.0
        %2504 = vmatpush.msra.mxu0 0.0
        %2505 = vmatpush.msra.mxu0 0.0
        %2506 = vmatpush.msra.mxu0 0.0
        %2507 = vmatpush.msra.mxu0 0.0
        %2508 = vmatpush.msra.mxu0 0.0
        %2509 = vmatpush.msra.mxu0 %v652
        %2510 = vmatpush.msra.mxu0 %v651
        %2511 = vmatpush.msra.mxu0 %v650
        %2512 = vmatpush.msra.mxu0 %v649
        %2513 = vmatpush.msra.mxu0 %v648
        %2514 = vmatpush.msra.mxu0 %v647
        %2515 = vmatpush.msra.mxu0 %v646
        %2516 = vmatpush.msra.mxu0 %v645
        %2517 = vmatmul.f32.gmra.mxu0 %v2499
        %v2518 = vpop.f32.mrf.mxu0
        %v2519 = vadd.f32 0.0, %v2518
        %2520 = vdwg.mxu0
        %v2523 = vrot.slane %v2497, 7
        %v2524 = vsel %vm682, %v2523, %v2496
        %v2526 = vmul.f32 %v2519, %v2524
        %v2527 = vsel %vm686, %v2526, 0.0
        %2528 = vadd.xlane.f32.xlu0 %v2527
        %v2529 = vpop.xlane.xlu0 %2528
        %v2530 = vmax.f32 %v2529, 1e-30
        %v2531 = vrcp.pop %v2530
        %v2532 = vmul.f32 %v2526, %v2531
        %v2533 = vlog2.pop %v2531
        %v2534 = vmul.f32 %v2533, 0.6931472
        %v2535 = vsub.f32 %v2495, %v2534
        %v2536 = vld [vmem:[#allocation4 + $0x2f] sm:$0x1]
        %v2537 = vld [vmem:[#allocation4 + $0x6f] sm:$0x1]
        %v2539 = vsel %vm506, %v2532, 0
        %2541 = vmatpush.msra.mxu0 0.0
        %2542 = vmatpush.msra.mxu0 0.0
        %2543 = vmatpush.msra.mxu0 0.0
        %2544 = vmatpush.msra.mxu0 0.0
        %2545 = vmatpush.msra.mxu0 0.0
        %2546 = vmatpush.msra.mxu0 0.0
        %2547 = vmatpush.msra.mxu0 0.0
        %2548 = vmatpush.msra.mxu0 0.0
        %2549 = vmatpush.msra.mxu0 %v652
        %2550 = vmatpush.msra.mxu0 %v651
        %2551 = vmatpush.msra.mxu0 %v650
        %2552 = vmatpush.msra.mxu0 %v649
        %2553 = vmatpush.msra.mxu0 %v648
        %2554 = vmatpush.msra.mxu0 %v647
        %2555 = vmatpush.msra.mxu0 %v646
        %2556 = vmatpush.msra.mxu0 %v645
        %2557 = vmatmul.f32.gmra.mxu0 %v2539
        %v2558 = vpop.f32.mrf.mxu0
        %v2559 = vadd.f32 0.0, %v2558
        %2560 = vdwg.mxu0
        %v2563 = vrot.slane %v2537, 7
        %v2564 = vsel %vm682, %v2563, %v2536
        %v2566 = vmul.f32 %v2559, %v2564
        %v2567 = vsel %vm686, %v2566, 0.0
        %2568 = vadd.xlane.f32.xlu0 %v2567
        %v2569 = vpop.xlane.xlu0 %2568
        %v2570 = vmax.f32 %v2569, 1e-30
        %v2571 = vrcp.pop %v2570
        %v2572 = vmul.f32 %v2566, %v2571
        %v2573 = vlog2.pop %v2571
        %v2574 = vmul.f32 %v2573, 0.6931472
        %v2575 = vsub.f32 %v2535, %v2574
        %v2576 = vld [vmem:[#allocation4 + $0x30] sm:$0x1]
        %v2577 = vld [vmem:[#allocation4 + $0x70] sm:$0x1]
        %v2579 = vsel %vm506, %v2572, 0
        %2581 = vmatpush.msra.mxu0 0.0
        %2582 = vmatpush.msra.mxu0 0.0
        %2583 = vmatpush.msra.mxu0 0.0
        %2584 = vmatpush.msra.mxu0 0.0
        %2585 = vmatpush.msra.mxu0 0.0
        %2586 = vmatpush.msra.mxu0 0.0
        %2587 = vmatpush.msra.mxu0 0.0
        %2588 = vmatpush.msra.mxu0 0.0
        %2589 = vmatpush.msra.mxu0 %v652
        %2590 = vmatpush.msra.mxu0 %v651
        %2591 = vmatpush.msra.mxu0 %v650
        %2592 = vmatpush.msra.mxu0 %v649
        %2593 = vmatpush.msra.mxu0 %v648
        %2594 = vmatpush.msra.mxu0 %v647
        %2595 = vmatpush.msra.mxu0 %v646
        %2596 = vmatpush.msra.mxu0 %v645
        %2597 = vmatmul.f32.gmra.mxu0 %v2579
        %v2598 = vpop.f32.mrf.mxu0
        %v2599 = vadd.f32 0.0, %v2598
        %2600 = vdwg.mxu0
        %v2603 = vrot.slane %v2577, 7
        %v2604 = vsel %vm682, %v2603, %v2576
        %v2606 = vmul.f32 %v2599, %v2604
        %v2607 = vsel %vm686, %v2606, 0.0
        %2608 = vadd.xlane.f32.xlu0 %v2607
        %v2609 = vpop.xlane.xlu0 %2608
        %v2610 = vmax.f32 %v2609, 1e-30
        %v2611 = vrcp.pop %v2610
        %v2612 = vmul.f32 %v2606, %v2611
        %v2613 = vlog2.pop %v2611
        %v2614 = vmul.f32 %v2613, 0.6931472
        %v2615 = vsub.f32 %v2575, %v2614
        %v2616 = vld [vmem:[#allocation4 + $0x31] sm:$0x1]
        %v2617 = vld [vmem:[#allocation4 + $0x71] sm:$0x1]
        %v2619 = vsel %vm506, %v2612, 0
        %2621 = vmatpush.msra.mxu0 0.0
        %2622 = vmatpush.msra.mxu0 0.0
        %2623 = vmatpush.msra.mxu0 0.0
        %2624 = vmatpush.msra.mxu0 0.0
        %2625 = vmatpush.msra.mxu0 0.0
        %2626 = vmatpush.msra.mxu0 0.0
        %2627 = vmatpush.msra.mxu0 0.0
        %2628 = vmatpush.msra.mxu0 0.0
        %2629 = vmatpush.msra.mxu0 %v652
        %2630 = vmatpush.msra.mxu0 %v651
        %2631 = vmatpush.msra.mxu0 %v650
        %2632 = vmatpush.msra.mxu0 %v649
        %2633 = vmatpush.msra.mxu0 %v648
        %2634 = vmatpush.msra.mxu0 %v647
        %2635 = vmatpush.msra.mxu0 %v646
        %2636 = vmatpush.msra.mxu0 %v645
        %2637 = vmatmul.f32.gmra.mxu0 %v2619
        %v2638 = vpop.f32.mrf.mxu0
        %v2639 = vadd.f32 0.0, %v2638
        %2640 = vdwg.mxu0
        %v2643 = vrot.slane %v2617, 7
        %v2644 = vsel %vm682, %v2643, %v2616
        %v2646 = vmul.f32 %v2639, %v2644
        %v2647 = vsel %vm686, %v2646, 0.0
        %2648 = vadd.xlane.f32.xlu0 %v2647
        %v2649 = vpop.xlane.xlu0 %2648
        %v2650 = vmax.f32 %v2649, 1e-30
        %v2651 = vrcp.pop %v2650
        %v2652 = vmul.f32 %v2646, %v2651
        %v2653 = vlog2.pop %v2651
        %v2654 = vmul.f32 %v2653, 0.6931472
        %v2655 = vsub.f32 %v2615, %v2654
        %v2656 = vld [vmem:[#allocation4 + $0x32] sm:$0x1]
        %v2657 = vld [vmem:[#allocation4 + $0x72] sm:$0x1]
        %v2659 = vsel %vm506, %v2652, 0
        %2661 = vmatpush.msra.mxu0 0.0
        %2662 = vmatpush.msra.mxu0 0.0
        %2663 = vmatpush.msra.mxu0 0.0
        %2664 = vmatpush.msra.mxu0 0.0
        %2665 = vmatpush.msra.mxu0 0.0
        %2666 = vmatpush.msra.mxu0 0.0
        %2667 = vmatpush.msra.mxu0 0.0
        %2668 = vmatpush.msra.mxu0 0.0
        %2669 = vmatpush.msra.mxu0 %v652
        %2670 = vmatpush.msra.mxu0 %v651
        %2671 = vmatpush.msra.mxu0 %v650
        %2672 = vmatpush.msra.mxu0 %v649
        %2673 = vmatpush.msra.mxu0 %v648
        %2674 = vmatpush.msra.mxu0 %v647
        %2675 = vmatpush.msra.mxu0 %v646
        %2676 = vmatpush.msra.mxu0 %v645
        %2677 = vmatmul.f32.gmra.mxu0 %v2659
        %v2678 = vpop.f32.mrf.mxu0
        %v2679 = vadd.f32 0.0, %v2678
        %2680 = vdwg.mxu0
        %v2683 = vrot.slane %v2657, 7
        %v2684 = vsel %vm682, %v2683, %v2656
        %v2686 = vmul.f32 %v2679, %v2684
        %v2687 = vsel %vm686, %v2686, 0.0
        %2688 = vadd.xlane.f32.xlu0 %v2687
        %v2689 = vpop.xlane.xlu0 %2688
        %v2690 = vmax.f32 %v2689, 1e-30
        %v2691 = vrcp.pop %v2690
        %v2692 = vmul.f32 %v2686, %v2691
        %v2693 = vlog2.pop %v2691
        %v2694 = vmul.f32 %v2693, 0.6931472
        %v2695 = vsub.f32 %v2655, %v2694
        %v2696 = vld [vmem:[#allocation4 + $0x33] sm:$0x1]
        %v2697 = vld [vmem:[#allocation4 + $0x73] sm:$0x1]
        %v2699 = vsel %vm506, %v2692, 0
        %2701 = vmatpush.msra.mxu0 0.0
        %2702 = vmatpush.msra.mxu0 0.0
        %2703 = vmatpush.msra.mxu0 0.0
        %2704 = vmatpush.msra.mxu0 0.0
        %2705 = vmatpush.msra.mxu0 0.0
        %2706 = vmatpush.msra.mxu0 0.0
        %2707 = vmatpush.msra.mxu0 0.0
        %2708 = vmatpush.msra.mxu0 0.0
        %2709 = vmatpush.msra.mxu0 %v652
        %2710 = vmatpush.msra.mxu0 %v651
        %2711 = vmatpush.msra.mxu0 %v650
        %2712 = vmatpush.msra.mxu0 %v649
        %2713 = vmatpush.msra.mxu0 %v648
        %2714 = vmatpush.msra.mxu0 %v647
        %2715 = vmatpush.msra.mxu0 %v646
        %2716 = vmatpush.msra.mxu0 %v645
        %2717 = vmatmul.f32.gmra.mxu0 %v2699
        %v2718 = vpop.f32.mrf.mxu0
        %v2719 = vadd.f32 0.0, %v2718
        %2720 = vdwg.mxu0
        %v2723 = vrot.slane %v2697, 7
        %v2724 = vsel %vm682, %v2723, %v2696
        %v2726 = vmul.f32 %v2719, %v2724
        %v2727 = vsel %vm686, %v2726, 0.0
        %2728 = vadd.xlane.f32.xlu0 %v2727
        %v2729 = vpop.xlane.xlu0 %2728
        %v2730 = vmax.f32 %v2729, 1e-30
        %v2731 = vrcp.pop %v2730
        %v2732 = vmul.f32 %v2726, %v2731
        %v2733 = vlog2.pop %v2731
        %v2734 = vmul.f32 %v2733, 0.6931472
        %v2735 = vsub.f32 %v2695, %v2734
        %v2736 = vld [vmem:[#allocation4 + $0x34] sm:$0x1]
        %v2737 = vld [vmem:[#allocation4 + $0x74] sm:$0x1]
        %v2739 = vsel %vm506, %v2732, 0
        %2741 = vmatpush.msra.mxu0 0.0
        %2742 = vmatpush.msra.mxu0 0.0
        %2743 = vmatpush.msra.mxu0 0.0
        %2744 = vmatpush.msra.mxu0 0.0
        %2745 = vmatpush.msra.mxu0 0.0
        %2746 = vmatpush.msra.mxu0 0.0
        %2747 = vmatpush.msra.mxu0 0.0
        %2748 = vmatpush.msra.mxu0 0.0
        %2749 = vmatpush.msra.mxu0 %v652
        %2750 = vmatpush.msra.mxu0 %v651
        %2751 = vmatpush.msra.mxu0 %v650
        %2752 = vmatpush.msra.mxu0 %v649
        %2753 = vmatpush.msra.mxu0 %v648
        %2754 = vmatpush.msra.mxu0 %v647
        %2755 = vmatpush.msra.mxu0 %v646
        %2756 = vmatpush.msra.mxu0 %v645
        %2757 = vmatmul.f32.gmra.mxu0 %v2739
        %v2758 = vpop.f32.mrf.mxu0
        %v2759 = vadd.f32 0.0, %v2758
        %2760 = vdwg.mxu0
        %v2763 = vrot.slane %v2737, 7
        %v2764 = vsel %vm682, %v2763, %v2736
        %v2766 = vmul.f32 %v2759, %v2764
        %v2767 = vsel %vm686, %v2766, 0.0
        %2768 = vadd.xlane.f32.xlu0 %v2767
        %v2769 = vpop.xlane.xlu0 %2768
        %v2770 = vmax.f32 %v2769, 1e-30
        %v2771 = vrcp.pop %v2770
        %v2772 = vmul.f32 %v2766, %v2771
        %v2773 = vlog2.pop %v2771
        %v2774 = vmul.f32 %v2773, 0.6931472
        %v2775 = vsub.f32 %v2735, %v2774
        %v2776 = vld [vmem:[#allocation4 + $0x35] sm:$0x1]
        %v2777 = vld [vmem:[#allocation4 + $0x75] sm:$0x1]
        %v2779 = vsel %vm506, %v2772, 0
        %2781 = vmatpush.msra.mxu0 0.0
        %2782 = vmatpush.msra.mxu0 0.0
        %2783 = vmatpush.msra.mxu0 0.0
        %2784 = vmatpush.msra.mxu0 0.0
        %2785 = vmatpush.msra.mxu0 0.0
        %2786 = vmatpush.msra.mxu0 0.0
        %2787 = vmatpush.msra.mxu0 0.0
        %2788 = vmatpush.msra.mxu0 0.0
        %2789 = vmatpush.msra.mxu0 %v652
        %2790 = vmatpush.msra.mxu0 %v651
        %2791 = vmatpush.msra.mxu0 %v650
        %2792 = vmatpush.msra.mxu0 %v649
        %2793 = vmatpush.msra.mxu0 %v648
        %2794 = vmatpush.msra.mxu0 %v647
        %2795 = vmatpush.msra.mxu0 %v646
        %2796 = vmatpush.msra.mxu0 %v645
        %2797 = vmatmul.f32.gmra.mxu0 %v2779
        %v2798 = vpop.f32.mrf.mxu0
        %v2799 = vadd.f32 0.0, %v2798
        %2800 = vdwg.mxu0
        %v2803 = vrot.slane %v2777, 7
        %v2804 = vsel %vm682, %v2803, %v2776
        %v2806 = vmul.f32 %v2799, %v2804
        %v2807 = vsel %vm686, %v2806, 0.0
        %2808 = vadd.xlane.f32.xlu0 %v2807
        %v2809 = vpop.xlane.xlu0 %2808
        %v2810 = vmax.f32 %v2809, 1e-30
        %v2811 = vrcp.pop %v2810
        %v2812 = vmul.f32 %v2806, %v2811
        %v2813 = vlog2.pop %v2811
        %v2814 = vmul.f32 %v2813, 0.6931472
        %v2815 = vsub.f32 %v2775, %v2814
        %v2816 = vld [vmem:[#allocation4 + $0x36] sm:$0x1]
        %v2817 = vld [vmem:[#allocation4 + $0x76] sm:$0x1]
        %v2819 = vsel %vm506, %v2812, 0
        %2821 = vmatpush.msra.mxu0 0.0
        %2822 = vmatpush.msra.mxu0 0.0
        %2823 = vmatpush.msra.mxu0 0.0
        %2824 = vmatpush.msra.mxu0 0.0
        %2825 = vmatpush.msra.mxu0 0.0
        %2826 = vmatpush.msra.mxu0 0.0
        %2827 = vmatpush.msra.mxu0 0.0
        %2828 = vmatpush.msra.mxu0 0.0
        %2829 = vmatpush.msra.mxu0 %v652
        %2830 = vmatpush.msra.mxu0 %v651
        %2831 = vmatpush.msra.mxu0 %v650
        %2832 = vmatpush.msra.mxu0 %v649
        %2833 = vmatpush.msra.mxu0 %v648
        %2834 = vmatpush.msra.mxu0 %v647
        %2835 = vmatpush.msra.mxu0 %v646
        %2836 = vmatpush.msra.mxu0 %v645
        %2837 = vmatmul.f32.gmra.mxu0 %v2819
        %v2838 = vpop.f32.mrf.mxu0
        %v2839 = vadd.f32 0.0, %v2838
        %2840 = vdwg.mxu0
        %v2843 = vrot.slane %v2817, 7
        %v2844 = vsel %vm682, %v2843, %v2816
        %v2846 = vmul.f32 %v2839, %v2844
        %v2847 = vsel %vm686, %v2846, 0.0
        %2848 = vadd.xlane.f32.xlu0 %v2847
        %v2849 = vpop.xlane.xlu0 %2848
        %v2850 = vmax.f32 %v2849, 1e-30
        %v2851 = vrcp.pop %v2850
        %v2852 = vmul.f32 %v2846, %v2851
        %v2853 = vlog2.pop %v2851
        %v2854 = vmul.f32 %v2853, 0.6931472
        %v2855 = vsub.f32 %v2815, %v2854
        %v2856 = vld [vmem:[#allocation4 + $0x37] sm:$0x1]
        %v2857 = vld [vmem:[#allocation4 + $0x77] sm:$0x1]
        %v2859 = vsel %vm506, %v2852, 0
        %2861 = vmatpush.msra.mxu0 0.0
        %2862 = vmatpush.msra.mxu0 0.0
        %2863 = vmatpush.msra.mxu0 0.0
        %2864 = vmatpush.msra.mxu0 0.0
        %2865 = vmatpush.msra.mxu0 0.0
        %2866 = vmatpush.msra.mxu0 0.0
        %2867 = vmatpush.msra.mxu0 0.0
        %2868 = vmatpush.msra.mxu0 0.0
        %2869 = vmatpush.msra.mxu0 %v652
        %2870 = vmatpush.msra.mxu0 %v651
        %2871 = vmatpush.msra.mxu0 %v650
        %2872 = vmatpush.msra.mxu0 %v649
        %2873 = vmatpush.msra.mxu0 %v648
        %2874 = vmatpush.msra.mxu0 %v647
        %2875 = vmatpush.msra.mxu0 %v646
        %2876 = vmatpush.msra.mxu0 %v645
        %2877 = vmatmul.f32.gmra.mxu0 %v2859
        %v2878 = vpop.f32.mrf.mxu0
        %v2879 = vadd.f32 0.0, %v2878
        %2880 = vdwg.mxu0
        %v2883 = vrot.slane %v2857, 7
        %v2884 = vsel %vm682, %v2883, %v2856
        %v2886 = vmul.f32 %v2879, %v2884
        %v2887 = vsel %vm686, %v2886, 0.0
        %2888 = vadd.xlane.f32.xlu0 %v2887
        %v2889 = vpop.xlane.xlu0 %2888
        %v2890 = vmax.f32 %v2889, 1e-30
        %v2891 = vrcp.pop %v2890
        %v2892 = vmul.f32 %v2886, %v2891
        %v2893 = vlog2.pop %v2891
        %v2894 = vmul.f32 %v2893, 0.6931472
        %v2895 = vsub.f32 %v2855, %v2894
        %v2896 = vld [vmem:[#allocation4 + $0x38] sm:$0x1]
        %v2897 = vld [vmem:[#allocation4 + $0x78] sm:$0x1]
        %v2899 = vsel %vm506, %v2892, 0
        %2901 = vmatpush.msra.mxu0 0.0
        %2902 = vmatpush.msra.mxu0 0.0
        %2903 = vmatpush.msra.mxu0 0.0
        %2904 = vmatpush.msra.mxu0 0.0
        %2905 = vmatpush.msra.mxu0 0.0
        %2906 = vmatpush.msra.mxu0 0.0
        %2907 = vmatpush.msra.mxu0 0.0
        %2908 = vmatpush.msra.mxu0 0.0
        %2909 = vmatpush.msra.mxu0 %v652
        %2910 = vmatpush.msra.mxu0 %v651
        %2911 = vmatpush.msra.mxu0 %v650
        %2912 = vmatpush.msra.mxu0 %v649
        %2913 = vmatpush.msra.mxu0 %v648
        %2914 = vmatpush.msra.mxu0 %v647
        %2915 = vmatpush.msra.mxu0 %v646
        %2916 = vmatpush.msra.mxu0 %v645
        %2917 = vmatmul.f32.gmra.mxu0 %v2899
        %v2918 = vpop.f32.mrf.mxu0
        %v2919 = vadd.f32 0.0, %v2918
        %2920 = vdwg.mxu0
        %v2923 = vrot.slane %v2897, 7
        %v2924 = vsel %vm682, %v2923, %v2896
        %v2926 = vmul.f32 %v2919, %v2924
        %v2927 = vsel %vm686, %v2926, 0.0
        %2928 = vadd.xlane.f32.xlu0 %v2927
        %v2929 = vpop.xlane.xlu0 %2928
        %v2930 = vmax.f32 %v2929, 1e-30
        %v2931 = vrcp.pop %v2930
        %v2932 = vmul.f32 %v2926, %v2931
        %v2933 = vlog2.pop %v2931
        %v2934 = vmul.f32 %v2933, 0.6931472
        %v2935 = vsub.f32 %v2895, %v2934
        %v2936 = vld [vmem:[#allocation4 + $0x39] sm:$0x1]
        %v2937 = vld [vmem:[#allocation4 + $0x79] sm:$0x1]
        %v2939 = vsel %vm506, %v2932, 0
        %2941 = vmatpush.msra.mxu0 0.0
        %2942 = vmatpush.msra.mxu0 0.0
        %2943 = vmatpush.msra.mxu0 0.0
        %2944 = vmatpush.msra.mxu0 0.0
        %2945 = vmatpush.msra.mxu0 0.0
        %2946 = vmatpush.msra.mxu0 0.0
        %2947 = vmatpush.msra.mxu0 0.0
        %2948 = vmatpush.msra.mxu0 0.0
        %2949 = vmatpush.msra.mxu0 %v652
        %2950 = vmatpush.msra.mxu0 %v651
        %2951 = vmatpush.msra.mxu0 %v650
        %2952 = vmatpush.msra.mxu0 %v649
        %2953 = vmatpush.msra.mxu0 %v648
        %2954 = vmatpush.msra.mxu0 %v647
        %2955 = vmatpush.msra.mxu0 %v646
        %2956 = vmatpush.msra.mxu0 %v645
        %2957 = vmatmul.f32.gmra.mxu0 %v2939
        %v2958 = vpop.f32.mrf.mxu0
        %v2959 = vadd.f32 0.0, %v2958
        %2960 = vdwg.mxu0
        %v2963 = vrot.slane %v2937, 7
        %v2964 = vsel %vm682, %v2963, %v2936
        %v2966 = vmul.f32 %v2959, %v2964
        %v2967 = vsel %vm686, %v2966, 0.0
        %2968 = vadd.xlane.f32.xlu0 %v2967
        %v2969 = vpop.xlane.xlu0 %2968
        %v2970 = vmax.f32 %v2969, 1e-30
        %v2971 = vrcp.pop %v2970
        %v2972 = vmul.f32 %v2966, %v2971
        %v2973 = vlog2.pop %v2971
        %v2974 = vmul.f32 %v2973, 0.6931472
        %v2975 = vsub.f32 %v2935, %v2974
        %v2976 = vld [vmem:[#allocation4 + $0x3a] sm:$0x1]
        %v2977 = vld [vmem:[#allocation4 + $0x7a] sm:$0x1]
        %v2979 = vsel %vm506, %v2972, 0
        %2981 = vmatpush.msra.mxu0 0.0
        %2982 = vmatpush.msra.mxu0 0.0
        %2983 = vmatpush.msra.mxu0 0.0
        %2984 = vmatpush.msra.mxu0 0.0
        %2985 = vmatpush.msra.mxu0 0.0
        %2986 = vmatpush.msra.mxu0 0.0
        %2987 = vmatpush.msra.mxu0 0.0
        %2988 = vmatpush.msra.mxu0 0.0
        %2989 = vmatpush.msra.mxu0 %v652
        %2990 = vmatpush.msra.mxu0 %v651
        %2991 = vmatpush.msra.mxu0 %v650
        %2992 = vmatpush.msra.mxu0 %v649
        %2993 = vmatpush.msra.mxu0 %v648
        %2994 = vmatpush.msra.mxu0 %v647
        %2995 = vmatpush.msra.mxu0 %v646
        %2996 = vmatpush.msra.mxu0 %v645
        %2997 = vmatmul.f32.gmra.mxu0 %v2979
        %v2998 = vpop.f32.mrf.mxu0
        %v2999 = vadd.f32 0.0, %v2998
        %3000 = vdwg.mxu0
        %v3003 = vrot.slane %v2977, 7
        %v3004 = vsel %vm682, %v3003, %v2976
        %v3006 = vmul.f32 %v2999, %v3004
        %v3007 = vsel %vm686, %v3006, 0.0
        %3008 = vadd.xlane.f32.xlu0 %v3007
        %v3009 = vpop.xlane.xlu0 %3008
        %v3010 = vmax.f32 %v3009, 1e-30
        %v3011 = vrcp.pop %v3010
        %v3012 = vmul.f32 %v3006, %v3011
        %v3013 = vlog2.pop %v3011
        %v3014 = vmul.f32 %v3013, 0.6931472
        %v3015 = vsub.f32 %v2975, %v3014
        %v3016 = vld [vmem:[#allocation4 + $0x3b] sm:$0x1]
        %v3017 = vld [vmem:[#allocation4 + $0x7b] sm:$0x1]
        %v3019 = vsel %vm506, %v3012, 0
        %3021 = vmatpush.msra.mxu0 0.0
        %3022 = vmatpush.msra.mxu0 0.0
        %3023 = vmatpush.msra.mxu0 0.0
        %3024 = vmatpush.msra.mxu0 0.0
        %3025 = vmatpush.msra.mxu0 0.0
        %3026 = vmatpush.msra.mxu0 0.0
        %3027 = vmatpush.msra.mxu0 0.0
        %3028 = vmatpush.msra.mxu0 0.0
        %3029 = vmatpush.msra.mxu0 %v652
        %3030 = vmatpush.msra.mxu0 %v651
        %3031 = vmatpush.msra.mxu0 %v650
        %3032 = vmatpush.msra.mxu0 %v649
        %3033 = vmatpush.msra.mxu0 %v648
        %3034 = vmatpush.msra.mxu0 %v647
        %3035 = vmatpush.msra.mxu0 %v646
        %3036 = vmatpush.msra.mxu0 %v645
        %3037 = vmatmul.f32.gmra.mxu0 %v3019
        %v3038 = vpop.f32.mrf.mxu0
        %v3039 = vadd.f32 0.0, %v3038
        %3040 = vdwg.mxu0
        %v3043 = vrot.slane %v3017, 7
        %v3044 = vsel %vm682, %v3043, %v3016
        %v3046 = vmul.f32 %v3039, %v3044
        %v3047 = vsel %vm686, %v3046, 0.0
        %3048 = vadd.xlane.f32.xlu0 %v3047
        %v3049 = vpop.xlane.xlu0 %3048
        %v3050 = vmax.f32 %v3049, 1e-30
        %v3051 = vrcp.pop %v3050
        %v3052 = vmul.f32 %v3046, %v3051
        %v3053 = vlog2.pop %v3051
        %v3054 = vmul.f32 %v3053, 0.6931472
        %v3055 = vsub.f32 %v3015, %v3054
        %v3056 = vld [vmem:[#allocation4 + $0x3c] sm:$0x1]
        %v3057 = vld [vmem:[#allocation4 + $0x7c] sm:$0x1]
        %v3059 = vsel %vm506, %v3052, 0
        %3061 = vmatpush.msra.mxu0 0.0
        %3062 = vmatpush.msra.mxu0 0.0
        %3063 = vmatpush.msra.mxu0 0.0
        %3064 = vmatpush.msra.mxu0 0.0
        %3065 = vmatpush.msra.mxu0 0.0
        %3066 = vmatpush.msra.mxu0 0.0
        %3067 = vmatpush.msra.mxu0 0.0
        %3068 = vmatpush.msra.mxu0 0.0
        %3069 = vmatpush.msra.mxu0 %v652
        %3070 = vmatpush.msra.mxu0 %v651
        %3071 = vmatpush.msra.mxu0 %v650
        %3072 = vmatpush.msra.mxu0 %v649
        %3073 = vmatpush.msra.mxu0 %v648
        %3074 = vmatpush.msra.mxu0 %v647
        %3075 = vmatpush.msra.mxu0 %v646
        %3076 = vmatpush.msra.mxu0 %v645
        %3077 = vmatmul.f32.gmra.mxu0 %v3059
        %v3078 = vpop.f32.mrf.mxu0
        %v3079 = vadd.f32 0.0, %v3078
        %3080 = vdwg.mxu0
        %v3083 = vrot.slane %v3057, 7
        %v3084 = vsel %vm682, %v3083, %v3056
        %v3086 = vmul.f32 %v3079, %v3084
        %v3087 = vsel %vm686, %v3086, 0.0
        %3088 = vadd.xlane.f32.xlu0 %v3087
        %v3089 = vpop.xlane.xlu0 %3088
        %v3090 = vmax.f32 %v3089, 1e-30
        %v3091 = vrcp.pop %v3090
        %v3092 = vmul.f32 %v3086, %v3091
        %v3093 = vlog2.pop %v3091
        %v3094 = vmul.f32 %v3093, 0.6931472
        %v3095 = vsub.f32 %v3055, %v3094
        %v3096 = vld [vmem:[#allocation4 + $0x3d] sm:$0x1]
        %v3097 = vld [vmem:[#allocation4 + $0x7d] sm:$0x1]
        %v3099 = vsel %vm506, %v3092, 0
        %3101 = vmatpush.msra.mxu0 0.0
        %3102 = vmatpush.msra.mxu0 0.0
        %3103 = vmatpush.msra.mxu0 0.0
        %3104 = vmatpush.msra.mxu0 0.0
        %3105 = vmatpush.msra.mxu0 0.0
        %3106 = vmatpush.msra.mxu0 0.0
        %3107 = vmatpush.msra.mxu0 0.0
        %3108 = vmatpush.msra.mxu0 0.0
        %3109 = vmatpush.msra.mxu0 %v652
        %3110 = vmatpush.msra.mxu0 %v651
        %3111 = vmatpush.msra.mxu0 %v650
        %3112 = vmatpush.msra.mxu0 %v649
        %3113 = vmatpush.msra.mxu0 %v648
        %3114 = vmatpush.msra.mxu0 %v647
        %3115 = vmatpush.msra.mxu0 %v646
        %3116 = vmatpush.msra.mxu0 %v645
        %3117 = vmatmul.f32.gmra.mxu0 %v3099
        %v3118 = vpop.f32.mrf.mxu0
        %v3119 = vadd.f32 0.0, %v3118
        %3120 = vdwg.mxu0
        %v3123 = vrot.slane %v3097, 7
        %v3124 = vsel %vm682, %v3123, %v3096
        %v3126 = vmul.f32 %v3119, %v3124
        %v3127 = vsel %vm686, %v3126, 0.0
        %3128 = vadd.xlane.f32.xlu0 %v3127
        %v3129 = vpop.xlane.xlu0 %3128
        %v3130 = vmax.f32 %v3129, 1e-30
        %v3131 = vrcp.pop %v3130
        %v3132 = vmul.f32 %v3126, %v3131
        %v3133 = vlog2.pop %v3131
        %v3134 = vmul.f32 %v3133, 0.6931472
        %v3135 = vsub.f32 %v3095, %v3134
        %v3136 = vld [vmem:[#allocation4 + $0x3e] sm:$0x1]
        %v3137 = vld [vmem:[#allocation4 + $0x7e] sm:$0x1]
        %v3139 = vsel %vm506, %v3132, 0
        %3141 = vmatpush.msra.mxu0 0.0
        %3142 = vmatpush.msra.mxu0 0.0
        %3143 = vmatpush.msra.mxu0 0.0
        %3144 = vmatpush.msra.mxu0 0.0
        %3145 = vmatpush.msra.mxu0 0.0
        %3146 = vmatpush.msra.mxu0 0.0
        %3147 = vmatpush.msra.mxu0 0.0
        %3148 = vmatpush.msra.mxu0 0.0
        %3149 = vmatpush.msra.mxu0 %v652
        %3150 = vmatpush.msra.mxu0 %v651
        %3151 = vmatpush.msra.mxu0 %v650
        %3152 = vmatpush.msra.mxu0 %v649
        %3153 = vmatpush.msra.mxu0 %v648
        %3154 = vmatpush.msra.mxu0 %v647
        %3155 = vmatpush.msra.mxu0 %v646
        %3156 = vmatpush.msra.mxu0 %v645
        %3157 = vmatmul.f32.gmra.mxu0 %v3139
        %v3158 = vpop.f32.mrf.mxu0
        %v3159 = vadd.f32 0.0, %v3158
        %3160 = vdwg.mxu0
        %v3163 = vrot.slane %v3137, 7
        %v3164 = vsel %vm682, %v3163, %v3136
        %v3166 = vmul.f32 %v3159, %v3164
        %v3167 = vsel %vm686, %v3166, 0.0
        %3168 = vadd.xlane.f32.xlu0 %v3167
        %v3169 = vpop.xlane.xlu0 %3168
        %v3170 = vmax.f32 %v3169, 1e-30
        %v3171 = vrcp.pop %v3170
        %v3172 = vmul.f32 %v3166, %v3171
        %v3173 = vlog2.pop %v3171
        %v3174 = vmul.f32 %v3173, 0.6931472
        %v3175 = vsub.f32 %v3135, %v3174
        %v3176 = vld [vmem:[#allocation4 + $0x3f] sm:$0x1]
        %v3177 = vld [vmem:[#allocation4 + $0x7f] sm:$0x1]
        %v3179 = vsel %vm506, %v3172, 0
        %3181 = vmatpush.msra.mxu0 0.0
        %3182 = vmatpush.msra.mxu0 0.0
        %3183 = vmatpush.msra.mxu0 0.0
        %3184 = vmatpush.msra.mxu0 0.0
        %3185 = vmatpush.msra.mxu0 0.0
        %3186 = vmatpush.msra.mxu0 0.0
        %3187 = vmatpush.msra.mxu0 0.0
        %3188 = vmatpush.msra.mxu0 0.0
        %3189 = vmatpush.msra.mxu0 %v652
        %3190 = vmatpush.msra.mxu0 %v651
        %3191 = vmatpush.msra.mxu0 %v650
        %3192 = vmatpush.msra.mxu0 %v649
        %3193 = vmatpush.msra.mxu0 %v648
        %3194 = vmatpush.msra.mxu0 %v647
        %3195 = vmatpush.msra.mxu0 %v646
        %3196 = vmatpush.msra.mxu0 %v645
        %3197 = vmatmul.f32.gmra.mxu0 %v3179
        %v3198 = vpop.f32.mrf.mxu0
        %v3199 = vadd.f32 0.0, %v3198
        %3200 = vdwg.mxu0
        %v3203 = vrot.slane %v3177, 7
        %v3204 = vsel %vm682, %v3203, %v3176
        %v3206 = vmul.f32 %v3199, %v3204
        %v3207 = vsel %vm686, %v3206, 0.0
        %3208 = vadd.xlane.f32.xlu0 %v3207
        %v3209 = vpop.xlane.xlu0 %3208
        %v3210 = vmax.f32 %v3209, 1e-30
        %v3211 = vrcp.pop %v3210
        %v3212 = vmul.f32 %v3206, %v3211
        %v3213 = vlog2.pop %v3211
        %v3214 = vmul.f32 %v3213, 0.6931472
        %v3215 = vsub.f32 %v3175, %v3214
        %3216 = vst.msk [vmem:[#allocation2] sm:$0x3] %vm686, %v3212
        %v3217 = vld [vmem:[#allocation3] sm:$0x3]
        %v3218 = vadd.f32 %v3217, %v3215
        %v3221 = vsel %vm682, %v644, %v631
        %v3223 = vadd.f32 %v3218, %v3221
        %vm3224 = vcmask 1024
        %3225 = vst.msk [vmem:[#allocation3] sm:$0x3] %vm3224, %v3223
        %p3226 = scmp.eq.s32.totalorder %s18, 1
        // Predicated region
        $region90: #{tpu_custom_call.1} parent=80 // pred_check
          %p3227 = pneg %p3226
        $region91: #{tpu_custom_call.1} parent=80 // pred_check_branch
          %3229 = sbr.rel (%p3227) target = $region93
        $region92: #{tpu_custom_call.1} parent=80 // pred_region
          %v3230 = vld [vmem:[#allocation2] sm:$0x3]
          %v3231 = vld [vmem:[%s5] sm:$0x1]
          %v3233 = vperm.slane %v3231, 0
          %v3235 = vmul.f32 %v3230, %v3233
          %v3236 = vsel %vm686, %v3235, 0.0
          %3237 = vadd.xlane.f32.xlu0 %v3236
          %v3238 = vpop.xlane.xlu0 %3237
          %v3239 = vld [vmem:[#allocation3] sm:$0x3]
          %v3240 = vlog2.pop %v3238
          %v3241 = vmul.f32 %v3240, 0.6931472
          %v3242 = vadd.f32 %v3239, %v3241
          %v3243 = vsel %vm3224, %v3242, 0.0
          %3244 = vadd.xlane.f32.xlu0 %v3243
          %v3245 = vpop.xlane.xlu0 %3244
          %v3246 = vrot.slane %v3245, 4
          %v3247 = vadd.f32 %v3245, %v3246
          %v3248 = vrot.slane %v3247, 2
          %v3249 = vadd.f32 %v3247, %v3248
          %v3250 = vrot.slane %v3249, 1
          %v3251 = vadd.f32 %v3249, %v3250
          %s3252 = vtos %v3251
          %s3253 = ssub.f32 0.0, %s3252
          %v3254 = vstv %s3253
          %vm3255 = vcmask 0
          %3256 = vst.msk [vmem:[#allocation6] sm:$0x1] %vm3255, %v3254
        $region93: #{tpu_custom_call.1} parent=80 // pred_fallthru
          _
        // Predicated region
        $region94: #{tpu_custom_call.1} parent=80 // pred_check
          %p3257 = pneg %p162
        $region95: #{tpu_custom_call.1} parent=80 // pred_check_branch
          %3259 = sbr.rel (%p3257) target = $region97
        $region96: #{tpu_custom_call.1} parent=80 // pred_region
          %3261 = vsyncadd [#allocation7], 0
          %s3263 = sshll.u32 [#allocation6], 4
          %s3264 = int_to_ptr.vmem [resolvable:$true] %s3263
          %s3265 = sshll.u32 %s6, 4
          %s3266 = int_to_ptr.hbm [resolvable:$true] %s3265
          %3268 = dma.vmem_to_hbm [thread:$0]  %s3264, 16, %s3266, [#allocation7]
        $region97: #{tpu_custom_call.1} parent=80 // pred_fallthru
          _
        // Predicated region
        $region98: #{tpu_custom_call.1} parent=80 // pred_check
          %p3269 = pneg %p162
        $region99: #{tpu_custom_call.1} parent=80 // pred_check_branch
          %3271 = sbr.rel (%p3269) target = $region101
        $region100: #{tpu_custom_call.1} parent=80 // pred_region
          %3273 = dma.done [#allocation7], 16
        $region101: #{tpu_custom_call.1} parent=80 // pred_fallthru
          _
      $region81: #{tpu_custom_call.1} parent=5 // pred_fallthru
        _
      %p3274 = scmp.le.s32.totalorder 2, %s13
      // Predicated region
      $region102: #{tpu_custom_call.1} parent=5 // pred_check
        %p3275 = pneg %p3274
      $region103: #{tpu_custom_call.1} parent=5 // pred_check_branch
        %3277 = sbr.rel (%p3275) target = $region105
      $region104: #{tpu_custom_call.1} parent=5 // pred_region
        %s3278 = ssub.s32 %s13, 2
      $region105: #{tpu_custom_call.1} parent=5 // pred_fallthru
        _
    $region6: #{tpu_custom_call.1} parent=1 // loop_footer
      %s17 = sadd.s32 1, %s13
    $region7: #{tpu_custom_call.1} parent=1 // loop_footer_branch
      %12 = sbr.rel target = $region3
    $region8: #{tpu_custom_call.1} parent=1 // loop_exit
      _
    %3279 = vsyncpa [#allocation7], 1
    %s3280 = scalar_lea.sflag [#allocation7], 1
    %3281 = vsyncpa %s3280, 1

</llo_original>
